<compile_context>
chip_gen: v6e
topology: v6e:2x2x1
jax: 0.10.0
libtpu: 0.0.40
codegen_flags: <defaults>
</compile_context>

<pallas_src>
import functools

import jax
import jax.numpy as jnp
from jax.experimental import pallas as pl
from jax.experimental.pallas import tpu as pltpu


# ----------------------------------------------------------------------------
# helpers
# ----------------------------------------------------------------------------
def _mxu_dot(a, b):
    """bf16 MXU matmul with f32 accumulation."""
    return jnp.dot(a.astype(jnp.bfloat16), b.astype(jnp.bfloat16),
                   preferred_element_type=jnp.float32)


# ----------------------------------------------------------------------------
# generic dense kernel (used once, for the pointer keys)
# ----------------------------------------------------------------------------
def _dense_kernel(x_ref, w_ref, b_ref, o_ref):
    o_ref[...] = _mxu_dot(x_ref[...], w_ref[...]) + b_ref[...]


def dense(x, w, b, tile_m=256):
    """y = x @ w + b; x:(M,K), w:(K,N), b:(N,)."""
    M, K = x.shape
    N = w.shape[1]
    tm = M if M <= tile_m else tile_m
    grid = pl.cdiv(M, tm)
    return pl.pallas_call(
        _dense_kernel,
        out_shape=jax.ShapeDtypeStruct((M, N), jnp.float32),
        grid=(grid,),
        in_specs=[
            pl.BlockSpec((tm, K), lambda i: (i, 0)),
            pl.BlockSpec((K, N), lambda i: (0, 0)),
            pl.BlockSpec((1, N), lambda i: (0, 0)),
        ],
        out_specs=pl.BlockSpec((tm, N), lambda i: (i, 0)),
        compiler_params=pltpu.CompilerParams(
            dimension_semantics=("parallel",)),
    )(x, w, b.reshape(1, N))


# ----------------------------------------------------------------------------
# fused GCN layer kernel (grid over batch; optional embedding / cls fusion)
#   * h_edge is carried flattened as (B, T*T, E)
#   * pair feature (h_i + h_j) via constant selector matmul S @ (h @ We2)
# ----------------------------------------------------------------------------
def _make_gcn_kernel(fuse_embed, fuse_cls):
    def kernel(*refs):
        it = iter(refs)
        a_ref = next(it)                                   # (1,T,T) A_norm
        if fuse_embed:
            nf_ref = next(it)                              # (1,T,3)
            ef_ref = next(it)                              # (1,T*T,2)
            wn0 = next(it); bn0 = next(it)
            we0 = next(it); be0 = next(it)
        else:
            hn_ref = next(it)                              # (1,T,H)
            he_ref = next(it)                              # (1,T*T,E)
        s_ref = next(it)                                   # (T*T,T) pair selector
        wn1 = next(it); wn2 = next(it); bn = next(it)
        we1 = next(it); we2 = next(it); be = next(it)
        if fuse_cls:
            wc1 = next(it); bc1 = next(it)
            wc2 = next(it); bc2 = next(it)
        hn_out = next(it)                                  # (1,T,H)
        out2 = next(it)                                    # (1,T*T,E) or (1,T*T,2)

        a = a_ref[0]                                       # (T,T)
        if fuse_embed:
            h = jnp.maximum(_mxu_dot(nf_ref[0], wn0[...]) + bn0[...], 0.0)
            e2 = jnp.maximum(_mxu_dot(ef_ref[0], we0[...]) + be0[...], 0.0)
        else:
            h = hn_ref[0]
            e2 = he_ref[0]

        # node update: aggregation + MLP + residual
        agg = _mxu_dot(a, h)                               # (T,H)
        upd = jnp.maximum(
            _mxu_dot(h, wn1[...]) + _mxu_dot(agg, wn2[...]) + bn[...], 0.0)
        h_new = h + upd
        hn_out[0] = h_new

        # edge update: flattened matmuls, single dense store
        hw = _mxu_dot(h_new, we2[...])                     # (T,E)
        pair_e = _mxu_dot(s_ref[...], hw)                  # (T*T,E) = S @ (h@We2)
        upd_e = jnp.maximum(_mxu_dot(e2, we1[...]) + pair_e + be[...], 0.0)
        e_new = e2 + upd_e                                 # (T*T,E)

        if fuse_cls:
            hc = jnp.maximum(_mxu_dot(e_new, wc1[...]) + bc1[...], 0.0)
            logits = _mxu_dot(hc, wc2[...]) + bc2[...]     # (T*T,2)
            m = jnp.max(logits, axis=-1, keepdims=True)
            e = jnp.exp(logits - m)
            out2[0] = e / jnp.sum(e, axis=-1, keepdims=True)
        else:
            out2[0] = e_new

    return kernel


def gcn_layer(a_norm, node_in, edge_in, pair_sel,
              wn1, wn2, bn, we1, we2, be, embed_w=None, cls_w=None):
    B, T, _ = a_norm.shape
    H = wn1.shape[0]
    E = we1.shape[0]
    TT = T * T
    fuse_embed = embed_w is not None
    fuse_cls = cls_w is not None
    kern = _make_gcn_kernel(fuse_embed, fuse_cls)

    in_arrays = [a_norm]
    in_specs = [pl.BlockSpec((1, T, T), lambda b: (b, 0, 0))]
    if fuse_embed:
        wn0, bn0, we0, be0 = embed_w
        nf_dim = node_in.shape[-1]
        ef_dim = edge_in.shape[-1]
        in_arrays += [node_in, edge_in, wn0, bn0.reshape(1, H),
                      we0, be0.reshape(1, E)]
        in_specs += [
            pl.BlockSpec((1, T, nf_dim), lambda b: (b, 0, 0)),
            pl.BlockSpec((1, TT, ef_dim), lambda b: (b, 0, 0)),
            pl.BlockSpec((nf_dim, H), lambda b: (0, 0)),
            pl.BlockSpec((1, H), lambda b: (0, 0)),
            pl.BlockSpec((ef_dim, E), lambda b: (0, 0)),
            pl.BlockSpec((1, E), lambda b: (0, 0)),
        ]
    else:
        in_arrays += [node_in, edge_in]
        in_specs += [
            pl.BlockSpec((1, T, H), lambda b: (b, 0, 0)),
            pl.BlockSpec((1, TT, E), lambda b: (b, 0, 0)),
        ]
    in_arrays += [pair_sel, wn1, wn2, bn.reshape(1, H),
                  we1, we2, be.reshape(1, E)]
    in_specs += [
        pl.BlockSpec((TT, T), lambda b: (0, 0)),
        pl.BlockSpec((H, H), lambda b: (0, 0)),
        pl.BlockSpec((H, H), lambda b: (0, 0)),
        pl.BlockSpec((1, H), lambda b: (0, 0)),
        pl.BlockSpec((E, E), lambda b: (0, 0)),
        pl.BlockSpec((H, E), lambda b: (0, 0)),
        pl.BlockSpec((1, E), lambda b: (0, 0)),
    ]
    if fuse_cls:
        wc1, bc1, wc2, bc2 = cls_w
        in_arrays += [wc1, bc1.reshape(1, E), wc2, bc2.reshape(1, 2)]
        in_specs += [
            pl.BlockSpec((E, E), lambda b: (0, 0)),
            pl.BlockSpec((1, E), lambda b: (0, 0)),
            pl.BlockSpec((E, 2), lambda b: (0, 0)),
            pl.BlockSpec((1, 2), lambda b: (0, 0)),
        ]

    out_shapes = [jax.ShapeDtypeStruct((B, T, H), jnp.float32)]
    out_specs = [pl.BlockSpec((1, T, H), lambda b: (b, 0, 0))]
    if fuse_cls:
        out_shapes.append(jax.ShapeDtypeStruct((B, TT, 2), jnp.float32))
        out_specs.append(pl.BlockSpec((1, TT, 2), lambda b: (b, 0, 0)))
    else:
        out_shapes.append(jax.ShapeDtypeStruct((B, TT, E), jnp.float32))
        out_specs.append(pl.BlockSpec((1, TT, E), lambda b: (b, 0, 0)))

    return pl.pallas_call(
        kern,
        out_shape=tuple(out_shapes),
        grid=(B,),
        in_specs=in_specs,
        out_specs=tuple(out_specs),
        compiler_params=pltpu.CompilerParams(
            dimension_semantics=("parallel",)),
    )(*in_arrays)


# ----------------------------------------------------------------------------
# fused sequential pointer decoder: ONE pallas_call, grid = (2, steps).
#   p = 0 -> sampling half (Gumbel noise added), p = 1 -> greedy half.
# State (GRU hidden, visited mask, last one-hot) lives in VMEM scratch.
# Outputs: chosen indices (int32) per step + accumulated log-probabilities.
# ----------------------------------------------------------------------------
def _decoder_kernel(hnode_ref, keys_ref, gum_ref, wq_ref, bq_ref,
                    w0_ref, b0_ref, w1_ref, b1_ref,
                    route_ref, logp_ref,
                    hidden_sc, visited_sc, last_sc, *, B, T, H):
    s = pl.program_id(1)
    col = jax.lax.broadcasted_iota(jnp.int32, (B, T), 1)

    @pl.when(s == 0)
    def _init():
        depot = (col == 0).astype(jnp.float32)
        visited_sc[...] = depot                      # depot masked from start
        last_sc[...] = depot                         # decoding starts at depot
        hidden_sc[...] = jnp.zeros((2, B, H), jnp.float32)
        logp_ref[0] = jnp.zeros((B, 1), jnp.float32)

    h_node = hnode_ref[...]                                       # (B,T,H)
    emb = jnp.sum(last_sc[...][:, :, None] * h_node, axis=1)      # (B,H)

    def gru(x, h_prev, w_ref, b_ref):
        xh = jnp.concatenate([x, h_prev], axis=-1)                # (B,2H)
        g = _mxu_dot(xh, w_ref[...]) + b_ref[...]                 # (B,6H)
        gx, gh = g[:, :3 * H], g[:, 3 * H:]
        r = jax.nn.sigmoid(gx[:, :H] + gh[:, :H])
        z = jax.nn.sigmoid(gx[:, H:2 * H] + gh[:, H:2 * H])
        n = jnp.tanh(gx[:, 2 * H:] + r * gh[:, 2 * H:])
        return (1.0 - z) * n + z * h_prev

    h0 = gru(emb, hidden_sc[0], w0_ref, b0_ref)
    h1 = gru(h0, hidden_sc[1], w1_ref, b1_ref)
    hidden_sc[0] = h0
    hidden_sc[1] = h1

    # pointer attention
    q = _mxu_dot(h1, wq_ref[...]) + bq_ref[...]                   # (B,H)
    logits = jnp.sum(keys_ref[...] * q[:, None, :], axis=-1)      # (B,T)
    logits = 10.0 * jnp.tanh(logits * (1.0 / float(H) ** 0.5))
    z_masked = logits + visited_sc[...] * (-1e9)

    m = jnp.max(z_masked, axis=-1, keepdims=True)
    lse = m + jnp.log(jnp.sum(jnp.exp(z_masked - m), axis=-1, keepdims=True))

    # Gumbel-max (sample half) / plain argmax (greedy half, noise == 0)
    zp = z_masked + gum_ref[0, 0]
    mmax = jnp.max(zp, axis=-1, keepdims=True)
    cand = jnp.where(zp >= mmax, col, T)
    choice = jnp.min(cand, axis=-1, keepdims=True)                # (B,1) int32
    onehot = (col == choice).astype(jnp.float32)

    chosen = jnp.sum(onehot * z_masked, axis=-1, keepdims=True)   # (B,1)
    logp_ref[0] = logp_ref[0] + (chosen - lse)
    visited_sc[...] = jnp.maximum(visited_sc[...], onehot)
    last_sc[...] = onehot
    route_ref[0, 0] = choice


def run_decoder(h_node, keys, gumbel2, wq, bq, w0, b0, w1, b1):
    """Returns (route_idx (2, steps, B, 1) int32, logp (2, B, 1))."""
    B, T, H = h_node.shape
    S = T - 1
    kern = functools.partial(_decoder_kernel, B=B, T=T, H=H)
    return pl.pallas_call(
        kern,
        out_shape=(jax.ShapeDtypeStruct((2, S, B, 1), jnp.int32),
                   jax.ShapeDtypeStruct((2, B, 1), jnp.float32)),
        grid=(2, S),
        in_specs=[
            pl.BlockSpec((B, T, H), lambda p, s: (0, 0, 0)),      # h_node
            pl.BlockSpec((B, T, H), lambda p, s: (0, 0, 0)),      # pointer keys
            pl.BlockSpec((1, 1, B, T), lambda p, s: (p, s, 0, 0)),  # gumbel/zeros
            pl.BlockSpec((H, H), lambda p, s: (0, 0)),            # Wq
            pl.BlockSpec((1, H), lambda p, s: (0, 0)),            # bq
            pl.BlockSpec((2 * H, 6 * H), lambda p, s: (0, 0)),    # GRU0 packed W
            pl.BlockSpec((1, 6 * H), lambda p, s: (0, 0)),        # GRU0 packed b
            pl.BlockSpec((2 * H, 6 * H), lambda p, s: (0, 0)),    # GRU1 packed W
            pl.BlockSpec((1, 6 * H), lambda p, s: (0, 0)),        # GRU1 packed b
        ],
        out_specs=(pl.BlockSpec((1, 1, B, 1), lambda p, s: (p, s, 0, 0)),
                   pl.BlockSpec((1, B, 1), lambda p, s: (p, 0, 0))),
        scratch_shapes=[
            pltpu.VMEM((2, B, H), jnp.float32),   # GRU hidden state
            pltpu.VMEM((B, T), jnp.float32),      # visited mask
            pltpu.VMEM((B, T), jnp.float32),      # last-node one-hot
        ],
        compiler_params=pltpu.CompilerParams(
            dimension_semantics=("parallel", "arbitrary")),
    )(h_node, keys, gumbel2, wq, bq.reshape(1, H), w0, b0, w1, b1)


# ----------------------------------------------------------------------------
# Environment (data container; decode bookkeeping is in-kernel / traced)
# ----------------------------------------------------------------------------
class Env:
    def __init__(self, graph, demand, distance):
        self.graph = graph        # (B, T, 2)
        self.demand = demand      # (B, T, 1)
        self.distance = distance  # (B, T, T)
        self.B, self.T = graph.shape[0], graph.shape[1]
        self.node_num = self.T - 1

    def reset(self):
        pass


# ----------------------------------------------------------------------------
# Model
# ----------------------------------------------------------------------------
def _init_linear(key, in_dim, out_dim):
    k1, k2 = jax.random.split(key)
    lim = 1.0 / jnp.sqrt(float(in_dim))
    w = jax.random.uniform(k1, (in_dim, out_dim), jnp.float32, -lim, lim)
    b = jax.random.uniform(k2, (out_dim,), jnp.float32, -lim, lim)
    return w, b


class PallasVRPModel:
    def __init__(self, node_hidden_dim, edge_hidden_dim, gcn_num_layers, k, key):
        self.H = node_hidden_dim
        self.E = edge_hidden_dim
        self.L = gcn_num_layers
        assert self.L >= 1
        self.k = k
        rng = iter(jax.random.split(key, 64))
        H, E = self.H, self.E
        # GCN input embeddings (fused into first layer kernel)
        self.W_n0, self.b_n0 = _init_linear(next(rng), 3, H)   # coords + demand
        self.W_e0, self.b_e0 = _init_linear(next(rng), 2, E)   # distance + kNN adj
        # GCN layers (concat weights stored pre-split)
        self.gcn_node, self.gcn_edge = [], []
        for _ in range(self.L):
            wn1, bn = _init_linear(next(rng), H, H)
            wn2, _ = _init_linear(next(rng), H, H)
            self.gcn_node.append((wn1, wn2, bn))
            we1, be = _init_linear(next(rng), E, E)
            we2, _ = _init_linear(next(rng), H, E)
            self.gcn_edge.append((we1, we2, be))
        # 2-layer GRU, gate weights pre-packed block-diagonally:
        #   [x, h] @ [[Wx, 0], [0, Wh]] + [bx, bh] -> [gx | gh] (one MXU push)
        self.gru = []
        for _ in range(2):
            Wx, bx = _init_linear(next(rng), H, 3 * H)
            Wh, bh = _init_linear(next(rng), H, 3 * H)
            zero = jnp.zeros((H, 3 * H), jnp.float32)
            Wbig = jnp.concatenate(
                [jnp.concatenate([Wx, zero], axis=1),
                 jnp.concatenate([zero, Wh], axis=1)], axis=0)   # (2H, 6H)
            bbig = jnp.concatenate([bx, bh]).reshape(1, 6 * H)
            self.gru.append((Wbig, bbig))
        self.W_q, self.b_q = _init_linear(next(rng), H, H)
        self.W_k, self.b_k = _init_linear(next(rng), H, H)
        # Classification decoder (fused into last GCN layer kernel)
        self.W_c1, self.b_c1 = _init_linear(next(rng), E, E)
        self.W_c2, self.b_c2 = _init_linear(next(rng), E, 2)
        self._fwd = jax.jit(self._forward_impl)

    # ---------------- traced forward ----------------
    def _forward_impl(self, graph, demand, distance, key):
        B, T, _ = graph.shape
        H, E = self.H, self.E
        S = T - 1
        TT = T * T

        # kNN adjacency from distance matrix (exclude self) via top_k
        d = distance + jnp.eye(T, dtype=jnp.float32)[None] * 1e9
        _, knn_idx = jax.lax.top_k(-d, self.k)                      # (B,T,k)
        bi = jnp.arange(B)[:, None, None]
        ri = jnp.arange(T)[None, :, None]
        A = jnp.zeros((B, T, T), jnp.float32).at[bi, ri, knn_idx].set(1.0)
        A_norm = A / float(self.k)

        node_feat = jnp.concatenate([graph, demand], axis=-1)       # (B,T,3)
        edge_feat = jnp.stack([distance, A], axis=-1).reshape(B, TT, 2)

        # constant pair-selector: S[i*T+j, :] = onehot(i) + onehot(j)
        ii = jnp.arange(TT) // T
        jj = jnp.arange(TT) % T
        pair_sel = (jax.nn.one_hot(ii, T, dtype=jnp.float32)
                    + jax.nn.one_hot(jj, T, dtype=jnp.float32))     # (TT,T)

        # ---- GCN encoder: embed fused into layer 0, cls fused into layer L-1
        node_in, edge_in = node_feat, edge_feat
        predict_flat = None
        for l in range(self.L):
            wn1, wn2, bn = self.gcn_node[l]
            we1, we2, be = self.gcn_edge[l]
            embed_w = ((self.W_n0, self.b_n0, self.W_e0, self.b_e0)
                       if l == 0 else None)
            cls_w = ((self.W_c1, self.b_c1, self.W_c2, self.b_c2)
                     if l == self.L - 1 else None)
            node_in, out2 = gcn_layer(A_norm, node_in, edge_in, pair_sel,
                                      wn1, wn2, bn, we1, we2, be,
                                      embed_w=embed_w, cls_w=cls_w)
            if l == self.L - 1:
                predict_flat = out2
            else:
                edge_in = out2
        h_node = node_in                                            # (B,T,H)
        predict_matrix = predict_flat.reshape(B, T, T, 2)

        # ---- pointer decoder (sample + greedy fused on a parallel grid axis)
        keys = dense(h_node.reshape(B * T, H), self.W_k,
                     self.b_k).reshape(B, T, H)
        gum = jax.random.gumbel(key, (S, B, T), jnp.float32)
        gumbel2 = jnp.stack([gum, jnp.zeros_like(gum)], axis=0)     # (2,S,B,T)
        (w0, b0), (w1, b1) = self.gru
        route_idx, logp = run_decoder(h_node, keys, gumbel2,
                                      self.W_q, self.b_q, w0, b0, w1, b1)
        idx = route_idx[..., 0]                                     # (2,S,B)

        # tour length via gathers: depot -> route -> depot
        zeros = jnp.zeros((2, 1, B), jnp.int32)
        seq = jnp.concatenate([zeros, idx, zeros], axis=1)          # (2,S+2,B)
        b_idx = jnp.arange(B)[None, None, :]
        legs = distance[b_idx, seq[:, :-1, :], seq[:, 1:, :]]       # (2,S+1,B)
        total = jnp.sum(legs, axis=1)                               # (2,B)

        # target adjacency matrix from the sampled route (scatter)
        seq_s = seq[0]                                              # (S+2,B)
        bmat = jnp.broadcast_to(jnp.arange(B)[None, :], (S + 1, B))
        target_matrix = jnp.zeros((B, T, T), jnp.float32).at[
            bmat, seq_s[:-1], seq_s[1:]].set(1.0)

        sample_logprob = logp[0]        # (B,1)
        sample_distance = total[0]      # (B,)
        greedy_distance = total[1]      # (B,)
        return (sample_logprob, sample_distance, greedy_distance,
                target_matrix, predict_matrix)

    def forward(self, env, key):
        return self._fwd(env.graph, env.demand, env.distance, key)


# ----------------------------------------------------------------------------
# main
# ----------------------------------------------------------------------------
if __name__ == "__main__":
    node_hidden_dim = 32
    edge_hidden_dim = 16
    gcn_num_layers = 2
    k = 3
    batch_size = 2
    node_num = 8            # customers; total nodes = node_num + 1 (depot at 0)
    T = node_num + 1

    root = jax.random.PRNGKey(0)
    k_coord, k_dem, k_param, k_sample = jax.random.split(root, 4)

    graph = jax.random.uniform(k_coord, (batch_size, T, 2), jnp.float32)
    demand = jax.random.uniform(k_dem, (batch_size, T, 1), jnp.float32)
    demand = demand.at[:, 0, :].set(0.0)                            # depot demand 0
    diff = graph[:, :, None, :] - graph[:, None, :, :]
    distance = jnp.sqrt(jnp.sum(diff * diff, axis=-1) + 1e-12)      # (B,T,T)

    env = Env(graph, demand, distance)
    model = PallasVRPModel(node_hidden_dim, edge_hidden_dim, gcn_num_layers,
                           k, k_param)

    outs = model.forward(env, k_sample)
    outs = jax.block_until_ready(outs)

    sample_logprob, sample_dist, greedy_dist, target_matrix, predict_matrix = outs
    assert sample_logprob.shape == (batch_size, 1)
    assert sample_dist.shape == (batch_size,)
    assert greedy_dist.shape == (batch_size,)
    assert target_matrix.shape == (batch_size, T, T)
    assert predict_matrix.shape == (batch_size, T, T, 2)
    assert bool(jnp.all(jnp.isfinite(sample_logprob)))
    assert bool(jnp.all(jnp.isfinite(sample_dist)))
    assert bool(jnp.all(jnp.isfinite(greedy_dist)))
    print("KERNEL_OK")
</pallas_src>

<mosaic_0001>
module attributes {stable_mosaic.version = 11 : i64} {
  func.func @kernel(%arg0: i32, %arg1: memref<1x9x9xf32, #tpu.memory_space<vmem>>, %arg2: memref<1x9x3xf32, #tpu.memory_space<vmem>>, %arg3: memref<1x81x2xf32, #tpu.memory_space<vmem>>, %arg4: memref<3x32xf32, #tpu.memory_space<vmem>>, %arg5: memref<1x32xf32, #tpu.memory_space<vmem>>, %arg6: memref<2x16xf32, #tpu.memory_space<vmem>>, %arg7: memref<1x16xf32, #tpu.memory_space<vmem>>, %arg8: memref<81x9xf32, #tpu.memory_space<vmem>>, %arg9: memref<32x32xf32, #tpu.memory_space<vmem>>, %arg10: memref<32x32xf32, #tpu.memory_space<vmem>>, %arg11: memref<1x32xf32, #tpu.memory_space<vmem>>, %arg12: memref<16x16xf32, #tpu.memory_space<vmem>>, %arg13: memref<32x16xf32, #tpu.memory_space<vmem>>, %arg14: memref<1x16xf32, #tpu.memory_space<vmem>>, %arg15: memref<1x9x32xf32, #tpu.memory_space<vmem>>, %arg16: memref<1x81x16xf32, #tpu.memory_space<vmem>>) attributes {dimension_semantics = [#tpu.dimension_semantics<parallel>], iteration_bounds = array<i64: 2>, scalar_prefetch = 0 : i64, scratch_operands = 0 : i64, tpu.core_type = #tpu.core_type<tc>, window_params = [{transform_indices = @transform_0, window_bounds = array<i64: 1, 9, 9>}, {transform_indices = @transform_1, window_bounds = array<i64: 1, 9, 3>}, {transform_indices = @transform_2, window_bounds = array<i64: 1, 81, 2>}, {pipeline_mode = #tpu.pipeline_mode<synchronous>, transform_indices = @transform_3, window_bounds = array<i64: 3, 32>}, {pipeline_mode = #tpu.pipeline_mode<synchronous>, transform_indices = @transform_4, window_bounds = array<i64: 1, 32>}, {pipeline_mode = #tpu.pipeline_mode<synchronous>, transform_indices = @transform_5, window_bounds = array<i64: 2, 16>}, {pipeline_mode = #tpu.pipeline_mode<synchronous>, transform_indices = @transform_6, window_bounds = array<i64: 1, 16>}, {pipeline_mode = #tpu.pipeline_mode<synchronous>, transform_indices = @transform_7, window_bounds = array<i64: 81, 9>}, {pipeline_mode = #tpu.pipeline_mode<synchronous>, transform_indices = @transform_8, window_bounds = array<i64: 32, 32>}, {pipeline_mode = #tpu.pipeline_mode<synchronous>, transform_indices = @transform_9, window_bounds = array<i64: 32, 32>}, {pipeline_mode = #tpu.pipeline_mode<synchronous>, transform_indices = @transform_10, window_bounds = array<i64: 1, 32>}, {pipeline_mode = #tpu.pipeline_mode<synchronous>, transform_indices = @transform_11, window_bounds = array<i64: 16, 16>}, {pipeline_mode = #tpu.pipeline_mode<synchronous>, transform_indices = @transform_12, window_bounds = array<i64: 32, 16>}, {pipeline_mode = #tpu.pipeline_mode<synchronous>, transform_indices = @transform_13, window_bounds = array<i64: 1, 16>}, {transform_indices = @transform_14, window_bounds = array<i64: 1, 9, 32>}, {transform_indices = @transform_15, window_bounds = array<i64: 1, 81, 16>}]} {
    %c0 = arith.constant 0 : index
    %c0_0 = arith.constant 0 : index
    %c0_1 = arith.constant 0 : index
    %0 = vector.load %arg1[%c0, %c0_0, %c0_1] : memref<1x9x9xf32, #tpu.memory_space<vmem>>, vector<1x9x9xf32>
    %1 = vector.shape_cast %0 : vector<1x9x9xf32> to vector<9x9xf32>
    %c0_2 = arith.constant 0 : index
    %c0_3 = arith.constant 0 : index
    %c0_4 = arith.constant 0 : index
    %2 = vector.load %arg2[%c0_2, %c0_3, %c0_4] : memref<1x9x3xf32, #tpu.memory_space<vmem>>, vector<1x9x3xf32>
    %3 = vector.shape_cast %2 : vector<1x9x3xf32> to vector<9x3xf32>
    %c0_5 = arith.constant 0 : index
    %c0_6 = arith.constant 0 : index
    %4 = vector.load %arg4[%c0_5, %c0_6] : memref<3x32xf32, #tpu.memory_space<vmem>>, vector<3x32xf32>
    %5 = arith.truncf %3 : vector<9x3xf32> to vector<9x3xbf16>
    %6 = arith.truncf %4 : vector<3x32xf32> to vector<3x32xbf16>
    %cst = arith.constant dense<0.000000e+00> : vector<9x32xf32>
    %7 = tpu.matmul %5, %6, %cst {dimension_numbers = #tpu.dot_dimension_numbers<[1], [0], [0], [1], [0, 0, 1, 1], [], []>} : vector<9x3xbf16>, vector<3x32xbf16>, vector<9x32xf32> -> vector<9x32xf32>
    %c0_7 = arith.constant 0 : index
    %c0_8 = arith.constant 0 : index
    %8 = vector.load %arg5[%c0_7, %c0_8] : memref<1x32xf32, #tpu.memory_space<vmem>>, vector<1x32xf32>
    %9 = vector.broadcast %8 : vector<1x32xf32> to vector<9x32xf32>
    %10 = arith.addf %7, %9 : vector<9x32xf32>
    %cst_9 = arith.constant 0.000000e+00 : f32
    %11 = vector.broadcast %cst_9 : f32 to vector<9x32xf32>
    %12 = arith.maximumf %10, %11 : vector<9x32xf32>
    %c0_10 = arith.constant 0 : index
    %c0_11 = arith.constant 0 : index
    %c0_12 = arith.constant 0 : index
    %13 = vector.load %arg3[%c0_10, %c0_11, %c0_12] : memref<1x81x2xf32, #tpu.memory_space<vmem>>, vector<1x81x2xf32>
    %14 = vector.shape_cast %13 : vector<1x81x2xf32> to vector<81x2xf32>
    %c0_13 = arith.constant 0 : index
    %c0_14 = arith.constant 0 : index
    %15 = vector.load %arg6[%c0_13, %c0_14] : memref<2x16xf32, #tpu.memory_space<vmem>>, vector<2x16xf32>
    %16 = arith.truncf %14 : vector<81x2xf32> to vector<81x2xbf16>
    %17 = arith.truncf %15 : vector<2x16xf32> to vector<2x16xbf16>
    %cst_15 = arith.constant dense<0.000000e+00> : vector<81x16xf32>
    %18 = tpu.matmul %16, %17, %cst_15 {dimension_numbers = #tpu.dot_dimension_numbers<[1], [0], [0], [1], [0, 0, 1, 1], [], []>} : vector<81x2xbf16>, vector<2x16xbf16>, vector<81x16xf32> -> vector<81x16xf32>
    %c0_16 = arith.constant 0 : index
    %c0_17 = arith.constant 0 : index
    %19 = vector.load %arg7[%c0_16, %c0_17] : memref<1x16xf32, #tpu.memory_space<vmem>>, vector<1x16xf32>
    %20 = vector.broadcast %19 : vector<1x16xf32> to vector<81x16xf32>
    %21 = arith.addf %18, %20 : vector<81x16xf32>
    %cst_18 = arith.constant 0.000000e+00 : f32
    %22 = vector.broadcast %cst_18 : f32 to vector<81x16xf32>
    %23 = arith.maximumf %21, %22 : vector<81x16xf32>
    %24 = arith.truncf %1 : vector<9x9xf32> to vector<9x9xbf16>
    %25 = arith.truncf %12 : vector<9x32xf32> to vector<9x32xbf16>
    %cst_19 = arith.constant dense<0.000000e+00> : vector<9x32xf32>
    %26 = tpu.matmul %24, %25, %cst_19 {dimension_numbers = #tpu.dot_dimension_numbers<[1], [0], [0], [1], [0, 0, 1, 1], [], []>} : vector<9x9xbf16>, vector<9x32xbf16>, vector<9x32xf32> -> vector<9x32xf32>
    %c0_20 = arith.constant 0 : index
    %c0_21 = arith.constant 0 : index
    %27 = vector.load %arg9[%c0_20, %c0_21] : memref<32x32xf32, #tpu.memory_space<vmem>>, vector<32x32xf32>
    %28 = arith.truncf %12 : vector<9x32xf32> to vector<9x32xbf16>
    %29 = arith.truncf %27 : vector<32x32xf32> to vector<32x32xbf16>
    %cst_22 = arith.constant dense<0.000000e+00> : vector<9x32xf32>
    %30 = tpu.matmul %28, %29, %cst_22 {dimension_numbers = #tpu.dot_dimension_numbers<[1], [0], [0], [1], [0, 0, 1, 1], [], []>} : vector<9x32xbf16>, vector<32x32xbf16>, vector<9x32xf32> -> vector<9x32xf32>
    %c0_23 = arith.constant 0 : index
    %c0_24 = arith.constant 0 : index
    %31 = vector.load %arg10[%c0_23, %c0_24] : memref<32x32xf32, #tpu.memory_space<vmem>>, vector<32x32xf32>
    %32 = arith.truncf %26 : vector<9x32xf32> to vector<9x32xbf16>
    %33 = arith.truncf %31 : vector<32x32xf32> to vector<32x32xbf16>
    %cst_25 = arith.constant dense<0.000000e+00> : vector<9x32xf32>
    %34 = tpu.matmul %32, %33, %cst_25 {dimension_numbers = #tpu.dot_dimension_numbers<[1], [0], [0], [1], [0, 0, 1, 1], [], []>} : vector<9x32xbf16>, vector<32x32xbf16>, vector<9x32xf32> -> vector<9x32xf32>
    %35 = arith.addf %30, %34 : vector<9x32xf32>
    %c0_26 = arith.constant 0 : index
    %c0_27 = arith.constant 0 : index
    %36 = vector.load %arg11[%c0_26, %c0_27] : memref<1x32xf32, #tpu.memory_space<vmem>>, vector<1x32xf32>
    %37 = vector.broadcast %36 : vector<1x32xf32> to vector<9x32xf32>
    %38 = arith.addf %35, %37 : vector<9x32xf32>
    %cst_28 = arith.constant 0.000000e+00 : f32
    %39 = vector.broadcast %cst_28 : f32 to vector<9x32xf32>
    %40 = arith.maximumf %38, %39 : vector<9x32xf32>
    %41 = arith.addf %12, %40 : vector<9x32xf32>
    %c0_29 = arith.constant 0 : index
    %c0_30 = arith.constant 0 : index
    %c0_31 = arith.constant 0 : index
    %42 = vector.load %arg15[%c0_29, %c0_30, %c0_31] : memref<1x9x32xf32, #tpu.memory_space<vmem>>, vector<1x9x32xf32>
    %43 = vector.shape_cast %42 : vector<1x9x32xf32> to vector<9x32xf32>
    %44 = vector.shape_cast %41 : vector<9x32xf32> to vector<1x9x32xf32>
    tpu.vector_store %arg15[%c0_29, %c0_30, %c0_31], %44 {strides = array<i32>} : memref<1x9x32xf32, #tpu.memory_space<vmem>>, vector<1x9x32xf32>,
    %c0_32 = arith.constant 0 : index
    %c0_33 = arith.constant 0 : index
    %45 = vector.load %arg13[%c0_32, %c0_33] : memref<32x16xf32, #tpu.memory_space<vmem>>, vector<32x16xf32>
    %46 = arith.truncf %41 : vector<9x32xf32> to vector<9x32xbf16>
    %47 = arith.truncf %45 : vector<32x16xf32> to vector<32x16xbf16>
    %cst_34 = arith.constant dense<0.000000e+00> : vector<9x16xf32>
    %48 = tpu.matmul %46, %47, %cst_34 {dimension_numbers = #tpu.dot_dimension_numbers<[1], [0], [0], [1], [0, 0, 1, 1], [], []>} : vector<9x32xbf16>, vector<32x16xbf16>, vector<9x16xf32> -> vector<9x16xf32>
    %c0_35 = arith.constant 0 : index
    %c0_36 = arith.constant 0 : index
    %49 = vector.load %arg8[%c0_35, %c0_36] : memref<81x9xf32, #tpu.memory_space<vmem>>, vector<81x9xf32>
    %50 = arith.truncf %49 : vector<81x9xf32> to vector<81x9xbf16>
    %51 = arith.truncf %48 : vector<9x16xf32> to vector<9x16xbf16>
    %cst_37 = arith.constant dense<0.000000e+00> : vector<81x16xf32>
    %52 = tpu.matmul %50, %51, %cst_37 {dimension_numbers = #tpu.dot_dimension_numbers<[1], [0], [0], [1], [0, 0, 1, 1], [], []>} : vector<81x9xbf16>, vector<9x16xbf16>, vector<81x16xf32> -> vector<81x16xf32>
    %c0_38 = arith.constant 0 : index
    %c0_39 = arith.constant 0 : index
    %53 = vector.load %arg12[%c0_38, %c0_39] : memref<16x16xf32, #tpu.memory_space<vmem>>, vector<16x16xf32>
    %54 = arith.truncf %23 : vector<81x16xf32> to vector<81x16xbf16>
    %55 = arith.truncf %53 : vector<16x16xf32> to vector<16x16xbf16>
    %cst_40 = arith.constant dense<0.000000e+00> : vector<81x16xf32>
    %56 = tpu.matmul %54, %55, %cst_40 {dimension_numbers = #tpu.dot_dimension_numbers<[1], [0], [0], [1], [0, 0, 1, 1], [], []>} : vector<81x16xbf16>, vector<16x16xbf16>, vector<81x16xf32> -> vector<81x16xf32>
    %57 = arith.addf %56, %52 : vector<81x16xf32>
    %c0_41 = arith.constant 0 : index
    %c0_42 = arith.constant 0 : index
    %58 = vector.load %arg14[%c0_41, %c0_42] : memref<1x16xf32, #tpu.memory_space<vmem>>, vector<1x16xf32>
    %59 = vector.broadcast %58 : vector<1x16xf32> to vector<81x16xf32>
    %60 = arith.addf %57, %59 : vector<81x16xf32>
    %cst_43 = arith.constant 0.000000e+00 : f32
    %61 = vector.broadcast %cst_43 : f32 to vector<81x16xf32>
    %62 = arith.maximumf %60, %61 : vector<81x16xf32>
    %63 = arith.addf %23, %62 : vector<81x16xf32>
    %c0_44 = arith.constant 0 : index
    %c0_45 = arith.constant 0 : index
    %c0_46 = arith.constant 0 : index
    %64 = vector.load %arg16[%c0_44, %c0_45, %c0_46] : memref<1x81x16xf32, #tpu.memory_space<vmem>>, vector<1x81x16xf32>
    %65 = vector.shape_cast %64 : vector<1x81x16xf32> to vector<81x16xf32>
    %66 = vector.shape_cast %63 : vector<81x16xf32> to vector<1x81x16xf32>
    tpu.vector_store %arg16[%c0_44, %c0_45, %c0_46], %66 {strides = array<i32>} : memref<1x81x16xf32, #tpu.memory_space<vmem>>, vector<1x81x16xf32>,
    return
  }
  func.func @transform_0(%arg0: i32) -> (i32, i32, i32) {
    %c0_i32 = arith.constant 0 : i32
    %c0_i32_0 = arith.constant 0 : i32
    %c0_i32_1 = arith.constant 0 : i32
    return %arg0, %c0_i32, %c0_i32_0 : i32, i32, i32
  }
  func.func @transform_1(%arg0: i32) -> (i32, i32, i32) {
    %c0_i32 = arith.constant 0 : i32
    %c0_i32_0 = arith.constant 0 : i32
    %c0_i32_1 = arith.constant 0 : i32
    return %arg0, %c0_i32, %c0_i32_0 : i32, i32, i32
  }
  func.func @transform_2(%arg0: i32) -> (i32, i32, i32) {
    %c0_i32 = arith.constant 0 : i32
    %c0_i32_0 = arith.constant 0 : i32
    %c0_i32_1 = arith.constant 0 : i32
    return %arg0, %c0_i32, %c0_i32_0 : i32, i32, i32
  }
  func.func @transform_3(%arg0: i32) -> (i32, i32) {
    %c0_i32 = arith.constant 0 : i32
    %c0_i32_0 = arith.constant 0 : i32
    %c0_i32_1 = arith.constant 0 : i32
    return %c0_i32, %c0_i32_0 : i32, i32
  }
  func.func @transform_4(%arg0: i32) -> (i32, i32) {
    %c0_i32 = arith.constant 0 : i32
    %c0_i32_0 = arith.constant 0 : i32
    %c0_i32_1 = arith.constant 0 : i32
    return %c0_i32, %c0_i32_0 : i32, i32
  }
  func.func @transform_5(%arg0: i32) -> (i32, i32) {
    %c0_i32 = arith.constant 0 : i32
    %c0_i32_0 = arith.constant 0 : i32
    %c0_i32_1 = arith.constant 0 : i32
    return %c0_i32, %c0_i32_0 : i32, i32
  }
  func.func @transform_6(%arg0: i32) -> (i32, i32) {
    %c0_i32 = arith.constant 0 : i32
    %c0_i32_0 = arith.constant 0 : i32
    %c0_i32_1 = arith.constant 0 : i32
    return %c0_i32, %c0_i32_0 : i32, i32
  }
  func.func @transform_7(%arg0: i32) -> (i32, i32) {
    %c0_i32 = arith.constant 0 : i32
    %c0_i32_0 = arith.constant 0 : i32
    %c0_i32_1 = arith.constant 0 : i32
    return %c0_i32, %c0_i32_0 : i32, i32
  }
  func.func @transform_8(%arg0: i32) -> (i32, i32) {
    %c0_i32 = arith.constant 0 : i32
    %c0_i32_0 = arith.constant 0 : i32
    %c0_i32_1 = arith.constant 0 : i32
    return %c0_i32, %c0_i32_0 : i32, i32
  }
  func.func @transform_9(%arg0: i32) -> (i32, i32) {
    %c0_i32 = arith.constant 0 : i32
    %c0_i32_0 = arith.constant 0 : i32
    %c0_i32_1 = arith.constant 0 : i32
    return %c0_i32, %c0_i32_0 : i32, i32
  }
  func.func @transform_10(%arg0: i32) -> (i32, i32) {
    %c0_i32 = arith.constant 0 : i32
    %c0_i32_0 = arith.constant 0 : i32
    %c0_i32_1 = arith.constant 0 : i32
    return %c0_i32, %c0_i32_0 : i32, i32
  }
  func.func @transform_11(%arg0: i32) -> (i32, i32) {
    %c0_i32 = arith.constant 0 : i32
    %c0_i32_0 = arith.constant 0 : i32
    %c0_i32_1 = arith.constant 0 : i32
    return %c0_i32, %c0_i32_0 : i32, i32
  }
  func.func @transform_12(%arg0: i32) -> (i32, i32) {
    %c0_i32 = arith.constant 0 : i32
    %c0_i32_0 = arith.constant 0 : i32
    %c0_i32_1 = arith.constant 0 : i32
    return %c0_i32, %c0_i32_0 : i32, i32
  }
  func.func @transform_13(%arg0: i32) -> (i32, i32) {
    %c0_i32 = arith.constant 0 : i32
    %c0_i32_0 = arith.constant 0 : i32
    %c0_i32_1 = arith.constant 0 : i32
    return %c0_i32, %c0_i32_0 : i32, i32
  }
  func.func @transform_14(%arg0: i32) -> (i32, i32, i32) {
    %c0_i32 = arith.constant 0 : i32
    %c0_i32_0 = arith.constant 0 : i32
    %c0_i32_1 = arith.constant 0 : i32
    return %arg0, %c0_i32, %c0_i32_0 : i32, i32, i32
  }
  func.func @transform_15(%arg0: i32) -> (i32, i32, i32) {
    %c0_i32 = arith.constant 0 : i32
    %c0_i32_0 = arith.constant 0 : i32
    %c0_i32_1 = arith.constant 0 : i32
    return %arg0, %c0_i32, %c0_i32_0 : i32, i32, i32
  }
}

module attributes {stable_mosaic.version = 11 : i64} {
  func.func @_dense_kernel(%arg0: i32, %arg1: memref<18x32xf32, #tpu.memory_space<vmem>>, %arg2: memref<32x32xf32, #tpu.memory_space<vmem>>, %arg3: memref<1x32xf32, #tpu.memory_space<vmem>>, %arg4: memref<18x32xf32, #tpu.memory_space<vmem>>) attributes {dimension_semantics = [#tpu.dimension_semantics<parallel>], iteration_bounds = array<i64: 1>, scalar_prefetch = 0 : i64, scratch_operands = 0 : i64, tpu.core_type = #tpu.core_type<tc>, window_params = [{transform_indices = @transform_0, window_bounds = array<i64: 18, 32>}, {pipeline_mode = #tpu.pipeline_mode<synchronous>, transform_indices = @transform_1, window_bounds = array<i64: 32, 32>}, {pipeline_mode = #tpu.pipeline_mode<synchronous>, transform_indices = @transform_2, window_bounds = array<i64: 1, 32>}, {transform_indices = @transform_3, window_bounds = array<i64: 18, 32>}]} {
    %c0 = arith.constant 0 : index
    %c0_0 = arith.constant 0 : index
    %0 = vector.load %arg1[%c0, %c0_0] : memref<18x32xf32, #tpu.memory_space<vmem>>, vector<18x32xf32>
    %c0_1 = arith.constant 0 : index
    %c0_2 = arith.constant 0 : index
    %1 = vector.load %arg2[%c0_1, %c0_2] : memref<32x32xf32, #tpu.memory_space<vmem>>, vector<32x32xf32>
    %2 = arith.truncf %0 : vector<18x32xf32> to vector<18x32xbf16>
    %3 = arith.truncf %1 : vector<32x32xf32> to vector<32x32xbf16>
    %cst = arith.constant dense<0.000000e+00> : vector<18x32xf32>
    %4 = tpu.matmul %2, %3, %cst {dimension_numbers = #tpu.dot_dimension_numbers<[1], [0], [0], [1], [0, 0, 1, 1], [], []>} : vector<18x32xbf16>, vector<32x32xbf16>, vector<18x32xf32> -> vector<18x32xf32>
    %c0_3 = arith.constant 0 : index
    %c0_4 = arith.constant 0 : index
    %5 = vector.load %arg3[%c0_3, %c0_4] : memref<1x32xf32, #tpu.memory_space<vmem>>, vector<1x32xf32>
    %6 = vector.broadcast %5 : vector<1x32xf32> to vector<18x32xf32>
    %7 = arith.addf %4, %6 : vector<18x32xf32>
    %c0_5 = arith.constant 0 : index
    %c0_6 = arith.constant 0 : index
    %8 = vector.load %arg4[%c0_5, %c0_6] : memref<18x32xf32, #tpu.memory_space<vmem>>, vector<18x32xf32>
    tpu.vector_store %arg4[%c0_5, %c0_6], %7 {strides = array<i32>} : memref<18x32xf32, #tpu.memory_space<vmem>>, vector<18x32xf32>,
    return
  }
  func.func @transform_0(%arg0: i32) -> (i32, i32) {
    %c0_i32 = arith.constant 0 : i32
    %c0_i32_0 = arith.constant 0 : i32
    return %arg0, %c0_i32 : i32, i32
  }
  func.func @transform_1(%arg0: i32) -> (i32, i32) {
    %c0_i32 = arith.constant 0 : i32
    %c0_i32_0 = arith.constant 0 : i32
    %c0_i32_1 = arith.constant 0 : i32
    return %c0_i32, %c0_i32_0 : i32, i32
  }
  func.func @transform_2(%arg0: i32) -> (i32, i32) {
    %c0_i32 = arith.constant 0 : i32
    %c0_i32_0 = arith.constant 0 : i32
    %c0_i32_1 = arith.constant 0 : i32
    return %c0_i32, %c0_i32_0 : i32, i32
  }
  func.func @transform_3(%arg0: i32) -> (i32, i32) {
    %c0_i32 = arith.constant 0 : i32
    %c0_i32_0 = arith.constant 0 : i32
    return %arg0, %c0_i32 : i32, i32
  }
}

module attributes {stable_mosaic.version = 11 : i64} {
  func.func @kernel(%arg0: i32, %arg1: memref<1x9x9xf32, #tpu.memory_space<vmem>>, %arg2: memref<1x9x32xf32, #tpu.memory_space<vmem>>, %arg3: memref<1x81x16xf32, #tpu.memory_space<vmem>>, %arg4: memref<81x9xf32, #tpu.memory_space<vmem>>, %arg5: memref<32x32xf32, #tpu.memory_space<vmem>>, %arg6: memref<32x32xf32, #tpu.memory_space<vmem>>, %arg7: memref<1x32xf32, #tpu.memory_space<vmem>>, %arg8: memref<16x16xf32, #tpu.memory_space<vmem>>, %arg9: memref<32x16xf32, #tpu.memory_space<vmem>>, %arg10: memref<1x16xf32, #tpu.memory_space<vmem>>, %arg11: memref<16x16xf32, #tpu.memory_space<vmem>>, %arg12: memref<1x16xf32, #tpu.memory_space<vmem>>, %arg13: memref<16x2xf32, #tpu.memory_space<vmem>>, %arg14: memref<1x2xf32, #tpu.memory_space<vmem>>, %arg15: memref<1x9x32xf32, #tpu.memory_space<vmem>>, %arg16: memref<1x81x2xf32, #tpu.memory_space<vmem>>) attributes {dimension_semantics = [#tpu.dimension_semantics<parallel>], iteration_bounds = array<i64: 2>, scalar_prefetch = 0 : i64, scratch_operands = 0 : i64, tpu.core_type = #tpu.core_type<tc>, window_params = [{transform_indices = @transform_0, window_bounds = array<i64: 1, 9, 9>}, {transform_indices = @transform_1, window_bounds = array<i64: 1, 9, 32>}, {transform_indices = @transform_2, window_bounds = array<i64: 1, 81, 16>}, {pipeline_mode = #tpu.pipeline_mode<synchronous>, transform_indices = @transform_3, window_bounds = array<i64: 81, 9>}, {pipeline_mode = #tpu.pipeline_mode<synchronous>, transform_indices = @transform_4, window_bounds = array<i64: 32, 32>}, {pipeline_mode = #tpu.pipeline_mode<synchronous>, transform_indices = @transform_5, window_bounds = array<i64: 32, 32>}, {pipeline_mode = #tpu.pipeline_mode<synchronous>, transform_indices = @transform_6, window_bounds = array<i64: 1, 32>}, {pipeline_mode = #tpu.pipeline_mode<synchronous>, transform_indices = @transform_7, window_bounds = array<i64: 16, 16>}, {pipeline_mode = #tpu.pipeline_mode<synchronous>, transform_indices = @transform_8, window_bounds = array<i64: 32, 16>}, {pipeline_mode = #tpu.pipeline_mode<synchronous>, transform_indices = @transform_9, window_bounds = array<i64: 1, 16>}, {pipeline_mode = #tpu.pipeline_mode<synchronous>, transform_indices = @transform_10, window_bounds = array<i64: 16, 16>}, {pipeline_mode = #tpu.pipeline_mode<synchronous>, transform_indices = @transform_11, window_bounds = array<i64: 1, 16>}, {pipeline_mode = #tpu.pipeline_mode<synchronous>, transform_indices = @transform_12, window_bounds = array<i64: 16, 2>}, {pipeline_mode = #tpu.pipeline_mode<synchronous>, transform_indices = @transform_13, window_bounds = array<i64: 1, 2>}, {transform_indices = @transform_14, window_bounds = array<i64: 1, 9, 32>}, {transform_indices = @transform_15, window_bounds = array<i64: 1, 81, 2>}]} {
    %c0 = arith.constant 0 : index
    %c0_0 = arith.constant 0 : index
    %c0_1 = arith.constant 0 : index
    %0 = vector.load %arg1[%c0, %c0_0, %c0_1] : memref<1x9x9xf32, #tpu.memory_space<vmem>>, vector<1x9x9xf32>
    %1 = vector.shape_cast %0 : vector<1x9x9xf32> to vector<9x9xf32>
    %c0_2 = arith.constant 0 : index
    %c0_3 = arith.constant 0 : index
    %c0_4 = arith.constant 0 : index
    %2 = vector.load %arg2[%c0_2, %c0_3, %c0_4] : memref<1x9x32xf32, #tpu.memory_space<vmem>>, vector<1x9x32xf32>
    %3 = vector.shape_cast %2 : vector<1x9x32xf32> to vector<9x32xf32>
    %c0_5 = arith.constant 0 : index
    %c0_6 = arith.constant 0 : index
    %c0_7 = arith.constant 0 : index
    %4 = vector.load %arg3[%c0_5, %c0_6, %c0_7] : memref<1x81x16xf32, #tpu.memory_space<vmem>>, vector<1x81x16xf32>
    %5 = vector.shape_cast %4 : vector<1x81x16xf32> to vector<81x16xf32>
    %6 = arith.truncf %1 : vector<9x9xf32> to vector<9x9xbf16>
    %7 = arith.truncf %3 : vector<9x32xf32> to vector<9x32xbf16>
    %cst = arith.constant dense<0.000000e+00> : vector<9x32xf32>
    %8 = tpu.matmul %6, %7, %cst {dimension_numbers = #tpu.dot_dimension_numbers<[1], [0], [0], [1], [0, 0, 1, 1], [], []>} : vector<9x9xbf16>, vector<9x32xbf16>, vector<9x32xf32> -> vector<9x32xf32>
    %c0_8 = arith.constant 0 : index
    %c0_9 = arith.constant 0 : index
    %9 = vector.load %arg5[%c0_8, %c0_9] : memref<32x32xf32, #tpu.memory_space<vmem>>, vector<32x32xf32>
    %10 = arith.truncf %3 : vector<9x32xf32> to vector<9x32xbf16>
    %11 = arith.truncf %9 : vector<32x32xf32> to vector<32x32xbf16>
    %cst_10 = arith.constant dense<0.000000e+00> : vector<9x32xf32>
    %12 = tpu.matmul %10, %11, %cst_10 {dimension_numbers = #tpu.dot_dimension_numbers<[1], [0], [0], [1], [0, 0, 1, 1], [], []>} : vector<9x32xbf16>, vector<32x32xbf16>, vector<9x32xf32> -> vector<9x32xf32>
    %c0_11 = arith.constant 0 : index
    %c0_12 = arith.constant 0 : index
    %13 = vector.load %arg6[%c0_11, %c0_12] : memref<32x32xf32, #tpu.memory_space<vmem>>, vector<32x32xf32>
    %14 = arith.truncf %8 : vector<9x32xf32> to vector<9x32xbf16>
    %15 = arith.truncf %13 : vector<32x32xf32> to vector<32x32xbf16>
    %cst_13 = arith.constant dense<0.000000e+00> : vector<9x32xf32>
    %16 = tpu.matmul %14, %15, %cst_13 {dimension_numbers = #tpu.dot_dimension_numbers<[1], [0], [0], [1], [0, 0, 1, 1], [], []>} : vector<9x32xbf16>, vector<32x32xbf16>, vector<9x32xf32> -> vector<9x32xf32>
    %17 = arith.addf %12, %16 : vector<9x32xf32>
    %c0_14 = arith.constant 0 : index
    %c0_15 = arith.constant 0 : index
    %18 = vector.load %arg7[%c0_14, %c0_15] : memref<1x32xf32, #tpu.memory_space<vmem>>, vector<1x32xf32>
    %19 = vector.broadcast %18 : vector<1x32xf32> to vector<9x32xf32>
    %20 = arith.addf %17, %19 : vector<9x32xf32>
    %cst_16 = arith.constant 0.000000e+00 : f32
    %21 = vector.broadcast %cst_16 : f32 to vector<9x32xf32>
    %22 = arith.maximumf %20, %21 : vector<9x32xf32>
    %23 = arith.addf %3, %22 : vector<9x32xf32>
    %c0_17 = arith.constant 0 : index
    %c0_18 = arith.constant 0 : index
    %c0_19 = arith.constant 0 : index
    %24 = vector.load %arg15[%c0_17, %c0_18, %c0_19] : memref<1x9x32xf32, #tpu.memory_space<vmem>>, vector<1x9x32xf32>
    %25 = vector.shape_cast %24 : vector<1x9x32xf32> to vector<9x32xf32>
    %26 = vector.shape_cast %23 : vector<9x32xf32> to vector<1x9x32xf32>
    tpu.vector_store %arg15[%c0_17, %c0_18, %c0_19], %26 {strides = array<i32>} : memref<1x9x32xf32, #tpu.memory_space<vmem>>, vector<1x9x32xf32>,
    %c0_20 = arith.constant 0 : index
    %c0_21 = arith.constant 0 : index
    %27 = vector.load %arg9[%c0_20, %c0_21] : memref<32x16xf32, #tpu.memory_space<vmem>>, vector<32x16xf32>
    %28 = arith.truncf %23 : vector<9x32xf32> to vector<9x32xbf16>
    %29 = arith.truncf %27 : vector<32x16xf32> to vector<32x16xbf16>
    %cst_22 = arith.constant dense<0.000000e+00> : vector<9x16xf32>
    %30 = tpu.matmul %28, %29, %cst_22 {dimension_numbers = #tpu.dot_dimension_numbers<[1], [0], [0], [1], [0, 0, 1, 1], [], []>} : vector<9x32xbf16>, vector<32x16xbf16>, vector<9x16xf32> -> vector<9x16xf32>
    %c0_23 = arith.constant 0 : index
    %c0_24 = arith.constant 0 : index
    %31 = vector.load %arg4[%c0_23, %c0_24] : memref<81x9xf32, #tpu.memory_space<vmem>>, vector<81x9xf32>
    %32 = arith.truncf %31 : vector<81x9xf32> to vector<81x9xbf16>
    %33 = arith.truncf %30 : vector<9x16xf32> to vector<9x16xbf16>
    %cst_25 = arith.constant dense<0.000000e+00> : vector<81x16xf32>
    %34 = tpu.matmul %32, %33, %cst_25 {dimension_numbers = #tpu.dot_dimension_numbers<[1], [0], [0], [1], [0, 0, 1, 1], [], []>} : vector<81x9xbf16>, vector<9x16xbf16>, vector<81x16xf32> -> vector<81x16xf32>
    %c0_26 = arith.constant 0 : index
    %c0_27 = arith.constant 0 : index
    %35 = vector.load %arg8[%c0_26, %c0_27] : memref<16x16xf32, #tpu.memory_space<vmem>>, vector<16x16xf32>
    %36 = arith.truncf %5 : vector<81x16xf32> to vector<81x16xbf16>
    %37 = arith.truncf %35 : vector<16x16xf32> to vector<16x16xbf16>
    %cst_28 = arith.constant dense<0.000000e+00> : vector<81x16xf32>
    %38 = tpu.matmul %36, %37, %cst_28 {dimension_numbers = #tpu.dot_dimension_numbers<[1], [0], [0], [1], [0, 0, 1, 1], [], []>} : vector<81x16xbf16>, vector<16x16xbf16>, vector<81x16xf32> -> vector<81x16xf32>
    %39 = arith.addf %38, %34 : vector<81x16xf32>
    %c0_29 = arith.constant 0 : index
    %c0_30 = arith.constant 0 : index
    %40 = vector.load %arg10[%c0_29, %c0_30] : memref<1x16xf32, #tpu.memory_space<vmem>>, vector<1x16xf32>
    %41 = vector.broadcast %40 : vector<1x16xf32> to vector<81x16xf32>
    %42 = arith.addf %39, %41 : vector<81x16xf32>
    %cst_31 = arith.constant 0.000000e+00 : f32
    %43 = vector.broadcast %cst_31 : f32 to vector<81x16xf32>
    %44 = arith.maximumf %42, %43 : vector<81x16xf32>
    %45 = arith.addf %5, %44 : vector<81x16xf32>
    %c0_32 = arith.constant 0 : index
    %c0_33 = arith.constant 0 : index
    %46 = vector.load %arg11[%c0_32, %c0_33] : memref<16x16xf32, #tpu.memory_space<vmem>>, vector<16x16xf32>
    %47 = arith.truncf %45 : vector<81x16xf32> to vector<81x16xbf16>
    %48 = arith.truncf %46 : vector<16x16xf32> to vector<16x16xbf16>
    %cst_34 = arith.constant dense<0.000000e+00> : vector<81x16xf32>
    %49 = tpu.matmul %47, %48, %cst_34 {dimension_numbers = #tpu.dot_dimension_numbers<[1], [0], [0], [1], [0, 0, 1, 1], [], []>} : vector<81x16xbf16>, vector<16x16xbf16>, vector<81x16xf32> -> vector<81x16xf32>
    %c0_35 = arith.constant 0 : index
    %c0_36 = arith.constant 0 : index
    %50 = vector.load %arg12[%c0_35, %c0_36] : memref<1x16xf32, #tpu.memory_space<vmem>>, vector<1x16xf32>
    %51 = vector.broadcast %50 : vector<1x16xf32> to vector<81x16xf32>
    %52 = arith.addf %49, %51 : vector<81x16xf32>
    %cst_37 = arith.constant 0.000000e+00 : f32
    %53 = vector.broadcast %cst_37 : f32 to vector<81x16xf32>
    %54 = arith.maximumf %52, %53 : vector<81x16xf32>
    %c0_38 = arith.constant 0 : index
    %c0_39 = arith.constant 0 : index
    %55 = vector.load %arg13[%c0_38, %c0_39] : memref<16x2xf32, #tpu.memory_space<vmem>>, vector<16x2xf32>
    %56 = arith.truncf %54 : vector<81x16xf32> to vector<81x16xbf16>
    %57 = arith.truncf %55 : vector<16x2xf32> to vector<16x2xbf16>
    %cst_40 = arith.constant dense<0.000000e+00> : vector<81x2xf32>
    %58 = tpu.matmul %56, %57, %cst_40 {dimension_numbers = #tpu.dot_dimension_numbers<[1], [0], [0], [1], [0, 0, 1, 1], [], []>} : vector<81x16xbf16>, vector<16x2xbf16>, vector<81x2xf32> -> vector<81x2xf32>
    %c0_41 = arith.constant 0 : index
    %c0_42 = arith.constant 0 : index
    %59 = vector.load %arg14[%c0_41, %c0_42] : memref<1x2xf32, #tpu.memory_space<vmem>>, vector<1x2xf32>
    %60 = vector.broadcast %59 : vector<1x2xf32> to vector<81x2xf32>
    %61 = arith.addf %58, %60 : vector<81x2xf32>
    %cst_43 = arith.constant dense<0xFF800000> : vector<81xf32>
    %62 = vector.multi_reduction <maximumf>, %61, %cst_43 [1] : vector<81x2xf32> to vector<81xf32>
    %63 = vector.shape_cast %62 : vector<81xf32> to vector<81x1xf32>
    %64 = vector.broadcast %63 : vector<81x1xf32> to vector<81x2xf32>
    %65 = arith.subf %61, %64 : vector<81x2xf32>
    %66 = math.exp %65 : vector<81x2xf32>
    %cst_44 = arith.constant dense<0.000000e+00> : vector<81xf32>
    %67 = vector.multi_reduction <add>, %66, %cst_44 [1] : vector<81x2xf32> to vector<81xf32>
    %68 = vector.shape_cast %67 : vector<81xf32> to vector<81x1xf32>
    %69 = vector.broadcast %68 : vector<81x1xf32> to vector<81x2xf32>
    %70 = arith.divf %66, %69 : vector<81x2xf32>
    %c0_45 = arith.constant 0 : index
    %c0_46 = arith.constant 0 : index
    %c0_47 = arith.constant 0 : index
    %71 = vector.load %arg16[%c0_45, %c0_46, %c0_47] : memref<1x81x2xf32, #tpu.memory_space<vmem>>, vector<1x81x2xf32>
    %72 = vector.shape_cast %71 : vector<1x81x2xf32> to vector<81x2xf32>
    %73 = vector.shape_cast %70 : vector<81x2xf32> to vector<1x81x2xf32>
    tpu.vector_store %arg16[%c0_45, %c0_46, %c0_47], %73 {strides = array<i32>} : memref<1x81x2xf32, #tpu.memory_space<vmem>>, vector<1x81x2xf32>,
    return
  }
  func.func @transform_0(%arg0: i32) -> (i32, i32, i32) {
    %c0_i32 = arith.constant 0 : i32
    %c0_i32_0 = arith.constant 0 : i32
    %c0_i32_1 = arith.constant 0 : i32
    return %arg0, %c0_i32, %c0_i32_0 : i32, i32, i32
  }
  func.func @transform_1(%arg0: i32) -> (i32, i32, i32) {
    %c0_i32 = arith.constant 0 : i32
    %c0_i32_0 = arith.constant 0 : i32
    %c0_i32_1 = arith.constant 0 : i32
    return %arg0, %c0_i32, %c0_i32_0 : i32, i32, i32
  }
  func.func @transform_2(%arg0: i32) -> (i32, i32, i32) {
    %c0_i32 = arith.constant 0 : i32
    %c0_i32_0 = arith.constant 0 : i32
    %c0_i32_1 = arith.constant 0 : i32
    return %arg0, %c0_i32, %c0_i32_0 : i32, i32, i32
  }
  func.func @transform_3(%arg0: i32) -> (i32, i32) {
    %c0_i32 = arith.constant 0 : i32
    %c0_i32_0 = arith.constant 0 : i32
    %c0_i32_1 = arith.constant 0 : i32
    return %c0_i32, %c0_i32_0 : i32, i32
  }
  func.func @transform_4(%arg0: i32) -> (i32, i32) {
    %c0_i32 = arith.constant 0 : i32
    %c0_i32_0 = arith.constant 0 : i32
    %c0_i32_1 = arith.constant 0 : i32
    return %c0_i32, %c0_i32_0 : i32, i32
  }
  func.func @transform_5(%arg0: i32) -> (i32, i32) {
    %c0_i32 = arith.constant 0 : i32
    %c0_i32_0 = arith.constant 0 : i32
    %c0_i32_1 = arith.constant 0 : i32
    return %c0_i32, %c0_i32_0 : i32, i32
  }
  func.func @transform_6(%arg0: i32) -> (i32, i32) {
    %c0_i32 = arith.constant 0 : i32
    %c0_i32_0 = arith.constant 0 : i32
    %c0_i32_1 = arith.constant 0 : i32
    return %c0_i32, %c0_i32_0 : i32, i32
  }
  func.func @transform_7(%arg0: i32) -> (i32, i32) {
    %c0_i32 = arith.constant 0 : i32
    %c0_i32_0 = arith.constant 0 : i32
    %c0_i32_1 = arith.constant 0 : i32
    return %c0_i32, %c0_i32_0 : i32, i32
  }
  func.func @transform_8(%arg0: i32) -> (i32, i32) {
    %c0_i32 = arith.constant 0 : i32
    %c0_i32_0 = arith.constant 0 : i32
    %c0_i32_1 = arith.constant 0 : i32
    return %c0_i32, %c0_i32_0 : i32, i32
  }
  func.func @transform_9(%arg0: i32) -> (i32, i32) {
    %c0_i32 = arith.constant 0 : i32
    %c0_i32_0 = arith.constant 0 : i32
    %c0_i32_1 = arith.constant 0 : i32
    return %c0_i32, %c0_i32_0 : i32, i32
  }
  func.func @transform_10(%arg0: i32) -> (i32, i32) {
    %c0_i32 = arith.constant 0 : i32
    %c0_i32_0 = arith.constant 0 : i32
    %c0_i32_1 = arith.constant 0 : i32
    return %c0_i32, %c0_i32_0 : i32, i32
  }
  func.func @transform_11(%arg0: i32) -> (i32, i32) {
    %c0_i32 = arith.constant 0 : i32
    %c0_i32_0 = arith.constant 0 : i32
    %c0_i32_1 = arith.constant 0 : i32
    return %c0_i32, %c0_i32_0 : i32, i32
  }
  func.func @transform_12(%arg0: i32) -> (i32, i32) {
    %c0_i32 = arith.constant 0 : i32
    %c0_i32_0 = arith.constant 0 : i32
    %c0_i32_1 = arith.constant 0 : i32
    return %c0_i32, %c0_i32_0 : i32, i32
  }
  func.func @transform_13(%arg0: i32) -> (i32, i32) {
    %c0_i32 = arith.constant 0 : i32
    %c0_i32_0 = arith.constant 0 : i32
    %c0_i32_1 = arith.constant 0 : i32
    return %c0_i32, %c0_i32_0 : i32, i32
  }
  func.func @transform_14(%arg0: i32) -> (i32, i32, i32) {
    %c0_i32 = arith.constant 0 : i32
    %c0_i32_0 = arith.constant 0 : i32
    %c0_i32_1 = arith.constant 0 : i32
    return %arg0, %c0_i32, %c0_i32_0 : i32, i32, i32
  }
  func.func @transform_15(%arg0: i32) -> (i32, i32, i32) {
    %c0_i32 = arith.constant 0 : i32
    %c0_i32_0 = arith.constant 0 : i32
    %c0_i32_1 = arith.constant 0 : i32
    return %arg0, %c0_i32, %c0_i32_0 : i32, i32, i32
  }
}

module attributes {stable_mosaic.version = 11 : i64} {
  func.func @_decoder_kernel(%arg0: i32, %arg1: i32, %arg2: memref<2x9x32xf32, #tpu.memory_space<vmem>>, %arg3: memref<2x9x32xf32, #tpu.memory_space<vmem>>, %arg4: memref<1x1x2x9xf32, #tpu.memory_space<vmem>>, %arg5: memref<32x32xf32, #tpu.memory_space<vmem>>, %arg6: memref<1x32xf32, #tpu.memory_space<vmem>>, %arg7: memref<64x192xf32, #tpu.memory_space<vmem>>, %arg8: memref<1x192xf32, #tpu.memory_space<vmem>>, %arg9: memref<64x192xf32, #tpu.memory_space<vmem>>, %arg10: memref<1x192xf32, #tpu.memory_space<vmem>>, %arg11: memref<1x1x2x1xi32, #tpu.memory_space<vmem>>, %arg12: memref<1x2x1xf32, #tpu.memory_space<vmem>>, %arg13: memref<2x2x32xf32, #tpu.memory_space<vmem>>, %arg14: memref<2x9xf32, #tpu.memory_space<vmem>>, %arg15: memref<2x9xf32, #tpu.memory_space<vmem>>) attributes {dimension_semantics = [#tpu.dimension_semantics<parallel>, #tpu.dimension_semantics<arbitrary>], iteration_bounds = array<i64: 2, 8>, scalar_prefetch = 0 : i64, scratch_operands = 3 : i64, tpu.core_type = #tpu.core_type<tc>, window_params = [{pipeline_mode = #tpu.pipeline_mode<synchronous>, transform_indices = @transform_0, window_bounds = array<i64: 2, 9, 32>}, {pipeline_mode = #tpu.pipeline_mode<synchronous>, transform_indices = @transform_1, window_bounds = array<i64: 2, 9, 32>}, {transform_indices = @transform_2, window_bounds = array<i64: 1, 1, 2, 9>}, {pipeline_mode = #tpu.pipeline_mode<synchronous>, transform_indices = @transform_3, window_bounds = array<i64: 32, 32>}, {pipeline_mode = #tpu.pipeline_mode<synchronous>, transform_indices = @transform_4, window_bounds = array<i64: 1, 32>}, {pipeline_mode = #tpu.pipeline_mode<synchronous>, transform_indices = @transform_5, window_bounds = array<i64: 64, 192>}, {pipeline_mode = #tpu.pipeline_mode<synchronous>, transform_indices = @transform_6, window_bounds = array<i64: 1, 192>}, {pipeline_mode = #tpu.pipeline_mode<synchronous>, transform_indices = @transform_7, window_bounds = array<i64: 64, 192>}, {pipeline_mode = #tpu.pipeline_mode<synchronous>, transform_indices = @transform_8, window_bounds = array<i64: 1, 192>}, {transform_indices = @transform_9, window_bounds = array<i64: 1, 1, 2, 1>}, {transform_indices = @transform_10, window_bounds = array<i64: 1, 2, 1>}]} {
    %0 = tpu.iota {dimensions = array<i32: 1>} : vector<2x9xi32>
    %c0_i32 = arith.constant 0 : i32
    %1 = arith.cmpi eq, %arg1, %c0_i32 : i32
    %2 = arith.extui %1 : i1 to i32
    %c0_i32_0 = arith.constant 0 : i32
    %3 = arith.cmpi ne, %2, %c0_i32_0 : i32
    scf.if %3 {
      %c0_i32_71 = arith.constant 0 : i32
      %154 = vector.broadcast %c0_i32_71 : i32 to vector<2x9xi32>
      %155 = arith.cmpi eq, %0, %154 : vector<2x9xi32>
      %156 = arith.extui %155 : vector<2x9xi1> to vector<2x9xi32>
      %157 = arith.sitofp %156 : vector<2x9xi32> to vector<2x9xf32>
      %c0_72 = arith.constant 0 : index
      %c0_73 = arith.constant 0 : index
      %158 = vector.load %arg14[%c0_72, %c0_73] : memref<2x9xf32, #tpu.memory_space<vmem>>, vector<2x9xf32>
      tpu.vector_store %arg14[%c0_72, %c0_73], %157 {strides = array<i32>} : memref<2x9xf32, #tpu.memory_space<vmem>>, vector<2x9xf32>,
      %c0_74 = arith.constant 0 : index
      %c0_75 = arith.constant 0 : index
      %159 = vector.load %arg15[%c0_74, %c0_75] : memref<2x9xf32, #tpu.memory_space<vmem>>, vector<2x9xf32>
      tpu.vector_store %arg15[%c0_74, %c0_75], %157 {strides = array<i32>} : memref<2x9xf32, #tpu.memory_space<vmem>>, vector<2x9xf32>,
      %cst_76 = arith.constant 0.000000e+00 : f32
      %160 = vector.broadcast %cst_76 : f32 to vector<2x2x32xf32>
      %c0_77 = arith.constant 0 : index
      %c0_78 = arith.constant 0 : index
      %c0_79 = arith.constant 0 : index
      %161 = vector.load %arg13[%c0_77, %c0_78, %c0_79] : memref<2x2x32xf32, #tpu.memory_space<vmem>>, vector<2x2x32xf32>
      tpu.vector_store %arg13[%c0_77, %c0_78, %c0_79], %160 {strides = array<i32>} : memref<2x2x32xf32, #tpu.memory_space<vmem>>, vector<2x2x32xf32>,
      %cst_80 = arith.constant 0.000000e+00 : f32
      %162 = vector.broadcast %cst_80 : f32 to vector<2x1xf32>
      %c0_81 = arith.constant 0 : index
      %c0_82 = arith.constant 0 : index
      %c0_83 = arith.constant 0 : index
      %163 = vector.load %arg12[%c0_81, %c0_82, %c0_83] : memref<1x2x1xf32, #tpu.memory_space<vmem>>, vector<1x2x1xf32>
      %164 = vector.shape_cast %163 : vector<1x2x1xf32> to vector<2x1xf32>
      %165 = vector.shape_cast %162 : vector<2x1xf32> to vector<1x2x1xf32>
      tpu.vector_store %arg12[%c0_81, %c0_82, %c0_83], %165 {strides = array<i32>} : memref<1x2x1xf32, #tpu.memory_space<vmem>>, vector<1x2x1xf32>,
    } else {
    }
    %c0 = arith.constant 0 : index
    %c0_1 = arith.constant 0 : index
    %c0_2 = arith.constant 0 : index
    %4 = vector.load %arg2[%c0, %c0_1, %c0_2] : memref<2x9x32xf32, #tpu.memory_space<vmem>>, vector<2x9x32xf32>
    %c0_3 = arith.constant 0 : index
    %c0_4 = arith.constant 0 : index
    %5 = vector.load %arg15[%c0_3, %c0_4] : memref<2x9xf32, #tpu.memory_space<vmem>>, vector<2x9xf32>
    %6 = vector.shape_cast %5 : vector<2x9xf32> to vector<2x9x1xf32>
    %7 = vector.broadcast %6 : vector<2x9x1xf32> to vector<2x9x32xf32>
    %8 = arith.mulf %7, %4 : vector<2x9x32xf32>
    %cst = arith.constant dense<0.000000e+00> : vector<2x32xf32>
    %9 = vector.multi_reduction <add>, %8, %cst [1] : vector<2x9x32xf32> to vector<2x32xf32>
    %c0_5 = arith.constant 0 : index
    %c0_6 = arith.constant 0 : index
    %c0_7 = arith.constant 0 : index
    %10 = vector.load %arg13[%c0_5, %c0_6, %c0_7] : memref<2x2x32xf32, #tpu.memory_space<vmem>>, vector<1x2x32xf32>
    %11 = vector.shape_cast %10 : vector<1x2x32xf32> to vector<2x32xf32>
    %12 = tpu.concatenate %9, %11 in 1 : vector<2x32xf32>, vector<2x32xf32> -> vector<2x64xf32>
    %c0_8 = arith.constant 0 : index
    %c0_9 = arith.constant 0 : index
    %13 = vector.load %arg7[%c0_8, %c0_9] : memref<64x192xf32, #tpu.memory_space<vmem>>, vector<64x192xf32>
    %14 = arith.truncf %12 : vector<2x64xf32> to vector<2x64xbf16>
    %15 = arith.truncf %13 : vector<64x192xf32> to vector<64x192xbf16>
    %cst_10 = arith.constant dense<0.000000e+00> : vector<2x192xf32>
    %16 = tpu.matmul %14, %15, %cst_10 {dimension_numbers = #tpu.dot_dimension_numbers<[1], [0], [0], [1], [0, 0, 1, 1], [], []>} : vector<2x64xbf16>, vector<64x192xbf16>, vector<2x192xf32> -> vector<2x192xf32>
    %c0_11 = arith.constant 0 : index
    %c0_12 = arith.constant 0 : index
    %17 = vector.load %arg8[%c0_11, %c0_12] : memref<1x192xf32, #tpu.memory_space<vmem>>, vector<1x192xf32>
    %18 = vector.broadcast %17 : vector<1x192xf32> to vector<2x192xf32>
    %19 = arith.addf %16, %18 : vector<2x192xf32>
    %20 = vector.extract_strided_slice %19 {offsets = [0, 0], sizes = [2, 96], strides = [1, 1]} : vector<2x192xf32> to vector<2x96xf32>
    %21 = vector.extract_strided_slice %19 {offsets = [0, 96], sizes = [2, 96], strides = [1, 1]} : vector<2x192xf32> to vector<2x96xf32>
    %22 = vector.extract_strided_slice %20 {offsets = [0, 0], sizes = [2, 32], strides = [1, 1]} : vector<2x96xf32> to vector<2x32xf32>
    %23 = vector.extract_strided_slice %21 {offsets = [0, 0], sizes = [2, 32], strides = [1, 1]} : vector<2x96xf32> to vector<2x32xf32>
    %24 = arith.addf %22, %23 : vector<2x32xf32>
    %25 = arith.negf %24 : vector<2x32xf32>
    %26 = math.exp %25 : vector<2x32xf32>
    %cst_13 = arith.constant 1.000000e+00 : f32
    %27 = vector.broadcast %cst_13 : f32 to vector<2x32xf32>
    %28 = arith.addf %27, %26 : vector<2x32xf32>
    %29 = arith.divf %27, %28 : vector<2x32xf32>
    %30 = vector.extract_strided_slice %20 {offsets = [0, 32], sizes = [2, 32], strides = [1, 1]} : vector<2x96xf32> to vector<2x32xf32>
    %31 = vector.extract_strided_slice %21 {offsets = [0, 32], sizes = [2, 32], strides = [1, 1]} : vector<2x96xf32> to vector<2x32xf32>
    %32 = arith.addf %30, %31 : vector<2x32xf32>
    %33 = arith.negf %32 : vector<2x32xf32>
    %34 = math.exp %33 : vector<2x32xf32>
    %cst_14 = arith.constant 1.000000e+00 : f32
    %35 = vector.broadcast %cst_14 : f32 to vector<2x32xf32>
    %36 = arith.addf %35, %34 : vector<2x32xf32>
    %37 = arith.divf %35, %36 : vector<2x32xf32>
    %38 = vector.extract_strided_slice %20 {offsets = [0, 64], sizes = [2, 32], strides = [1, 1]} : vector<2x96xf32> to vector<2x32xf32>
    %39 = vector.extract_strided_slice %21 {offsets = [0, 64], sizes = [2, 32], strides = [1, 1]} : vector<2x96xf32> to vector<2x32xf32>
    %40 = arith.mulf %29, %39 : vector<2x32xf32>
    %41 = arith.addf %38, %40 : vector<2x32xf32>
    %42 = math.tanh %41 : vector<2x32xf32>
    %cst_15 = arith.constant 1.000000e+00 : f32
    %43 = vector.broadcast %cst_15 : f32 to vector<2x32xf32>
    %44 = arith.subf %43, %37 : vector<2x32xf32>
    %45 = arith.mulf %44, %42 : vector<2x32xf32>
    %46 = arith.mulf %37, %11 : vector<2x32xf32>
    %47 = arith.addf %45, %46 : vector<2x32xf32>
    %c1 = arith.constant 1 : index
    %c0_16 = arith.constant 0 : index
    %c0_17 = arith.constant 0 : index
    %48 = vector.load %arg13[%c1, %c0_16, %c0_17] : memref<2x2x32xf32, #tpu.memory_space<vmem>>, vector<1x2x32xf32>
    %49 = vector.shape_cast %48 : vector<1x2x32xf32> to vector<2x32xf32>
    %50 = tpu.concatenate %47, %49 in 1 : vector<2x32xf32>, vector<2x32xf32> -> vector<2x64xf32>
    %c0_18 = arith.constant 0 : index
    %c0_19 = arith.constant 0 : index
    %51 = vector.load %arg9[%c0_18, %c0_19] : memref<64x192xf32, #tpu.memory_space<vmem>>, vector<64x192xf32>
    %52 = arith.truncf %50 : vector<2x64xf32> to vector<2x64xbf16>
    %53 = arith.truncf %51 : vector<64x192xf32> to vector<64x192xbf16>
    %cst_20 = arith.constant dense<0.000000e+00> : vector<2x192xf32>
    %54 = tpu.matmul %52, %53, %cst_20 {dimension_numbers = #tpu.dot_dimension_numbers<[1], [0], [0], [1], [0, 0, 1, 1], [], []>} : vector<2x64xbf16>, vector<64x192xbf16>, vector<2x192xf32> -> vector<2x192xf32>
    %c0_21 = arith.constant 0 : index
    %c0_22 = arith.constant 0 : index
    %55 = vector.load %arg10[%c0_21, %c0_22] : memref<1x192xf32, #tpu.memory_space<vmem>>, vector<1x192xf32>
    %56 = vector.broadcast %55 : vector<1x192xf32> to vector<2x192xf32>
    %57 = arith.addf %54, %56 : vector<2x192xf32>
    %58 = vector.extract_strided_slice %57 {offsets = [0, 0], sizes = [2, 96], strides = [1, 1]} : vector<2x192xf32> to vector<2x96xf32>
    %59 = vector.extract_strided_slice %57 {offsets = [0, 96], sizes = [2, 96], strides = [1, 1]} : vector<2x192xf32> to vector<2x96xf32>
    %60 = vector.extract_strided_slice %58 {offsets = [0, 0], sizes = [2, 32], strides = [1, 1]} : vector<2x96xf32> to vector<2x32xf32>
    %61 = vector.extract_strided_slice %59 {offsets = [0, 0], sizes = [2, 32], strides = [1, 1]} : vector<2x96xf32> to vector<2x32xf32>
    %62 = arith.addf %60, %61 : vector<2x32xf32>
    %63 = arith.negf %62 : vector<2x32xf32>
    %64 = math.exp %63 : vector<2x32xf32>
    %cst_23 = arith.constant 1.000000e+00 : f32
    %65 = vector.broadcast %cst_23 : f32 to vector<2x32xf32>
    %66 = arith.addf %65, %64 : vector<2x32xf32>
    %67 = arith.divf %65, %66 : vector<2x32xf32>
    %68 = vector.extract_strided_slice %58 {offsets = [0, 32], sizes = [2, 32], strides = [1, 1]} : vector<2x96xf32> to vector<2x32xf32>
    %69 = vector.extract_strided_slice %59 {offsets = [0, 32], sizes = [2, 32], strides = [1, 1]} : vector<2x96xf32> to vector<2x32xf32>
    %70 = arith.addf %68, %69 : vector<2x32xf32>
    %71 = arith.negf %70 : vector<2x32xf32>
    %72 = math.exp %71 : vector<2x32xf32>
    %cst_24 = arith.constant 1.000000e+00 : f32
    %73 = vector.broadcast %cst_24 : f32 to vector<2x32xf32>
    %74 = arith.addf %73, %72 : vector<2x32xf32>
    %75 = arith.divf %73, %74 : vector<2x32xf32>
    %76 = vector.extract_strided_slice %58 {offsets = [0, 64], sizes = [2, 32], strides = [1, 1]} : vector<2x96xf32> to vector<2x32xf32>
    %77 = vector.extract_strided_slice %59 {offsets = [0, 64], sizes = [2, 32], strides = [1, 1]} : vector<2x96xf32> to vector<2x32xf32>
    %78 = arith.mulf %67, %77 : vector<2x32xf32>
    %79 = arith.addf %76, %78 : vector<2x32xf32>
    %80 = math.tanh %79 : vector<2x32xf32>
    %cst_25 = arith.constant 1.000000e+00 : f32
    %81 = vector.broadcast %cst_25 : f32 to vector<2x32xf32>
    %82 = arith.subf %81, %75 : vector<2x32xf32>
    %83 = arith.mulf %82, %80 : vector<2x32xf32>
    %84 = arith.mulf %75, %49 : vector<2x32xf32>
    %85 = arith.addf %83, %84 : vector<2x32xf32>
    %c0_26 = arith.constant 0 : index
    %c0_27 = arith.constant 0 : index
    %c0_28 = arith.constant 0 : index
    %86 = vector.load %arg13[%c0_26, %c0_27, %c0_28] : memref<2x2x32xf32, #tpu.memory_space<vmem>>, vector<1x2x32xf32>
    %87 = vector.shape_cast %86 : vector<1x2x32xf32> to vector<2x32xf32>
    %88 = vector.shape_cast %47 : vector<2x32xf32> to vector<1x2x32xf32>
    tpu.vector_store %arg13[%c0_26, %c0_27, %c0_28], %88 {strides = array<i32>} : memref<2x2x32xf32, #tpu.memory_space<vmem>>, vector<1x2x32xf32>,
    %c1_29 = arith.constant 1 : index
    %c0_30 = arith.constant 0 : index
    %c0_31 = arith.constant 0 : index
    %89 = vector.load %arg13[%c1_29, %c0_30, %c0_31] : memref<2x2x32xf32, #tpu.memory_space<vmem>>, vector<1x2x32xf32>
    %90 = vector.shape_cast %89 : vector<1x2x32xf32> to vector<2x32xf32>
    %91 = vector.shape_cast %85 : vector<2x32xf32> to vector<1x2x32xf32>
    tpu.vector_store %arg13[%c1_29, %c0_30, %c0_31], %91 {strides = array<i32>} : memref<2x2x32xf32, #tpu.memory_space<vmem>>, vector<1x2x32xf32>,
    %c0_32 = arith.constant 0 : index
    %c0_33 = arith.constant 0 : index
    %92 = vector.load %arg5[%c0_32, %c0_33] : memref<32x32xf32, #tpu.memory_space<vmem>>, vector<32x32xf32>
    %93 = arith.truncf %85 : vector<2x32xf32> to vector<2x32xbf16>
    %94 = arith.truncf %92 : vector<32x32xf32> to vector<32x32xbf16>
    %cst_34 = arith.constant dense<0.000000e+00> : vector<2x32xf32>
    %95 = tpu.matmul %93, %94, %cst_34 {dimension_numbers = #tpu.dot_dimension_numbers<[1], [0], [0], [1], [0, 0, 1, 1], [], []>} : vector<2x32xbf16>, vector<32x32xbf16>, vector<2x32xf32> -> vector<2x32xf32>
    %c0_35 = arith.constant 0 : index
    %c0_36 = arith.constant 0 : index
    %96 = vector.load %arg6[%c0_35, %c0_36] : memref<1x32xf32, #tpu.memory_space<vmem>>, vector<1x32xf32>
    %97 = vector.broadcast %96 : vector<1x32xf32> to vector<2x32xf32>
    %98 = arith.addf %95, %97 : vector<2x32xf32>
    %c0_37 = arith.constant 0 : index
    %c0_38 = arith.constant 0 : index
    %c0_39 = arith.constant 0 : index
    %99 = vector.load %arg3[%c0_37, %c0_38, %c0_39] : memref<2x9x32xf32, #tpu.memory_space<vmem>>, vector<2x9x32xf32>
    %100 = vector.shape_cast %98 : vector<2x32xf32> to vector<2x1x32xf32>
    %101 = vector.broadcast %100 : vector<2x1x32xf32> to vector<2x9x32xf32>
    %102 = arith.mulf %99, %101 : vector<2x9x32xf32>
    %cst_40 = arith.constant dense<0.000000e+00> : vector<2x9xf32>
    %103 = vector.multi_reduction <add>, %102, %cst_40 [2] : vector<2x9x32xf32> to vector<2x9xf32>
    %cst_41 = arith.constant 0.176776692 : f32
    %104 = vector.broadcast %cst_41 : f32 to vector<2x9xf32>
    %105 = arith.mulf %103, %104 : vector<2x9xf32>
    %106 = math.tanh %105 : vector<2x9xf32>
    %cst_42 = arith.constant 1.000000e+01 : f32
    %107 = vector.broadcast %cst_42 : f32 to vector<2x9xf32>
    %108 = arith.mulf %107, %106 : vector<2x9xf32>
    %c0_43 = arith.constant 0 : index
    %c0_44 = arith.constant 0 : index
    %109 = vector.load %arg14[%c0_43, %c0_44] : memref<2x9xf32, #tpu.memory_space<vmem>>, vector<2x9xf32>
    %cst_45 = arith.constant -1.000000e+09 : f32
    %110 = vector.broadcast %cst_45 : f32 to vector<2x9xf32>
    %111 = arith.mulf %109, %110 : vector<2x9xf32>
    %112 = arith.addf %108, %111 : vector<2x9xf32>
    %cst_46 = arith.constant dense<0xFF800000> : vector<2xf32>
    %113 = vector.multi_reduction <maximumf>, %112, %cst_46 [1] : vector<2x9xf32> to vector<2xf32>
    %114 = vector.shape_cast %113 : vector<2xf32> to vector<2x1xf32>
    %115 = vector.broadcast %114 : vector<2x1xf32> to vector<2x9xf32>
    %116 = arith.subf %112, %115 : vector<2x9xf32>
    %117 = math.exp %116 : vector<2x9xf32>
    %cst_47 = arith.constant dense<0.000000e+00> : vector<2xf32>
    %118 = vector.multi_reduction <add>, %117, %cst_47 [1] : vector<2x9xf32> to vector<2xf32>
    %119 = vector.shape_cast %118 : vector<2xf32> to vector<2x1xf32>
    %120 = math.log %119 : vector<2x1xf32>
    %121 = arith.addf %114, %120 : vector<2x1xf32>
    %c0_48 = arith.constant 0 : index
    %c0_49 = arith.constant 0 : index
    %c0_50 = arith.constant 0 : index
    %c0_51 = arith.constant 0 : index
    %122 = vector.load %arg4[%c0_48, %c0_49, %c0_50, %c0_51] : memref<1x1x2x9xf32, #tpu.memory_space<vmem>>, vector<1x1x2x9xf32>
    %123 = vector.shape_cast %122 : vector<1x1x2x9xf32> to vector<2x9xf32>
    %124 = arith.addf %112, %123 : vector<2x9xf32>
    %cst_52 = arith.constant dense<0xFF800000> : vector<2xf32>
    %125 = vector.multi_reduction <maximumf>, %124, %cst_52 [1] : vector<2x9xf32> to vector<2xf32>
    %126 = vector.shape_cast %125 : vector<2xf32> to vector<2x1xf32>
    %127 = vector.broadcast %126 : vector<2x1xf32> to vector<2x9xf32>
    %128 = arith.cmpf oge, %124, %127 : vector<2x9xf32>
    %c9_i32 = arith.constant 9 : i32
    %129 = vector.broadcast %c9_i32 : i32 to vector<2x9xi32>
    %130 = arith.select %128, %0, %129 : vector<2x9xi1>, vector<2x9xi32>
    %cst_53 = arith.constant dense<2147483647> : vector<2xi32>
    %131 = vector.multi_reduction <minsi>, %130, %cst_53 [1] : vector<2x9xi32> to vector<2xi32>
    %132 = vector.shape_cast %131 : vector<2xi32> to vector<2x1xi32>
    %133 = vector.broadcast %132 : vector<2x1xi32> to vector<2x9xi32>
    %134 = arith.cmpi eq, %0, %133 : vector<2x9xi32>
    %135 = arith.extui %134 : vector<2x9xi1> to vector<2x9xi32>
    %136 = arith.sitofp %135 : vector<2x9xi32> to vector<2x9xf32>
    %137 = arith.mulf %136, %112 : vector<2x9xf32>
    %cst_54 = arith.constant dense<0.000000e+00> : vector<2xf32>
    %138 = vector.multi_reduction <add>, %137, %cst_54 [1] : vector<2x9xf32> to vector<2xf32>
    %139 = vector.shape_cast %138 : vector<2xf32> to vector<2x1xf32>
    %c0_55 = arith.constant 0 : index
    %c0_56 = arith.constant 0 : index
    %c0_57 = arith.constant 0 : index
    %140 = vector.load %arg12[%c0_55, %c0_56, %c0_57] : memref<1x2x1xf32, #tpu.memory_space<vmem>>, vector<1x2x1xf32>
    %141 = vector.shape_cast %140 : vector<1x2x1xf32> to vector<2x1xf32>
    %142 = arith.subf %139, %121 : vector<2x1xf32>
    %143 = arith.addf %141, %142 : vector<2x1xf32>
    %c0_58 = arith.constant 0 : index
    %c0_59 = arith.constant 0 : index
    %c0_60 = arith.constant 0 : index
    %144 = vector.load %arg12[%c0_58, %c0_59, %c0_60] : memref<1x2x1xf32, #tpu.memory_space<vmem>>, vector<1x2x1xf32>
    %145 = vector.shape_cast %144 : vector<1x2x1xf32> to vector<2x1xf32>
    %146 = vector.shape_cast %143 : vector<2x1xf32> to vector<1x2x1xf32>
    tpu.vector_store %arg12[%c0_58, %c0_59, %c0_60], %146 {strides = array<i32>} : memref<1x2x1xf32, #tpu.memory_space<vmem>>, vector<1x2x1xf32>,
    %c0_61 = arith.constant 0 : index
    %c0_62 = arith.constant 0 : index
    %147 = vector.load %arg14[%c0_61, %c0_62] : memref<2x9xf32, #tpu.memory_space<vmem>>, vector<2x9xf32>
    %148 = arith.maximumf %147, %136 : vector<2x9xf32>
    %c0_63 = arith.constant 0 : index
    %c0_64 = arith.constant 0 : index
    %149 = vector.load %arg14[%c0_63, %c0_64] : memref<2x9xf32, #tpu.memory_space<vmem>>, vector<2x9xf32>
    tpu.vector_store %arg14[%c0_63, %c0_64], %148 {strides = array<i32>} : memref<2x9xf32, #tpu.memory_space<vmem>>, vector<2x9xf32>,
    %c0_65 = arith.constant 0 : index
    %c0_66 = arith.constant 0 : index
    %150 = vector.load %arg15[%c0_65, %c0_66] : memref<2x9xf32, #tpu.memory_space<vmem>>, vector<2x9xf32>
    tpu.vector_store %arg15[%c0_65, %c0_66], %136 {strides = array<i32>} : memref<2x9xf32, #tpu.memory_space<vmem>>, vector<2x9xf32>,
    %c0_67 = arith.constant 0 : index
    %c0_68 = arith.constant 0 : index
    %c0_69 = arith.constant 0 : index
    %c0_70 = arith.constant 0 : index
    %151 = vector.load %arg11[%c0_67, %c0_68, %c0_69, %c0_70] : memref<1x1x2x1xi32, #tpu.memory_space<vmem>>, vector<1x1x2x1xi32>
    %152 = vector.shape_cast %151 : vector<1x1x2x1xi32> to vector<2x1xi32>
    %153 = vector.shape_cast %132 : vector<2x1xi32> to vector<1x1x2x1xi32>
    tpu.vector_store %arg11[%c0_67, %c0_68, %c0_69, %c0_70], %153 {strides = array<i32>} : memref<1x1x2x1xi32, #tpu.memory_space<vmem>>, vector<1x1x2x1xi32>,
    return
  }
  func.func @transform_0(%arg0: i32, %arg1: i32) -> (i32, i32, i32) {
    %c0_i32 = arith.constant 0 : i32
    %c0_i32_0 = arith.constant 0 : i32
    %c0_i32_1 = arith.constant 0 : i32
    %c0_i32_2 = arith.constant 0 : i32
    return %c0_i32, %c0_i32_0, %c0_i32_1 : i32, i32, i32
  }
  func.func @transform_1(%arg0: i32, %arg1: i32) -> (i32, i32, i32) {
    %c0_i32 = arith.constant 0 : i32
    %c0_i32_0 = arith.constant 0 : i32
    %c0_i32_1 = arith.constant 0 : i32
    %c0_i32_2 = arith.constant 0 : i32
    return %c0_i32, %c0_i32_0, %c0_i32_1 : i32, i32, i32
  }
  func.func @transform_2(%arg0: i32, %arg1: i32) -> (i32, i32, i32, i32) {
    %c0_i32 = arith.constant 0 : i32
    %c0_i32_0 = arith.constant 0 : i32
    %c0_i32_1 = arith.constant 0 : i32
    return %arg0, %arg1, %c0_i32, %c0_i32_0 : i32, i32, i32, i32
  }
  func.func @transform_3(%arg0: i32, %arg1: i32) -> (i32, i32) {
    %c0_i32 = arith.constant 0 : i32
    %c0_i32_0 = arith.constant 0 : i32
    %c0_i32_1 = arith.constant 0 : i32
    return %c0_i32, %c0_i32_0 : i32, i32
  }
  func.func @transform_4(%arg0: i32, %arg1: i32) -> (i32, i32) {
    %c0_i32 = arith.constant 0 : i32
    %c0_i32_0 = arith.constant 0 : i32
    %c0_i32_1 = arith.constant 0 : i32
    return %c0_i32, %c0_i32_0 : i32, i32
  }
  func.func @transform_5(%arg0: i32, %arg1: i32) -> (i32, i32) {
    %c0_i32 = arith.constant 0 : i32
    %c0_i32_0 = arith.constant 0 : i32
    %c0_i32_1 = arith.constant 0 : i32
    return %c0_i32, %c0_i32_0 : i32, i32
  }
  func.func @transform_6(%arg0: i32, %arg1: i32) -> (i32, i32) {
    %c0_i32 = arith.constant 0 : i32
    %c0_i32_0 = arith.constant 0 : i32
    %c0_i32_1 = arith.constant 0 : i32
    return %c0_i32, %c0_i32_0 : i32, i32
  }
  func.func @transform_7(%arg0: i32, %arg1: i32) -> (i32, i32) {
    %c0_i32 = arith.constant 0 : i32
    %c0_i32_0 = arith.constant 0 : i32
    %c0_i32_1 = arith.constant 0 : i32
    return %c0_i32, %c0_i32_0 : i32, i32
  }
  func.func @transform_8(%arg0: i32, %arg1: i32) -> (i32, i32) {
    %c0_i32 = arith.constant 0 : i32
    %c0_i32_0 = arith.constant 0 : i32
    %c0_i32_1 = arith.constant 0 : i32
    return %c0_i32, %c0_i32_0 : i32, i32
  }
  func.func @transform_9(%arg0: i32, %arg1: i32) -> (i32, i32, i32, i32) {
    %c0_i32 = arith.constant 0 : i32
    %c0_i32_0 = arith.constant 0 : i32
    %c0_i32_1 = arith.constant 0 : i32
    return %arg0, %arg1, %c0_i32, %c0_i32_0 : i32, i32, i32, i32
  }
  func.func @transform_10(%arg0: i32, %arg1: i32) -> (i32, i32, i32) {
    %c0_i32 = arith.constant 0 : i32
    %c0_i32_0 = arith.constant 0 : i32
    %c0_i32_1 = arith.constant 0 : i32
    return %arg0, %c0_i32, %c0_i32_0 : i32, i32, i32
  }
}

</mosaic_0001>

<llo_original>
// kernel: _forward_impl.6
$region0: #{_forward_impl.6}
  #allocation0 [shape = 'u32[]', space=smem, size = 0x4, offset = 0x4, fixed_abs, tag = 'smem constant byte address 0x4 - core index']
  #allocation1 [shape = 'u32[144,128]{1,0:T(1,128)}', space=vmem, size = 0x12000, scoped, tag = 'internal scratch']
  %s0 = inlined_call_operand.vmem [shape: f32[18,32], index: 0, kind: input, shape index: {}]
  %s1 = inlined_call_operand.vmem [shape: f32[32,32], index: 1, kind: input, shape index: {}]
  %s2 = inlined_call_operand.vmem [shape: f32[1,32], index: 2, kind: input, shape index: {}]
  %s3 = inlined_call_operand.vmem [shape: f32[18,32], index: 3, kind: output, shape index: {}]
  %s4 = sld [smem:[#allocation0]]
  $region22: #{_forward_impl.6} parent=0
    _
  %s6 = ssub.s32 1, %s4
  %s7 = scalar_select 0, %s6, %s4
  // Predicated region
  $region2: #{_forward_impl.6} parent=0 // pred_check
    _
  $region3: #{_forward_impl.6} parent=0 // pred_check_branch
    %9 = sbr.rel (0) target = $region5
  $region4: #{_forward_impl.6} parent=0 // pred_region
    _
  $region5: #{_forward_impl.6} parent=0 // pred_fallthru
    _
  // Predicated region
  $region6: #{_forward_impl.6} parent=0 // pred_check
    _
  $region7: #{_forward_impl.6} parent=0 // pred_check_branch
    %11 = sbr.rel (0) target = $region9
  $region8: #{_forward_impl.6} parent=0 // pred_region
    _
  $region9: #{_forward_impl.6} parent=0 // pred_fallthru
    _
  // Predicated region
  $region10: #{_forward_impl.6} parent=0 // pred_check
    _
  $region11: #{_forward_impl.6} parent=0 // pred_check_branch
    %13 = sbr.rel (0) target = $region13
  $region12: #{_forward_impl.6} parent=0 // pred_region
    _
  $region13: #{_forward_impl.6} parent=0 // pred_fallthru
    _
  %v15 = vld [vmem:[%s0] sm:$0xff]
  %v16 = vld [vmem:[%s0 + $0x8] sm:$0xff]
  %v17 = vld [vmem:[%s0 + $0x10] sm:$0x3]
  %v18 = vld [vmem:[%s1] sm:$0xff]
  %v19 = vld [vmem:[%s1 + $0x8] sm:$0xff]
  %v20 = vld [vmem:[%s1 + $0x10] sm:$0xff]
  %v21 = vld [vmem:[%s1 + $0x18] sm:$0xff]
  %v22 = vpack.c.bf16 %v16, %v15
  %v23 = vpack.c.bf16 %v17, %v17
  %v24 = vpack.c.bf16 %v19, %v18
  %v25 = vpack.c.bf16 %v21, %v20
  %v26 = vld [vmem:[%s2] sm:$0x1]
  %v28 = vlaneseq
  %v29 = vshrl.u32 %v28, 7
  %v30 = vsub.s32 0, %v29
  %v31 = vrot.slane %v26, %v30
  %vm33 = vcmask 261120
  %v35 = vsel %vm33, %v22, 0
  %v38 = vsel %vm33, %v23, 0
  %40 = vmatprep.subr.bf16.mxu0 0
  %41 = vmatpush1.bf16.msra.mxu0 0
  %42 = vmatprep.subr.bf16.mxu0 0
  %43 = vmatpush1.bf16.msra.mxu0 0
  %44 = vmatprep.subr.bf16.mxu0 0
  %45 = vmatpush1.bf16.msra.mxu0 0
  %46 = vmatprep.subr.bf16.mxu0 0
  %47 = vmatpush1.bf16.msra.mxu0 0
  %48 = vmatprep.subr.bf16.mxu0 0
  %49 = vmatpush1.bf16.msra.mxu0 0
  %50 = vmatprep.subr.bf16.mxu0 0
  %51 = vmatpush1.bf16.msra.mxu0 0
  %52 = vmatprep.subr.bf16.mxu0 0
  %53 = vmatpush1.bf16.msra.mxu0 %v25
  %54 = vmatprep.subr.bf16.mxu0 0
  %55 = vmatpush1.bf16.msra.mxu0 %v24
  %56 = vmatprep.subr.bf16.mxu0 0
  %57 = vmatpush2.bf16.msra.mxu0 0
  %58 = vmatprep.subr.bf16.mxu0 0
  %59 = vmatpush2.bf16.msra.mxu0 0
  %60 = vmatprep.subr.bf16.mxu0 0
  %61 = vmatpush2.bf16.msra.mxu0 0
  %62 = vmatprep.subr.bf16.mxu0 0
  %63 = vmatpush2.bf16.msra.mxu0 0
  %64 = vmatprep.subr.bf16.mxu0 0
  %65 = vmatpush2.bf16.msra.mxu0 0
  %66 = vmatprep.subr.bf16.mxu0 0
  %67 = vmatpush2.bf16.msra.mxu0 0
  %68 = vmatprep.subr.bf16.mxu0 0
  %69 = vmatpush2.bf16.msra.mxu0 0
  %70 = vmatprep.subr.bf16.mxu0 0
  %71 = vmatpush2.bf16.msra.mxu0 0
  %72 = vmatprep.mubr.bf16.mxu0 0
  %73 = vmatmul.mubr.bf16.gmra.mxu0 %v35
  %v74 = vpop.f32.mrf.mxu0
  %v75 = vadd.f32 %v31, %v74
  %v76 = vpop.f32.mrf.mxu0
  %v77 = vpop.f32.mrf.mxu0
  %v78 = vadd.f32 %v31, %v77
  %v79 = vpop.f32.mrf.mxu0
  %80 = vmatprep.mubr.bf16.mxu0 0
  %81 = vmatmul.mubr.bf16.gmra.mxu0 %v38
  %v82 = vpop.f32.mrf.mxu0
  %v83 = vadd.f32 %v31, %v82
  %v84 = vpop.f32.mrf.mxu0
  %v85 = vpop.f32.mrf.mxu0
  %v86 = vpop.f32.mrf.mxu0
  %87 = vdwg.mxu0
  %88 = vst.msk [vmem:[%s3] sm:$0xff] %vm33, %v75
  %89 = vst.msk [vmem:[%s3 + $0x8] sm:$0xff] %vm33, %v78
  %vm90 = vcmask 254976
  %91 = vst.msk [vmem:[%s3 + $0x10] sm:$0x3] %vm90, %v83
  // Predicated region
  $region14: #{_forward_impl.6} parent=0 // pred_check
    _
  $region15: #{_forward_impl.6} parent=0 // pred_check_branch
    %93 = sbr.rel (0) target = $region17
  $region16: #{_forward_impl.6} parent=0 // pred_region
    _
  $region17: #{_forward_impl.6} parent=0 // pred_fallthru
    _
  // Predicated region
  $region18: #{_forward_impl.6} parent=0 // pred_check
    _
  $region19: #{_forward_impl.6} parent=0 // pred_check_branch
    %95 = sbr.rel (0) target = $region21
  $region20: #{_forward_impl.6} parent=0 // pred_region
    _
  $region21: #{_forward_impl.6} parent=0 // pred_fallthru
    _

// kernel: _forward_impl.4
$region0: #{_forward_impl.4}
  #allocation0 [shape = 'u32[]', space=smem, size = 0x4, offset = 0x4, fixed_abs, tag = 'smem constant byte address 0x4 - core index']
  #allocation1 [shape = 'u32[144,128]{1,0:T(1,128)}', space=vmem, size = 0x12000, scoped, tag = 'internal scratch']
  %s0 = inlined_call_operand.vmem [shape: f32[2,9,9], index: 0, kind: input, shape index: {}]
  %s1 = inlined_call_operand.vmem [shape: f32[2,9,3], index: 1, kind: input, shape index: {}]
  %s2 = inlined_call_operand.vmem [shape: f32[2,81,2], index: 2, kind: input, shape index: {}]
  %s3 = inlined_call_operand.vmem [shape: f32[3,32], index: 3, kind: input, shape index: {}]
  %s4 = inlined_call_operand.vmem [shape: f32[1,32], index: 4, kind: input, shape index: {}]
  %s5 = inlined_call_operand.vmem [shape: f32[2,16], index: 5, kind: input, shape index: {}]
  %s6 = inlined_call_operand.vmem [shape: f32[1,16], index: 6, kind: input, shape index: {}]
  %s7 = inlined_call_operand.vmem [shape: f32[81,9], index: 7, kind: input, shape index: {}]
  %s8 = inlined_call_operand.vmem [shape: f32[32,32], index: 8, kind: input, shape index: {}]
  %s9 = inlined_call_operand.vmem [shape: f32[32,32], index: 9, kind: input, shape index: {}]
  %s10 = inlined_call_operand.vmem [shape: f32[1,32], index: 10, kind: input, shape index: {}]
  %s11 = inlined_call_operand.vmem [shape: f32[16,16], index: 11, kind: input, shape index: {}]
  %s12 = inlined_call_operand.vmem [shape: f32[32,16], index: 12, kind: input, shape index: {}]
  %s13 = inlined_call_operand.vmem [shape: f32[1,16], index: 13, kind: input, shape index: {}]
  %s14 = inlined_call_operand.vmem [shape: f32[2,9,32], index: 14, kind: output, shape index: {0}]
  %s15 = inlined_call_operand.vmem [shape: f32[2,81,16], index: 15, kind: output, shape index: {1}]
  %16 = xla_tuple %s14, %s15
  %s17 = sld [smem:[#allocation0]]
  $region97: #{_forward_impl.4} parent=0
    _
  %s19 = ssub.s32 1, %s17
  %s20 = scalar_select 0, %s19, %s17
  loop: start=0, step=1, limit=4
  $region2: #{_forward_impl.4} parent=0 // loop_pre_header
    _
  $region3: #{_forward_impl.4} parent=0 // loop_header
    %s22 = sphi 0, %s26
    %p23 = scmp.ge.s32.totalorder %s22, 4
    %s32 = sphi 0, %s34
    %s35 = sphi 0, %s32
    %s36 = sphi 0, %s35
    %s52 = sphi 0, %s36
    %s58 = sphi 0, %s60
    %s61 = sphi 0, %s58
    %s62 = sphi 0, %s61
    %s78 = sphi 0, %s62
    %s84 = sphi 0, %s86
    %s87 = sphi 0, %s84
    %s88 = sphi 0, %s87
    %s104 = sphi 0, %s88
    %s108 = sphi 0, %s108
    %s110 = sphi 0, %s108
    %s111 = sphi 0, %s110
    %s125 = sphi 0, %s111
    %s129 = sphi 0, %s129
    %s131 = sphi 0, %s129
    %s132 = sphi 0, %s131
    %s146 = sphi 0, %s132
    %s150 = sphi 0, %s150
    %s152 = sphi 0, %s150
    %s153 = sphi 0, %s152
    %s167 = sphi 0, %s153
    %s171 = sphi 0, %s171
    %s173 = sphi 0, %s171
    %s174 = sphi 0, %s173
    %s188 = sphi 0, %s174
    %s192 = sphi 0, %s192
    %s194 = sphi 0, %s192
    %s195 = sphi 0, %s194
    %s209 = sphi 0, %s195
    %s213 = sphi 0, %s213
    %s215 = sphi 0, %s213
    %s216 = sphi 0, %s215
    %s230 = sphi 0, %s216
    %s234 = sphi 0, %s234
    %s236 = sphi 0, %s234
    %s237 = sphi 0, %s236
    %s251 = sphi 0, %s237
    %s255 = sphi 0, %s255
    %s257 = sphi 0, %s255
    %s258 = sphi 0, %s257
    %s272 = sphi 0, %s258
    %s276 = sphi 0, %s276
    %s278 = sphi 0, %s276
    %s279 = sphi 0, %s278
    %s293 = sphi 0, %s279
    %s297 = sphi 0, %s297
    %s299 = sphi 0, %s297
    %s300 = sphi 0, %s299
    %s314 = sphi 0, %s300
    %s318 = sphi 0, %s318
    %s320 = sphi 0, %s318
    %s321 = sphi 0, %s320
    %s335 = sphi 0, %s321
    %s341 = sphi 0, %s343
    %s344 = sphi 0, %s341
    %s345 = sphi 0, %s344
    %s361 = sphi 0, %s345
    %s367 = sphi 0, %s369
    %s370 = sphi 0, %s367
    %s371 = sphi 0, %s370
    %s387 = sphi 0, %s371
  $region4: #{_forward_impl.4} parent=0 // loop_header_branch
    %25 = sbr.rel (%p23) target = $region8
  $region5: #{_forward_impl.4} parent=0 // loop_body
    %s27 = ssub.s32 %s22, 1
    %s28 = ssub.s32 %s22, 2
    %s29 = sadd.s32 %s22, 1
    %s30 = ssub.s32 %s22, %s29
    %p31 = scmp.eq.s32.totalorder %s30, 0
    %s33 = sadd.s32 %s32, 1
    %s34 = scalar_select %p31, %s32, %s33
    %p37 = pneg %p31
    %p38 = scmp.eq.s32.totalorder %s22, 1
    %p39 = por %p37, %p38
    %p40 = scmp.ne.s32.totalorder %s32, %s35
    %p41 = scmp.eq.s32.totalorder %s22, 0
    %p42 = por %p40, %p41
    %p43 = scmp.ne.s32.totalorder %s32, %s35
    %p44 = scmp.eq.s32.totalorder %s27, 1
    %p45 = por %p43, %p44
    %p46 = scmp.ne.s32.totalorder %s35, %s36
    %p47 = scmp.eq.s32.totalorder %s27, 0
    %p48 = por %p46, %p47
    %p49 = scmp.ne.s32.totalorder %s35, %s36
    %p50 = scmp.eq.s32.totalorder %s28, 1
    %p51 = por %p49, %p50
    %p53 = scmp.ne.s32.totalorder %s36, %s52
    %p54 = scmp.eq.s32.totalorder %s28, 0
    %p55 = por %p53, %p54
    %s56 = ssub.s32 %s22, %s29
    %p57 = scmp.eq.s32.totalorder %s56, 0
    %s59 = sadd.s32 %s58, 1
    %s60 = scalar_select %p57, %s58, %s59
    %p63 = pneg %p57
    %p64 = scmp.eq.s32.totalorder %s22, 1
    %p65 = por %p63, %p64
    %p66 = scmp.ne.s32.totalorder %s58, %s61
    %p67 = scmp.eq.s32.totalorder %s22, 0
    %p68 = por %p66, %p67
    %p69 = scmp.ne.s32.totalorder %s58, %s61
    %p70 = scmp.eq.s32.totalorder %s27, 1
    %p71 = por %p69, %p70
    %p72 = scmp.ne.s32.totalorder %s61, %s62
    %p73 = scmp.eq.s32.totalorder %s27, 0
    %p74 = por %p72, %p73
    %p75 = scmp.ne.s32.totalorder %s61, %s62
    %p76 = scmp.eq.s32.totalorder %s28, 1
    %p77 = por %p75, %p76
    %p79 = scmp.ne.s32.totalorder %s62, %s78
    %p80 = scmp.eq.s32.totalorder %s28, 0
    %p81 = por %p79, %p80
    %s82 = ssub.s32 %s22, %s29
    %p83 = scmp.eq.s32.totalorder %s82, 0
    %s85 = sadd.s32 %s84, 1
    %s86 = scalar_select %p83, %s84, %s85
    %p89 = pneg %p83
    %p90 = scmp.eq.s32.totalorder %s22, 1
    %p91 = por %p89, %p90
    %p92 = scmp.ne.s32.totalorder %s84, %s87
    %p93 = scmp.eq.s32.totalorder %s22, 0
    %p94 = por %p92, %p93
    %p95 = scmp.ne.s32.totalorder %s84, %s87
    %p96 = scmp.eq.s32.totalorder %s27, 1
    %p97 = por %p95, %p96
    %p98 = scmp.ne.s32.totalorder %s87, %s88
    %p99 = scmp.eq.s32.totalorder %s27, 0
    %p100 = por %p98, %p99
    %p101 = scmp.ne.s32.totalorder %s87, %s88
    %p102 = scmp.eq.s32.totalorder %s28, 1
    %p103 = por %p101, %p102
    %p105 = scmp.ne.s32.totalorder %s88, %s104
    %p106 = scmp.eq.s32.totalorder %s28, 0
    %p107 = por %p105, %p106
    %s109 = sadd.s32 %s108, 1
    %p112 = scmp.eq.s32.totalorder %s22, 1
    %p113 = scmp.ne.s32.totalorder %s108, %s110
    %p114 = scmp.eq.s32.totalorder %s22, 0
    %p115 = por %p113, %p114
    %p116 = scmp.ne.s32.totalorder %s108, %s110
    %p117 = scmp.eq.s32.totalorder %s27, 1
    %p118 = por %p116, %p117
    %p119 = scmp.ne.s32.totalorder %s110, %s111
    %p120 = scmp.eq.s32.totalorder %s27, 0
    %p121 = por %p119, %p120
    %p122 = scmp.ne.s32.totalorder %s110, %s111
    %p123 = scmp.eq.s32.totalorder %s28, 1
    %p124 = por %p122, %p123
    %p126 = scmp.ne.s32.totalorder %s111, %s125
    %p127 = scmp.eq.s32.totalorder %s28, 0
    %p128 = por %p126, %p127
    %s130 = sadd.s32 %s129, 1
    %p133 = scmp.eq.s32.totalorder %s22, 1
    %p134 = scmp.ne.s32.totalorder %s129, %s131
    %p135 = scmp.eq.s32.totalorder %s22, 0
    %p136 = por %p134, %p135
    %p137 = scmp.ne.s32.totalorder %s129, %s131
    %p138 = scmp.eq.s32.totalorder %s27, 1
    %p139 = por %p137, %p138
    %p140 = scmp.ne.s32.totalorder %s131, %s132
    %p141 = scmp.eq.s32.totalorder %s27, 0
    %p142 = por %p140, %p141
    %p143 = scmp.ne.s32.totalorder %s131, %s132
    %p144 = scmp.eq.s32.totalorder %s28, 1
    %p145 = por %p143, %p144
    %p147 = scmp.ne.s32.totalorder %s132, %s146
    %p148 = scmp.eq.s32.totalorder %s28, 0
    %p149 = por %p147, %p148
    %s151 = sadd.s32 %s150, 1
    %p154 = scmp.eq.s32.totalorder %s22, 1
    %p155 = scmp.ne.s32.totalorder %s150, %s152
    %p156 = scmp.eq.s32.totalorder %s22, 0
    %p157 = por %p155, %p156
    %p158 = scmp.ne.s32.totalorder %s150, %s152
    %p159 = scmp.eq.s32.totalorder %s27, 1
    %p160 = por %p158, %p159
    %p161 = scmp.ne.s32.totalorder %s152, %s153
    %p162 = scmp.eq.s32.totalorder %s27, 0
    %p163 = por %p161, %p162
    %p164 = scmp.ne.s32.totalorder %s152, %s153
    %p165 = scmp.eq.s32.totalorder %s28, 1
    %p166 = por %p164, %p165
    %p168 = scmp.ne.s32.totalorder %s153, %s167
    %p169 = scmp.eq.s32.totalorder %s28, 0
    %p170 = por %p168, %p169
    %s172 = sadd.s32 %s171, 1
    %p175 = scmp.eq.s32.totalorder %s22, 1
    %p176 = scmp.ne.s32.totalorder %s171, %s173
    %p177 = scmp.eq.s32.totalorder %s22, 0
    %p178 = por %p176, %p177
    %p179 = scmp.ne.s32.totalorder %s171, %s173
    %p180 = scmp.eq.s32.totalorder %s27, 1
    %p181 = por %p179, %p180
    %p182 = scmp.ne.s32.totalorder %s173, %s174
    %p183 = scmp.eq.s32.totalorder %s27, 0
    %p184 = por %p182, %p183
    %p185 = scmp.ne.s32.totalorder %s173, %s174
    %p186 = scmp.eq.s32.totalorder %s28, 1
    %p187 = por %p185, %p186
    %p189 = scmp.ne.s32.totalorder %s174, %s188
    %p190 = scmp.eq.s32.totalorder %s28, 0
    %p191 = por %p189, %p190
    %s193 = sadd.s32 %s192, 1
    %p196 = scmp.eq.s32.totalorder %s22, 1
    %p197 = scmp.ne.s32.totalorder %s192, %s194
    %p198 = scmp.eq.s32.totalorder %s22, 0
    %p199 = por %p197, %p198
    %p200 = scmp.ne.s32.totalorder %s192, %s194
    %p201 = scmp.eq.s32.totalorder %s27, 1
    %p202 = por %p200, %p201
    %p203 = scmp.ne.s32.totalorder %s194, %s195
    %p204 = scmp.eq.s32.totalorder %s27, 0
    %p205 = por %p203, %p204
    %p206 = scmp.ne.s32.totalorder %s194, %s195
    %p207 = scmp.eq.s32.totalorder %s28, 1
    %p208 = por %p206, %p207
    %p210 = scmp.ne.s32.totalorder %s195, %s209
    %p211 = scmp.eq.s32.totalorder %s28, 0
    %p212 = por %p210, %p211
    %s214 = sadd.s32 %s213, 1
    %p217 = scmp.eq.s32.totalorder %s22, 1
    %p218 = scmp.ne.s32.totalorder %s213, %s215
    %p219 = scmp.eq.s32.totalorder %s22, 0
    %p220 = por %p218, %p219
    %p221 = scmp.ne.s32.totalorder %s213, %s215
    %p222 = scmp.eq.s32.totalorder %s27, 1
    %p223 = por %p221, %p222
    %p224 = scmp.ne.s32.totalorder %s215, %s216
    %p225 = scmp.eq.s32.totalorder %s27, 0
    %p226 = por %p224, %p225
    %p227 = scmp.ne.s32.totalorder %s215, %s216
    %p228 = scmp.eq.s32.totalorder %s28, 1
    %p229 = por %p227, %p228
    %p231 = scmp.ne.s32.totalorder %s216, %s230
    %p232 = scmp.eq.s32.totalorder %s28, 0
    %p233 = por %p231, %p232
    %s235 = sadd.s32 %s234, 1
    %p238 = scmp.eq.s32.totalorder %s22, 1
    %p239 = scmp.ne.s32.totalorder %s234, %s236
    %p240 = scmp.eq.s32.totalorder %s22, 0
    %p241 = por %p239, %p240
    %p242 = scmp.ne.s32.totalorder %s234, %s236
    %p243 = scmp.eq.s32.totalorder %s27, 1
    %p244 = por %p242, %p243
    %p245 = scmp.ne.s32.totalorder %s236, %s237
    %p246 = scmp.eq.s32.totalorder %s27, 0
    %p247 = por %p245, %p246
    %p248 = scmp.ne.s32.totalorder %s236, %s237
    %p249 = scmp.eq.s32.totalorder %s28, 1
    %p250 = por %p248, %p249
    %p252 = scmp.ne.s32.totalorder %s237, %s251
    %p253 = scmp.eq.s32.totalorder %s28, 0
    %p254 = por %p252, %p253
    %s256 = sadd.s32 %s255, 1
    %p259 = scmp.eq.s32.totalorder %s22, 1
    %p260 = scmp.ne.s32.totalorder %s255, %s257
    %p261 = scmp.eq.s32.totalorder %s22, 0
    %p262 = por %p260, %p261
    %p263 = scmp.ne.s32.totalorder %s255, %s257
    %p264 = scmp.eq.s32.totalorder %s27, 1
    %p265 = por %p263, %p264
    %p266 = scmp.ne.s32.totalorder %s257, %s258
    %p267 = scmp.eq.s32.totalorder %s27, 0
    %p268 = por %p266, %p267
    %p269 = scmp.ne.s32.totalorder %s257, %s258
    %p270 = scmp.eq.s32.totalorder %s28, 1
    %p271 = por %p269, %p270
    %p273 = scmp.ne.s32.totalorder %s258, %s272
    %p274 = scmp.eq.s32.totalorder %s28, 0
    %p275 = por %p273, %p274
    %s277 = sadd.s32 %s276, 1
    %p280 = scmp.eq.s32.totalorder %s22, 1
    %p281 = scmp.ne.s32.totalorder %s276, %s278
    %p282 = scmp.eq.s32.totalorder %s22, 0
    %p283 = por %p281, %p282
    %p284 = scmp.ne.s32.totalorder %s276, %s278
    %p285 = scmp.eq.s32.totalorder %s27, 1
    %p286 = por %p284, %p285
    %p287 = scmp.ne.s32.totalorder %s278, %s279
    %p288 = scmp.eq.s32.totalorder %s27, 0
    %p289 = por %p287, %p288
    %p290 = scmp.ne.s32.totalorder %s278, %s279
    %p291 = scmp.eq.s32.totalorder %s28, 1
    %p292 = por %p290, %p291
    %p294 = scmp.ne.s32.totalorder %s279, %s293
    %p295 = scmp.eq.s32.totalorder %s28, 0
    %p296 = por %p294, %p295
    %s298 = sadd.s32 %s297, 1
    %p301 = scmp.eq.s32.totalorder %s22, 1
    %p302 = scmp.ne.s32.totalorder %s297, %s299
    %p303 = scmp.eq.s32.totalorder %s22, 0
    %p304 = por %p302, %p303
    %p305 = scmp.ne.s32.totalorder %s297, %s299
    %p306 = scmp.eq.s32.totalorder %s27, 1
    %p307 = por %p305, %p306
    %p308 = scmp.ne.s32.totalorder %s299, %s300
    %p309 = scmp.eq.s32.totalorder %s27, 0
    %p310 = por %p308, %p309
    %p311 = scmp.ne.s32.totalorder %s299, %s300
    %p312 = scmp.eq.s32.totalorder %s28, 1
    %p313 = por %p311, %p312
    %p315 = scmp.ne.s32.totalorder %s300, %s314
    %p316 = scmp.eq.s32.totalorder %s28, 0
    %p317 = por %p315, %p316
    %s319 = sadd.s32 %s318, 1
    %p322 = scmp.eq.s32.totalorder %s22, 1
    %p323 = scmp.ne.s32.totalorder %s318, %s320
    %p324 = scmp.eq.s32.totalorder %s22, 0
    %p325 = por %p323, %p324
    %p326 = scmp.ne.s32.totalorder %s318, %s320
    %p327 = scmp.eq.s32.totalorder %s27, 1
    %p328 = por %p326, %p327
    %p329 = scmp.ne.s32.totalorder %s320, %s321
    %p330 = scmp.eq.s32.totalorder %s27, 0
    %p331 = por %p329, %p330
    %p332 = scmp.ne.s32.totalorder %s320, %s321
    %p333 = scmp.eq.s32.totalorder %s28, 1
    %p334 = por %p332, %p333
    %p336 = scmp.ne.s32.totalorder %s321, %s335
    %p337 = scmp.eq.s32.totalorder %s28, 0
    %p338 = por %p336, %p337
    %s339 = ssub.s32 %s22, %s29
    %p340 = scmp.eq.s32.totalorder %s339, 0
    %s342 = sadd.s32 %s341, 1
    %s343 = scalar_select %p340, %s341, %s342
    %p346 = pneg %p340
    %p347 = scmp.eq.s32.totalorder %s22, 1
    %p348 = por %p346, %p347
    %p349 = scmp.ne.s32.totalorder %s341, %s344
    %p350 = scmp.eq.s32.totalorder %s22, 0
    %p351 = por %p349, %p350
    %p352 = scmp.ne.s32.totalorder %s341, %s344
    %p353 = scmp.eq.s32.totalorder %s27, 1
    %p354 = por %p352, %p353
    %p355 = scmp.ne.s32.totalorder %s344, %s345
    %p356 = scmp.eq.s32.totalorder %s27, 0
    %p357 = por %p355, %p356
    %p358 = scmp.ne.s32.totalorder %s344, %s345
    %p359 = scmp.eq.s32.totalorder %s28, 1
    %p360 = por %p358, %p359
    %p362 = scmp.ne.s32.totalorder %s345, %s361
    %p363 = scmp.eq.s32.totalorder %s28, 0
    %p364 = por %p362, %p363
    %s365 = ssub.s32 %s22, %s29
    %p366 = scmp.eq.s32.totalorder %s365, 0
    %s368 = sadd.s32 %s367, 1
    %s369 = scalar_select %p366, %s367, %s368
    %p372 = pneg %p366
    %p373 = scmp.eq.s32.totalorder %s22, 1
    %p374 = por %p372, %p373
    %p375 = scmp.ne.s32.totalorder %s367, %s370
    %p376 = scmp.eq.s32.totalorder %s22, 0
    %p377 = por %p375, %p376
    %p378 = scmp.ne.s32.totalorder %s367, %s370
    %p379 = scmp.eq.s32.totalorder %s27, 1
    %p380 = por %p378, %p379
    %p381 = scmp.ne.s32.totalorder %s370, %s371
    %p382 = scmp.eq.s32.totalorder %s27, 0
    %p383 = por %p381, %p382
    %p384 = scmp.ne.s32.totalorder %s370, %s371
    %p385 = scmp.eq.s32.totalorder %s28, 1
    %p386 = por %p384, %p385
    %p388 = scmp.ne.s32.totalorder %s371, %s387
    %p389 = scmp.eq.s32.totalorder %s28, 0
    %p390 = por %p388, %p389
    %p391 = scmp.le.s32.totalorder 1, %s22
    %p392 = scmp.lt.s32.totalorder %s22, 3
    %p393 = pnand %p391, %p392
    %p394 = pneg %p393
    // Predicated region
    $region9: #{_forward_impl.4} parent=5 // pred_check
      _
    $region10: #{_forward_impl.4} parent=5 // pred_check_branch
      %396 = sbr.rel (%p393) target = $region12
    $region11: #{_forward_impl.4} parent=5 // pred_region
      %s397 = ssub.s32 %s22, 1
      // Predicated region
      $region13: #{_forward_impl.4} parent=11 // pred_check
        %p398 = pneg %p121
      $region14: #{_forward_impl.4} parent=11 // pred_check_branch
        %400 = sbr.rel (%p398) target = $region16
      $region15: #{_forward_impl.4} parent=11 // pred_region
        _
      $region16: #{_forward_impl.4} parent=11 // pred_fallthru
        _
      // Predicated region
      $region17: #{_forward_impl.4} parent=11 // pred_check
        %p401 = pneg %p142
      $region18: #{_forward_impl.4} parent=11 // pred_check_branch
        %403 = sbr.rel (%p401) target = $region20
      $region19: #{_forward_impl.4} parent=11 // pred_region
        _
      $region20: #{_forward_impl.4} parent=11 // pred_fallthru
        _
      // Predicated region
      $region21: #{_forward_impl.4} parent=11 // pred_check
        %p404 = pneg %p163
      $region22: #{_forward_impl.4} parent=11 // pred_check_branch
        %406 = sbr.rel (%p404) target = $region24
      $region23: #{_forward_impl.4} parent=11 // pred_region
        _
      $region24: #{_forward_impl.4} parent=11 // pred_fallthru
        _
      // Predicated region
      $region25: #{_forward_impl.4} parent=11 // pred_check
        %p407 = pneg %p184
      $region26: #{_forward_impl.4} parent=11 // pred_check_branch
        %409 = sbr.rel (%p407) target = $region28
      $region27: #{_forward_impl.4} parent=11 // pred_region
        _
      $region28: #{_forward_impl.4} parent=11 // pred_fallthru
        _
      // Predicated region
      $region29: #{_forward_impl.4} parent=11 // pred_check
        %p410 = pneg %p205
      $region30: #{_forward_impl.4} parent=11 // pred_check_branch
        %412 = sbr.rel (%p410) target = $region32
      $region31: #{_forward_impl.4} parent=11 // pred_region
        _
      $region32: #{_forward_impl.4} parent=11 // pred_fallthru
        _
      // Predicated region
      $region33: #{_forward_impl.4} parent=11 // pred_check
        %p413 = pneg %p226
      $region34: #{_forward_impl.4} parent=11 // pred_check_branch
        %415 = sbr.rel (%p413) target = $region36
      $region35: #{_forward_impl.4} parent=11 // pred_region
        _
      $region36: #{_forward_impl.4} parent=11 // pred_fallthru
        _
      // Predicated region
      $region37: #{_forward_impl.4} parent=11 // pred_check
        %p416 = pneg %p247
      $region38: #{_forward_impl.4} parent=11 // pred_check_branch
        %418 = sbr.rel (%p416) target = $region40
      $region39: #{_forward_impl.4} parent=11 // pred_region
        _
      $region40: #{_forward_impl.4} parent=11 // pred_fallthru
        _
      // Predicated region
      $region41: #{_forward_impl.4} parent=11 // pred_check
        %p419 = pneg %p268
      $region42: #{_forward_impl.4} parent=11 // pred_check_branch
        %421 = sbr.rel (%p419) target = $region44
      $region43: #{_forward_impl.4} parent=11 // pred_region
        _
      $region44: #{_forward_impl.4} parent=11 // pred_fallthru
        _
      // Predicated region
      $region45: #{_forward_impl.4} parent=11 // pred_check
        %p422 = pneg %p289
      $region46: #{_forward_impl.4} parent=11 // pred_check_branch
        %424 = sbr.rel (%p422) target = $region48
      $region47: #{_forward_impl.4} parent=11 // pred_region
        _
      $region48: #{_forward_impl.4} parent=11 // pred_fallthru
        _
      // Predicated region
      $region49: #{_forward_impl.4} parent=11 // pred_check
        %p425 = pneg %p310
      $region50: #{_forward_impl.4} parent=11 // pred_check_branch
        %427 = sbr.rel (%p425) target = $region52
      $region51: #{_forward_impl.4} parent=11 // pred_region
        _
      $region52: #{_forward_impl.4} parent=11 // pred_fallthru
        _
      // Predicated region
      $region53: #{_forward_impl.4} parent=11 // pred_check
        %p428 = pneg %p331
      $region54: #{_forward_impl.4} parent=11 // pred_check_branch
        %430 = sbr.rel (%p428) target = $region56
      $region55: #{_forward_impl.4} parent=11 // pred_region
        _
      $region56: #{_forward_impl.4} parent=11 // pred_fallthru
        _
    $region12: #{_forward_impl.4} parent=5 // pred_fallthru
      _
    %p431 = scmp.lt.s32.totalorder %s22, 2
    // Predicated region
    $region57: #{_forward_impl.4} parent=5 // pred_check
      %p432 = pneg %p431
    $region58: #{_forward_impl.4} parent=5 // pred_check_branch
      %434 = sbr.rel (%p432) target = $region60
    $region59: #{_forward_impl.4} parent=5 // pred_region
      // Predicated region
      $region61: #{_forward_impl.4} parent=59 // pred_check
        %p435 = pneg %p42
      $region62: #{_forward_impl.4} parent=59 // pred_check_branch
        %437 = sbr.rel (%p435) target = $region64
      $region63: #{_forward_impl.4} parent=59 // pred_region
        %p438 = scmp.lt.s32.totalorder %s22, 1
        %s439 = scalar_select %p438, %s22, 1
        %s440 = smul.addr %s439, 2
        %s441 = smul.addr %s440, 8
        %s442 = scalar_lea.vmem %s0, %s441
      $region64: #{_forward_impl.4} parent=59 // pred_fallthru
        _
      // Predicated region
      $region65: #{_forward_impl.4} parent=59 // pred_check
        %p443 = pneg %p68
      $region66: #{_forward_impl.4} parent=59 // pred_check_branch
        %445 = sbr.rel (%p443) target = $region68
      $region67: #{_forward_impl.4} parent=59 // pred_region
        %p446 = scmp.lt.s32.totalorder %s22, 1
        %s447 = scalar_select %p446, %s22, 1
        %s448 = smul.addr %s447, 2
        %s449 = smul.addr %s448, 8
        %s450 = scalar_lea.vmem %s1, %s449
      $region68: #{_forward_impl.4} parent=59 // pred_fallthru
        _
      // Predicated region
      $region69: #{_forward_impl.4} parent=59 // pred_check
        %p451 = pneg %p94
      $region70: #{_forward_impl.4} parent=59 // pred_check_branch
        %453 = sbr.rel (%p451) target = $region72
      $region71: #{_forward_impl.4} parent=59 // pred_region
        %p454 = scmp.lt.s32.totalorder %s22, 1
        %s455 = scalar_select %p454, %s22, 1
        %s456 = smul.addr %s455, 11
        %s457 = smul.addr %s456, 8
        %s458 = scalar_lea.vmem %s2, %s457
      $region72: #{_forward_impl.4} parent=59 // pred_fallthru
        _
    $region60: #{_forward_impl.4} parent=5 // pred_fallthru
      _
    %p459 = scmp.le.s32.totalorder 1, %s22
    %p460 = scmp.lt.s32.totalorder %s22, 3
    %p461 = pnand %p459, %p460
    %p462 = pneg %p461
    // Predicated region
    $region73: #{_forward_impl.4} parent=5 // pred_check
      _
    $region74: #{_forward_impl.4} parent=5 // pred_check_branch
      %464 = sbr.rel (%p461) target = $region76
    $region75: #{_forward_impl.4} parent=5 // pred_region
      %s465 = ssub.s32 %s22, 1
      %p466 = scmp.lt.s32.totalorder %s27, 1
      %s467 = scalar_select %p466, %s27, 1
      %s468 = smul.addr %s467, 2
      %s469 = smul.addr %s468, 8
      %s470 = scalar_lea.vmem %s0, %s469
      %p471 = pneg %p48
      %p472 = pneg %p45
      %p473 = scmp.lt.s32.totalorder %s27, 1
      %s474 = scalar_select %p473, %s27, 1
      %s475 = smul.addr %s474, 2
      %s476 = smul.addr %s475, 8
      %s477 = scalar_lea.vmem %s1, %s476
      %p478 = pneg %p74
      %p479 = pneg %p71
      %p480 = scmp.lt.s32.totalorder %s27, 1
      %s481 = scalar_select %p480, %s27, 1
      %s482 = smul.addr %s481, 11
      %s483 = smul.addr %s482, 8
      %s484 = scalar_lea.vmem %s2, %s483
      %p485 = pneg %p100
      %p486 = pneg %p97
      %p487 = pneg %p121
      %p488 = pneg %p118
      %p489 = pneg %p142
      %p490 = pneg %p139
      %p491 = pneg %p163
      %p492 = pneg %p160
      %p493 = pneg %p184
      %p494 = pneg %p181
      %p495 = pneg %p205
      %p496 = pneg %p202
      %p497 = pneg %p226
      %p498 = pneg %p223
      %p499 = pneg %p247
      %p500 = pneg %p244
      %p501 = pneg %p268
      %p502 = pneg %p265
      %p503 = pneg %p289
      %p504 = pneg %p286
      %p505 = pneg %p310
      %p506 = pneg %p307
      %p507 = pneg %p331
      %p508 = pneg %p328
      %p509 = pneg %p357
      %p510 = pneg %p354
      %p511 = scmp.lt.s32.totalorder %s27, 1
      %s512 = scalar_select %p511, %s27, 1
      %s513 = smul.addr %s512, 2
      %s514 = smul.addr %s513, 8
      %s515 = scalar_lea.vmem %s14, %s514
      %p516 = pneg %p383
      %p517 = pneg %p380
      %p518 = scmp.lt.s32.totalorder %s27, 1
      %s519 = scalar_select %p518, %s27, 1
      %s520 = smul.addr %s519, 11
      %s521 = smul.addr %s520, 8
      %s522 = scalar_lea.vmem %s15, %s521
      %p523 = scmp.lt.s32.totalorder %s27, 1
      %s524 = scalar_select %p523, %s27, 1
      %s525 = smul.addr %s524, 2
      %s526 = smul.addr %s525, 8
      %s527 = scalar_lea.vmem %s0, %s526
      %p528 = scmp.lt.s32.totalorder %s27, 1
      %s529 = scalar_select %p528, %s27, 1
      %s530 = smul.addr %s529, 2
      %s531 = smul.addr %s530, 8
      %s532 = scalar_lea.vmem %s1, %s531
      %p533 = scmp.lt.s32.totalorder %s27, 1
      %s534 = scalar_select %p533, %s27, 1
      %s535 = smul.addr %s534, 11
      %s536 = smul.addr %s535, 8
      %s537 = scalar_lea.vmem %s2, %s536
      %p538 = scmp.lt.s32.totalorder %s27, 1
      %s539 = scalar_select %p538, %s27, 1
      %s540 = smul.addr %s539, 2
      %s541 = smul.addr %s540, 8
      %s542 = scalar_lea.vmem %s14, %s541
      %p543 = scmp.lt.s32.totalorder %s27, 1
      %s544 = scalar_select %p543, %s27, 1
      %s545 = smul.addr %s544, 11
      %s546 = smul.addr %s545, 8
      %s547 = scalar_lea.vmem %s15, %s546
      %v549 = vld [vmem:[%s527] sm:$0xff]
      %v550 = vld [vmem:[%s527 + $0x8] sm:$0x1]
      %v551 = vld [vmem:[%s532] sm:$0xff]
      %v552 = vld [vmem:[%s532 + $0x8] sm:$0x1]
      %v553 = vld [vmem:[%s3] sm:$0x7]
      %v554 = vpack.c.bf16 %v552, %v551
      %v555 = vpack.c.bf16 %v553, %v553
      %v556 = vld [vmem:[%s4] sm:$0x1]
      %v558 = vlaneseq
      %v559 = vshrl.u32 %v558, 7
      %v560 = vsub.s32 0, %v559
      %v561 = vrot.slane %v556, %v560
      %vm563 = vcmask 23552
      %v565 = vsel %vm563, %v554, 0
      %vm567 = vcmask 1040384
      %vm568 = vcmask 1041408
      %v569 = vsel %vm567, 4294967295, 65535
      %v570 = vsel %vm568, %v569, 0
      %v572 = vand.u32 %v555, %v570
      %574 = vmatprep.subr.bf16.mxu0 0
      %575 = vmatpush1.bf16.msra.mxu0 0
      %576 = vmatprep.subr.bf16.mxu0 0
      %577 = vmatpush1.bf16.msra.mxu0 0
      %578 = vmatprep.subr.bf16.mxu0 0
      %579 = vmatpush1.bf16.msra.mxu0 0
      %580 = vmatprep.subr.bf16.mxu0 0
      %581 = vmatpush1.bf16.msra.mxu0 0
      %582 = vmatprep.subr.bf16.mxu0 0
      %583 = vmatpush1.bf16.msra.mxu0 0
      %584 = vmatprep.subr.bf16.mxu0 0
      %585 = vmatpush1.bf16.msra.mxu0 0
      %586 = vmatprep.subr.bf16.mxu0 0
      %587 = vmatpush1.bf16.msra.mxu0 0
      %588 = vmatprep.subr.bf16.mxu0 0
      %589 = vmatpush1.bf16.msra.mxu0 %v572
      %590 = vmatprep.subr.bf16.mxu0 0
      %591 = vmatpush2.bf16.msra.mxu0 0
      %592 = vmatprep.subr.bf16.mxu0 0
      %593 = vmatpush2.bf16.msra.mxu0 0
      %594 = vmatprep.subr.bf16.mxu0 0
      %595 = vmatpush2.bf16.msra.mxu0 0
      %596 = vmatprep.subr.bf16.mxu0 0
      %597 = vmatpush2.bf16.msra.mxu0 0
      %598 = vmatprep.subr.bf16.mxu0 0
      %599 = vmatpush2.bf16.msra.mxu0 0
      %600 = vmatprep.subr.bf16.mxu0 0
      %601 = vmatpush2.bf16.msra.mxu0 0
      %602 = vmatprep.subr.bf16.mxu0 0
      %603 = vmatpush2.bf16.msra.mxu0 0
      %604 = vmatprep.subr.bf16.mxu0 0
      %605 = vmatpush2.bf16.msra.mxu0 0
      %606 = vmatprep.mubr.bf16.mxu0 0
      %607 = vmatmul.mubr.bf16.gmra.mxu0 %v565
      %v608 = vpop.f32.mrf.mxu0
      %v609 = vadd.f32 %v561, %v608
      %v610 = vpop.f32.mrf.mxu0
      %v611 = vpop.f32.mrf.mxu0
      %v612 = vadd.f32 %v561, %v611
      %v613 = vpop.f32.mrf.mxu0
      %614 = vdwg.mxu0
      %v615 = vmax.f32 %v609, 0.0
      %v616 = vmax.f32 %v612, 0.0
      %v617 = vld [vmem:[%s537] sm:$0xff]
      %v618 = vld [vmem:[%s537 + $0x8] sm:$0xff]
      %v619 = vld [vmem:[%s537 + $0x10] sm:$0xff]
      %v620 = vld [vmem:[%s537 + $0x18] sm:$0xff]
      %v621 = vld [vmem:[%s537 + $0x20] sm:$0xff]
      %v622 = vld [vmem:[%s537 + $0x28] sm:$0xff]
      %v623 = vld [vmem:[%s537 + $0x30] sm:$0xff]
      %v624 = vld [vmem:[%s537 + $0x38] sm:$0xff]
      %v625 = vld [vmem:[%s537 + $0x40] sm:$0xff]
      %v626 = vld [vmem:[%s537 + $0x48] sm:$0xff]
      %v627 = vld [vmem:[%s537 + $0x50] sm:$0x1]
      %v628 = vld [vmem:[%s5] sm:$0x3]
      %v629 = vpack.c.bf16 %v618, %v617
      %v630 = vpack.c.bf16 %v620, %v619
      %v631 = vpack.c.bf16 %v622, %v621
      %v632 = vpack.c.bf16 %v624, %v623
      %v633 = vpack.c.bf16 %v626, %v625
      %v634 = vpack.c.bf16 %v627, %v627
      %v635 = vpack.c.bf16 %v628, %v628
      %v636 = vld [vmem:[%s6] sm:$0x1]
      %v638 = vlaneseq
      %v639 = vshrl.u32 %v638, 7
      %v640 = vsub.s32 0, %v639
      %v641 = vrot.slane %v636, %v640
      %vm643 = vcmask 15360
      %v645 = vsel %vm643, %v629, 0
      %v648 = vsel %vm643, %v630, 0
      %v651 = vsel %vm643, %v631, 0
      %v654 = vsel %vm643, %v632, 0
      %v657 = vsel %vm643, %v633, 0
      %v660 = vsel %vm643, %v634, 0
      %v663 = vsel %vm567, %v635, 0
      %665 = vmatprep.subr.bf16.mxu0 0
      %666 = vmatpush1.bf16.msra.mxu0 0
      %667 = vmatprep.subr.bf16.mxu0 0
      %668 = vmatpush1.bf16.msra.mxu0 0
      %669 = vmatprep.subr.bf16.mxu0 0
      %670 = vmatpush1.bf16.msra.mxu0 0
      %671 = vmatprep.subr.bf16.mxu0 0
      %672 = vmatpush1.bf16.msra.mxu0 0
      %673 = vmatprep.subr.bf16.mxu0 0
      %674 = vmatpush1.bf16.msra.mxu0 0
      %675 = vmatprep.subr.bf16.mxu0 0
      %676 = vmatpush1.bf16.msra.mxu0 0
      %677 = vmatprep.subr.bf16.mxu0 0
      %678 = vmatpush1.bf16.msra.mxu0 0
      %679 = vmatprep.subr.bf16.mxu0 0
      %680 = vmatpush1.bf16.msra.mxu0 %v663
      %681 = vmatprep.subr.bf16.mxu0 0
      %682 = vmatpush2.bf16.msra.mxu0 0
      %683 = vmatprep.subr.bf16.mxu0 0
      %684 = vmatpush2.bf16.msra.mxu0 0
      %685 = vmatprep.subr.bf16.mxu0 0
      %686 = vmatpush2.bf16.msra.mxu0 0
      %687 = vmatprep.subr.bf16.mxu0 0
      %688 = vmatpush2.bf16.msra.mxu0 0
      %689 = vmatprep.subr.bf16.mxu0 0
      %690 = vmatpush2.bf16.msra.mxu0 0
      %691 = vmatprep.subr.bf16.mxu0 0
      %692 = vmatpush2.bf16.msra.mxu0 0
      %693 = vmatprep.subr.bf16.mxu0 0
      %694 = vmatpush2.bf16.msra.mxu0 0
      %695 = vmatprep.subr.bf16.mxu0 0
      %696 = vmatpush2.bf16.msra.mxu0 0
      %697 = vmatprep.mubr.bf16.mxu0 0
      %698 = vmatmul.mubr.bf16.gmra.mxu0 %v645
      %v699 = vpop.f32.mrf.mxu0
      %v700 = vadd.f32 %v641, %v699
      %v701 = vpop.f32.mrf.mxu0
      %v702 = vpop.f32.mrf.mxu0
      %v703 = vadd.f32 %v641, %v702
      %v704 = vpop.f32.mrf.mxu0
      %705 = vmatprep.mubr.bf16.mxu0 0
      %706 = vmatmul.mubr.bf16.gmra.mxu0 %v648
      %v707 = vpop.f32.mrf.mxu0
      %v708 = vadd.f32 %v641, %v707
      %v709 = vpop.f32.mrf.mxu0
      %v710 = vpop.f32.mrf.mxu0
      %v711 = vadd.f32 %v641, %v710
      %v712 = vpop.f32.mrf.mxu0
      %713 = vmatprep.mubr.bf16.mxu0 0
      %714 = vmatmul.mubr.bf16.gmra.mxu0 %v651
      %v715 = vpop.f32.mrf.mxu0
      %v716 = vadd.f32 %v641, %v715
      %v717 = vpop.f32.mrf.mxu0
      %v718 = vpop.f32.mrf.mxu0
      %v719 = vadd.f32 %v641, %v718
      %v720 = vpop.f32.mrf.mxu0
      %721 = vmatprep.mubr.bf16.mxu0 0
      %722 = vmatmul.mubr.bf16.gmra.mxu0 %v654
      %v723 = vpop.f32.mrf.mxu0
      %v724 = vadd.f32 %v641, %v723
      %v725 = vpop.f32.mrf.mxu0
      %v726 = vpop.f32.mrf.mxu0
      %v727 = vadd.f32 %v641, %v726
      %v728 = vpop.f32.mrf.mxu0
      %729 = vmatprep.mubr.bf16.mxu0 0
      %730 = vmatmul.mubr.bf16.gmra.mxu0 %v657
      %v731 = vpop.f32.mrf.mxu0
      %v732 = vadd.f32 %v641, %v731
      %v733 = vpop.f32.mrf.mxu0
      %v734 = vpop.f32.mrf.mxu0
      %v735 = vadd.f32 %v641, %v734
      %v736 = vpop.f32.mrf.mxu0
      %737 = vmatprep.mubr.bf16.mxu0 0
      %738 = vmatmul.mubr.bf16.gmra.mxu0 %v660
      %v739 = vpop.f32.mrf.mxu0
      %v740 = vadd.f32 %v641, %v739
      %v741 = vpop.f32.mrf.mxu0
      %v742 = vpop.f32.mrf.mxu0
      %v743 = vpop.f32.mrf.mxu0
      %744 = vdwg.mxu0
      %v745 = vmax.f32 %v700, 0.0
      %v746 = vmax.f32 %v703, 0.0
      %v747 = vmax.f32 %v708, 0.0
      %v748 = vmax.f32 %v711, 0.0
      %v749 = vmax.f32 %v716, 0.0
      %v750 = vmax.f32 %v719, 0.0
      %v751 = vmax.f32 %v724, 0.0
      %v752 = vmax.f32 %v727, 0.0
      %v753 = vmax.f32 %v732, 0.0
      %v754 = vmax.f32 %v735, 0.0
      %v755 = vmax.f32 %v740, 0.0
      %v756 = vpack.c.bf16 %v550, %v549
      %v757 = vpack.c.bf16 %v616, %v615
      %vm758 = vcmask 72704
      %v760 = vsel %vm758, %v756, 0
      %vm762 = vcmask 1043456
      %vm763 = vcmask 1044480
      %v764 = vsel %vm762, 4294967295, 65535
      %v765 = vsel %vm763, %v764, 0
      %v767 = vand.u32 %v757, %v765
      %769 = vmatprep.subr.bf16.mxu0 0
      %770 = vmatpush1.bf16.msra.mxu0 0
      %771 = vmatprep.subr.bf16.mxu0 0
      %772 = vmatpush1.bf16.msra.mxu0 0
      %773 = vmatprep.subr.bf16.mxu0 0
      %774 = vmatpush1.bf16.msra.mxu0 0
      %775 = vmatprep.subr.bf16.mxu0 0
      %776 = vmatpush1.bf16.msra.mxu0 0
      %777 = vmatprep.subr.bf16.mxu0 0
      %778 = vmatpush1.bf16.msra.mxu0 0
      %779 = vmatprep.subr.bf16.mxu0 0
      %780 = vmatpush1.bf16.msra.mxu0 0
      %781 = vmatprep.subr.bf16.mxu0 0
      %782 = vmatpush1.bf16.msra.mxu0 0
      %783 = vmatprep.subr.bf16.mxu0 0
      %784 = vmatpush1.bf16.msra.mxu0 %v767
      %785 = vmatprep.subr.bf16.mxu0 0
      %786 = vmatpush2.bf16.msra.mxu0 0
      %787 = vmatprep.subr.bf16.mxu0 0
      %788 = vmatpush2.bf16.msra.mxu0 0
      %789 = vmatprep.subr.bf16.mxu0 0
      %790 = vmatpush2.bf16.msra.mxu0 0
      %791 = vmatprep.subr.bf16.mxu0 0
      %792 = vmatpush2.bf16.msra.mxu0 0
      %793 = vmatprep.subr.bf16.mxu0 0
      %794 = vmatpush2.bf16.msra.mxu0 0
      %795 = vmatprep.subr.bf16.mxu0 0
      %796 = vmatpush2.bf16.msra.mxu0 0
      %797 = vmatprep.subr.bf16.mxu0 0
      %798 = vmatpush2.bf16.msra.mxu0 0
      %799 = vmatprep.subr.bf16.mxu0 0
      %800 = vmatpush2.bf16.msra.mxu0 0
      %801 = vmatprep.mubr.bf16.mxu0 0
      %802 = vmatmul.mubr.bf16.gmra.mxu0 %v760
      %v803 = vpop.f32.mrf.mxu0
      %v804 = vadd.f32 0.0, %v803
      %v805 = vpop.f32.mrf.mxu0
      %v806 = vpop.f32.mrf.mxu0
      %v807 = vadd.f32 0.0, %v806
      %v808 = vpop.f32.mrf.mxu0
      %809 = vdwg.mxu0
      %v810 = vld [vmem:[%s8] sm:$0xff]
      %v811 = vld [vmem:[%s8 + $0x8] sm:$0xff]
      %v812 = vld [vmem:[%s8 + $0x10] sm:$0xff]
      %v813 = vld [vmem:[%s8 + $0x18] sm:$0xff]
      %v814 = vpack.c.bf16 %v811, %v810
      %v815 = vpack.c.bf16 %v813, %v812
      %v816 = vld [vmem:[%s9] sm:$0xff]
      %v817 = vld [vmem:[%s9 + $0x8] sm:$0xff]
      %v818 = vld [vmem:[%s9 + $0x10] sm:$0xff]
      %v819 = vld [vmem:[%s9 + $0x18] sm:$0xff]
      %v820 = vpack.c.bf16 %v807, %v804
      %v821 = vpack.c.bf16 %v817, %v816
      %v822 = vpack.c.bf16 %v819, %v818
      %vm823 = vcmask 261120
      %v825 = vsel %vm823, %v820, 0
      %827 = vmatprep.subr.bf16.mxu0 0
      %828 = vmatpush1.bf16.msra.mxu0 0
      %829 = vmatprep.subr.bf16.mxu0 0
      %830 = vmatpush1.bf16.msra.mxu0 0
      %831 = vmatprep.subr.bf16.mxu0 0
      %832 = vmatpush1.bf16.msra.mxu0 0
      %833 = vmatprep.subr.bf16.mxu0 0
      %834 = vmatpush1.bf16.msra.mxu0 0
      %835 = vmatprep.subr.bf16.mxu0 0
      %836 = vmatpush1.bf16.msra.mxu0 0
      %837 = vmatprep.subr.bf16.mxu0 0
      %838 = vmatpush1.bf16.msra.mxu0 0
      %839 = vmatprep.subr.bf16.mxu0 0
      %840 = vmatpush1.bf16.msra.mxu0 %v822
      %841 = vmatprep.subr.bf16.mxu0 0
      %842 = vmatpush1.bf16.msra.mxu0 %v821
      %843 = vmatprep.subr.bf16.mxu0 0
      %844 = vmatpush2.bf16.msra.mxu0 0
      %845 = vmatprep.subr.bf16.mxu0 0
      %846 = vmatpush2.bf16.msra.mxu0 0
      %847 = vmatprep.subr.bf16.mxu0 0
      %848 = vmatpush2.bf16.msra.mxu0 0
      %849 = vmatprep.subr.bf16.mxu0 0
      %850 = vmatpush2.bf16.msra.mxu0 0
      %851 = vmatprep.subr.bf16.mxu0 0
      %852 = vmatpush2.bf16.msra.mxu0 0
      %853 = vmatprep.subr.bf16.mxu0 0
      %854 = vmatpush2.bf16.msra.mxu0 0
      %855 = vmatprep.subr.bf16.mxu0 0
      %856 = vmatpush2.bf16.msra.mxu0 0
      %857 = vmatprep.subr.bf16.mxu0 0
      %858 = vmatpush2.bf16.msra.mxu0 0
      %859 = vmatprep.mubr.bf16.mxu0 0
      %860 = vmatmul.mubr.bf16.gmra.mxu0 %v825
      %v861 = vpop.f32.mrf.mxu0
      %v862 = vadd.f32 0.0, %v861
      %v863 = vpop.f32.mrf.mxu0
      %v864 = vpop.f32.mrf.mxu0
      %v865 = vadd.f32 0.0, %v864
      %v866 = vpop.f32.mrf.mxu0
      %867 = vdwg.mxu0
      %v868 = vsel %vm823, %v757, 0
      %870 = vmatprep.subr.bf16.mxu0 0
      %871 = vmatpush1.bf16.msra.mxu0 0
      %872 = vmatprep.subr.bf16.mxu0 0
      %873 = vmatpush1.bf16.msra.mxu0 0
      %874 = vmatprep.subr.bf16.mxu0 0
      %875 = vmatpush1.bf16.msra.mxu0 0
      %876 = vmatprep.subr.bf16.mxu0 0
      %877 = vmatpush1.bf16.msra.mxu0 0
      %878 = vmatprep.subr.bf16.mxu0 0
      %879 = vmatpush1.bf16.msra.mxu0 0
      %880 = vmatprep.subr.bf16.mxu0 0
      %881 = vmatpush1.bf16.msra.mxu0 0
      %882 = vmatprep.subr.bf16.mxu0 0
      %883 = vmatpush1.bf16.msra.mxu0 %v815
      %884 = vmatprep.subr.bf16.mxu0 0
      %885 = vmatpush1.bf16.msra.mxu0 %v814
      %886 = vmatprep.subr.bf16.mxu0 0
      %887 = vmatpush2.bf16.msra.mxu0 0
      %888 = vmatprep.subr.bf16.mxu0 0
      %889 = vmatpush2.bf16.msra.mxu0 0
      %890 = vmatprep.subr.bf16.mxu0 0
      %891 = vmatpush2.bf16.msra.mxu0 0
      %892 = vmatprep.subr.bf16.mxu0 0
      %893 = vmatpush2.bf16.msra.mxu0 0
      %894 = vmatprep.subr.bf16.mxu0 0
      %895 = vmatpush2.bf16.msra.mxu0 0
      %896 = vmatprep.subr.bf16.mxu0 0
      %897 = vmatpush2.bf16.msra.mxu0 0
      %898 = vmatprep.subr.bf16.mxu0 0
      %899 = vmatpush2.bf16.msra.mxu0 0
      %900 = vmatprep.subr.bf16.mxu0 0
      %901 = vmatpush2.bf16.msra.mxu0 0
      %902 = vmatprep.mubr.bf16.mxu0 0
      %903 = vmatmul.mubr.bf16.gmra.mxu0 %v868
      %v904 = vpop.f32.mrf.mxu0
      %v905 = vadd.f32 %v862, %v904
      %v906 = vpop.f32.mrf.mxu0
      %v907 = vpop.f32.mrf.mxu0
      %v908 = vadd.f32 %v865, %v907
      %v909 = vpop.f32.mrf.mxu0
      %910 = vdwg.mxu0
      %v911 = vld [vmem:[%s10] sm:$0x1]
      %v913 = vlaneseq
      %v914 = vshrl.u32 %v913, 7
      %v915 = vsub.s32 0, %v914
      %v916 = vrot.slane %v911, %v915
      %v918 = vadd.f32 %v905, %v916
      %v919 = vadd.f32 %v908, %v916
      %v920 = vmax.f32 %v918, 0.0
      %v921 = vmax.f32 %v919, 0.0
      %v922 = vadd.f32 %v615, %v920
      %v923 = vadd.f32 %v616, %v921
      %924 = vst.msk [vmem:[%s542] sm:$0xff] %vm823, %v922
      %vm925 = vcmask 253952
      %926 = vst.msk [vmem:[%s542 + $0x8] sm:$0x1] %vm925, %v923
      %v927 = vld [vmem:[%s12] sm:$0xff]
      %v928 = vld [vmem:[%s12 + $0x8] sm:$0xff]
      %v929 = vld [vmem:[%s12 + $0x10] sm:$0xff]
      %v930 = vld [vmem:[%s12 + $0x18] sm:$0xff]
      %v931 = vpack.c.bf16 %v923, %v922
      %v932 = vpack.c.bf16 %v928, %v927
      %v933 = vpack.c.bf16 %v930, %v929
      %v935 = vsel %vm823, %v931, 0
      %937 = vmatprep.subr.bf16.mxu0 0
      %938 = vmatpush1.bf16.msra.mxu0 0
      %939 = vmatprep.subr.bf16.mxu0 0
      %940 = vmatpush1.bf16.msra.mxu0 0
      %941 = vmatprep.subr.bf16.mxu0 0
      %942 = vmatpush1.bf16.msra.mxu0 0
      %943 = vmatprep.subr.bf16.mxu0 0
      %944 = vmatpush1.bf16.msra.mxu0 0
      %945 = vmatprep.subr.bf16.mxu0 0
      %946 = vmatpush1.bf16.msra.mxu0 0
      %947 = vmatprep.subr.bf16.mxu0 0
      %948 = vmatpush1.bf16.msra.mxu0 0
      %949 = vmatprep.subr.bf16.mxu0 0
      %950 = vmatpush1.bf16.msra.mxu0 %v933
      %951 = vmatprep.subr.bf16.mxu0 0
      %952 = vmatpush1.bf16.msra.mxu0 %v932
      %953 = vmatprep.subr.bf16.mxu0 0
      %954 = vmatpush2.bf16.msra.mxu0 0
      %955 = vmatprep.subr.bf16.mxu0 0
      %956 = vmatpush2.bf16.msra.mxu0 0
      %957 = vmatprep.subr.bf16.mxu0 0
      %958 = vmatpush2.bf16.msra.mxu0 0
      %959 = vmatprep.subr.bf16.mxu0 0
      %960 = vmatpush2.bf16.msra.mxu0 0
      %961 = vmatprep.subr.bf16.mxu0 0
      %962 = vmatpush2.bf16.msra.mxu0 0
      %963 = vmatprep.subr.bf16.mxu0 0
      %964 = vmatpush2.bf16.msra.mxu0 0
      %965 = vmatprep.subr.bf16.mxu0 0
      %966 = vmatpush2.bf16.msra.mxu0 0
      %967 = vmatprep.subr.bf16.mxu0 0
      %968 = vmatpush2.bf16.msra.mxu0 0
      %969 = vmatprep.mubr.bf16.mxu0 0
      %970 = vmatmul.mubr.bf16.gmra.mxu0 %v935
      %v971 = vpop.f32.mrf.mxu0
      %v972 = vadd.f32 0.0, %v971
      %v973 = vpop.f32.mrf.mxu0
      %v974 = vpop.f32.mrf.mxu0
      %v975 = vadd.f32 0.0, %v974
      %v976 = vpop.f32.mrf.mxu0
      %977 = vdwg.mxu0
      %v978 = vld [vmem:[%s7] sm:$0xff]
      %v979 = vld [vmem:[%s7 + $0x8] sm:$0xff]
      %v980 = vld [vmem:[%s7 + $0x10] sm:$0xff]
      %v981 = vld [vmem:[%s7 + $0x18] sm:$0xff]
      %v982 = vld [vmem:[%s7 + $0x20] sm:$0xff]
      %v983 = vld [vmem:[%s7 + $0x28] sm:$0xff]
      %v984 = vld [vmem:[%s7 + $0x30] sm:$0xff]
      %v985 = vld [vmem:[%s7 + $0x38] sm:$0xff]
      %v986 = vld [vmem:[%s7 + $0x40] sm:$0xff]
      %v987 = vld [vmem:[%s7 + $0x48] sm:$0xff]
      %v988 = vld [vmem:[%s7 + $0x50] sm:$0x1]
      %v989 = vpack.c.bf16 %v979, %v978
      %v990 = vpack.c.bf16 %v981, %v980
      %v991 = vpack.c.bf16 %v983, %v982
      %v992 = vpack.c.bf16 %v985, %v984
      %v993 = vpack.c.bf16 %v987, %v986
      %v994 = vpack.c.bf16 %v988, %v988
      %v995 = vpack.c.bf16 %v975, %v972
      %v997 = vsel %vm758, %v989, 0
      %v1000 = vsel %vm758, %v990, 0
      %v1003 = vsel %vm758, %v991, 0
      %v1006 = vsel %vm758, %v992, 0
      %v1009 = vsel %vm758, %v993, 0
      %v1012 = vsel %vm758, %v994, 0
      %v1015 = vand.u32 %v995, %v765
      %1017 = vmatprep.subr.bf16.mxu0 0
      %1018 = vmatpush1.bf16.msra.mxu0 0
      %1019 = vmatprep.subr.bf16.mxu0 0
      %1020 = vmatpush1.bf16.msra.mxu0 0
      %1021 = vmatprep.subr.bf16.mxu0 0
      %1022 = vmatpush1.bf16.msra.mxu0 0
      %1023 = vmatprep.subr.bf16.mxu0 0
      %1024 = vmatpush1.bf16.msra.mxu0 0
      %1025 = vmatprep.subr.bf16.mxu0 0
      %1026 = vmatpush1.bf16.msra.mxu0 0
      %1027 = vmatprep.subr.bf16.mxu0 0
      %1028 = vmatpush1.bf16.msra.mxu0 0
      %1029 = vmatprep.subr.bf16.mxu0 0
      %1030 = vmatpush1.bf16.msra.mxu0 0
      %1031 = vmatprep.subr.bf16.mxu0 0
      %1032 = vmatpush1.bf16.msra.mxu0 %v1015
      %1033 = vmatprep.subr.bf16.mxu0 0
      %1034 = vmatpush2.bf16.msra.mxu0 0
      %1035 = vmatprep.subr.bf16.mxu0 0
      %1036 = vmatpush2.bf16.msra.mxu0 0
      %1037 = vmatprep.subr.bf16.mxu0 0
      %1038 = vmatpush2.bf16.msra.mxu0 0
      %1039 = vmatprep.subr.bf16.mxu0 0
      %1040 = vmatpush2.bf16.msra.mxu0 0
      %1041 = vmatprep.subr.bf16.mxu0 0
      %1042 = vmatpush2.bf16.msra.mxu0 0
      %1043 = vmatprep.subr.bf16.mxu0 0
      %1044 = vmatpush2.bf16.msra.mxu0 0
      %1045 = vmatprep.subr.bf16.mxu0 0
      %1046 = vmatpush2.bf16.msra.mxu0 0
      %1047 = vmatprep.subr.bf16.mxu0 0
      %1048 = vmatpush2.bf16.msra.mxu0 0
      %1049 = vmatprep.mubr.bf16.mxu0 0
      %1050 = vmatmul.mubr.bf16.gmra.mxu0 %v997
      %v1051 = vpop.f32.mrf.mxu0
      %v1052 = vadd.f32 0.0, %v1051
      %v1053 = vpop.f32.mrf.mxu0
      %v1054 = vpop.f32.mrf.mxu0
      %v1055 = vadd.f32 0.0, %v1054
      %v1056 = vpop.f32.mrf.mxu0
      %1057 = vmatprep.mubr.bf16.mxu0 0
      %1058 = vmatmul.mubr.bf16.gmra.mxu0 %v1000
      %v1059 = vpop.f32.mrf.mxu0
      %v1060 = vadd.f32 0.0, %v1059
      %v1061 = vpop.f32.mrf.mxu0
      %v1062 = vpop.f32.mrf.mxu0
      %v1063 = vadd.f32 0.0, %v1062
      %v1064 = vpop.f32.mrf.mxu0
      %1065 = vmatprep.mubr.bf16.mxu0 0
      %1066 = vmatmul.mubr.bf16.gmra.mxu0 %v1003
      %v1067 = vpop.f32.mrf.mxu0
      %v1068 = vadd.f32 0.0, %v1067
      %v1069 = vpop.f32.mrf.mxu0
      %v1070 = vpop.f32.mrf.mxu0
      %v1071 = vadd.f32 0.0, %v1070
      %v1072 = vpop.f32.mrf.mxu0
      %1073 = vmatprep.mubr.bf16.mxu0 0
      %1074 = vmatmul.mubr.bf16.gmra.mxu0 %v1006
      %v1075 = vpop.f32.mrf.mxu0
      %v1076 = vadd.f32 0.0, %v1075
      %v1077 = vpop.f32.mrf.mxu0
      %v1078 = vpop.f32.mrf.mxu0
      %v1079 = vadd.f32 0.0, %v1078
      %v1080 = vpop.f32.mrf.mxu0
      %1081 = vmatprep.mubr.bf16.mxu0 0
      %1082 = vmatmul.mubr.bf16.gmra.mxu0 %v1009
      %v1083 = vpop.f32.mrf.mxu0
      %v1084 = vadd.f32 0.0, %v1083
      %v1085 = vpop.f32.mrf.mxu0
      %v1086 = vpop.f32.mrf.mxu0
      %v1087 = vadd.f32 0.0, %v1086
      %v1088 = vpop.f32.mrf.mxu0
      %1089 = vmatprep.mubr.bf16.mxu0 0
      %1090 = vmatmul.mubr.bf16.gmra.mxu0 %v1012
      %v1091 = vpop.f32.mrf.mxu0
      %v1092 = vadd.f32 0.0, %v1091
      %v1093 = vpop.f32.mrf.mxu0
      %v1094 = vpop.f32.mrf.mxu0
      %v1095 = vpop.f32.mrf.mxu0
      %1096 = vdwg.mxu0
      %v1097 = vld [vmem:[%s11] sm:$0xff]
      %v1098 = vld [vmem:[%s11 + $0x8] sm:$0xff]
      %v1099 = vpack.c.bf16 %v746, %v745
      %v1100 = vpack.c.bf16 %v748, %v747
      %v1101 = vpack.c.bf16 %v750, %v749
      %v1102 = vpack.c.bf16 %v752, %v751
      %v1103 = vpack.c.bf16 %v754, %v753
      %v1104 = vpack.c.bf16 %v755, %v755
      %v1105 = vpack.c.bf16 %v1098, %v1097
      %vm1106 = vcmask 130048
      %v1108 = vsel %vm1106, %v1099, 0
      %v1111 = vsel %vm1106, %v1100, 0
      %v1114 = vsel %vm1106, %v1101, 0
      %v1117 = vsel %vm1106, %v1102, 0
      %v1120 = vsel %vm1106, %v1103, 0
      %v1123 = vsel %vm1106, %v1104, 0
      %1125 = vmatprep.subr.bf16.mxu0 0
      %1126 = vmatpush1.bf16.msra.mxu0 0
      %1127 = vmatprep.subr.bf16.mxu0 0
      %1128 = vmatpush1.bf16.msra.mxu0 0
      %1129 = vmatprep.subr.bf16.mxu0 0
      %1130 = vmatpush1.bf16.msra.mxu0 0
      %1131 = vmatprep.subr.bf16.mxu0 0
      %1132 = vmatpush1.bf16.msra.mxu0 0
      %1133 = vmatprep.subr.bf16.mxu0 0
      %1134 = vmatpush1.bf16.msra.mxu0 0
      %1135 = vmatprep.subr.bf16.mxu0 0
      %1136 = vmatpush1.bf16.msra.mxu0 0
      %1137 = vmatprep.subr.bf16.mxu0 0
      %1138 = vmatpush1.bf16.msra.mxu0 0
      %1139 = vmatprep.subr.bf16.mxu0 0
      %1140 = vmatpush1.bf16.msra.mxu0 %v1105
      %1141 = vmatprep.subr.bf16.mxu0 0
      %1142 = vmatpush2.bf16.msra.mxu0 0
      %1143 = vmatprep.subr.bf16.mxu0 0
      %1144 = vmatpush2.bf16.msra.mxu0 0
      %1145 = vmatprep.subr.bf16.mxu0 0
      %1146 = vmatpush2.bf16.msra.mxu0 0
      %1147 = vmatprep.subr.bf16.mxu0 0
      %1148 = vmatpush2.bf16.msra.mxu0 0
      %1149 = vmatprep.subr.bf16.mxu0 0
      %1150 = vmatpush2.bf16.msra.mxu0 0
      %1151 = vmatprep.subr.bf16.mxu0 0
      %1152 = vmatpush2.bf16.msra.mxu0 0
      %1153 = vmatprep.subr.bf16.mxu0 0
      %1154 = vmatpush2.bf16.msra.mxu0 0
      %1155 = vmatprep.subr.bf16.mxu0 0
      %1156 = vmatpush2.bf16.msra.mxu0 0
      %1157 = vmatprep.mubr.bf16.mxu0 0
      %1158 = vmatmul.mubr.bf16.gmra.mxu0 %v1108
      %v1159 = vpop.f32.mrf.mxu0
      %v1160 = vadd.f32 %v1052, %v1159
      %v1161 = vpop.f32.mrf.mxu0
      %v1162 = vpop.f32.mrf.mxu0
      %v1163 = vadd.f32 %v1055, %v1162
      %v1164 = vpop.f32.mrf.mxu0
      %1165 = vmatprep.mubr.bf16.mxu0 0
      %1166 = vmatmul.mubr.bf16.gmra.mxu0 %v1111
      %v1167 = vpop.f32.mrf.mxu0
      %v1168 = vadd.f32 %v1060, %v1167
      %v1169 = vpop.f32.mrf.mxu0
      %v1170 = vpop.f32.mrf.mxu0
      %v1171 = vadd.f32 %v1063, %v1170
      %v1172 = vpop.f32.mrf.mxu0
      %1173 = vmatprep.mubr.bf16.mxu0 0
      %1174 = vmatmul.mubr.bf16.gmra.mxu0 %v1114
      %v1175 = vpop.f32.mrf.mxu0
      %v1176 = vadd.f32 %v1068, %v1175
      %v1177 = vpop.f32.mrf.mxu0
      %v1178 = vpop.f32.mrf.mxu0
      %v1179 = vadd.f32 %v1071, %v1178
      %v1180 = vpop.f32.mrf.mxu0
      %1181 = vmatprep.mubr.bf16.mxu0 0
      %1182 = vmatmul.mubr.bf16.gmra.mxu0 %v1117
      %v1183 = vpop.f32.mrf.mxu0
      %v1184 = vadd.f32 %v1076, %v1183
      %v1185 = vpop.f32.mrf.mxu0
      %v1186 = vpop.f32.mrf.mxu0
      %v1187 = vadd.f32 %v1079, %v1186
      %v1188 = vpop.f32.mrf.mxu0
      %1189 = vmatprep.mubr.bf16.mxu0 0
      %1190 = vmatmul.mubr.bf16.gmra.mxu0 %v1120
      %v1191 = vpop.f32.mrf.mxu0
      %v1192 = vadd.f32 %v1084, %v1191
      %v1193 = vpop.f32.mrf.mxu0
      %v1194 = vpop.f32.mrf.mxu0
      %v1195 = vadd.f32 %v1087, %v1194
      %v1196 = vpop.f32.mrf.mxu0
      %1197 = vmatprep.mubr.bf16.mxu0 0
      %1198 = vmatmul.mubr.bf16.gmra.mxu0 %v1123
      %v1199 = vpop.f32.mrf.mxu0
      %v1200 = vadd.f32 %v1092, %v1199
      %v1201 = vpop.f32.mrf.mxu0
      %v1202 = vpop.f32.mrf.mxu0
      %v1203 = vpop.f32.mrf.mxu0
      %1204 = vdwg.mxu0
      %v1205 = vld [vmem:[%s13] sm:$0x1]
      %v1207 = vlaneseq
      %v1208 = vshrl.u32 %v1207, 7
      %v1209 = vsub.s32 0, %v1208
      %v1210 = vrot.slane %v1205, %v1209
      %v1212 = vadd.f32 %v1160, %v1210
      %v1213 = vadd.f32 %v1163, %v1210
      %v1214 = vadd.f32 %v1168, %v1210
      %v1215 = vadd.f32 %v1171, %v1210
      %v1216 = vadd.f32 %v1176, %v1210
      %v1217 = vadd.f32 %v1179, %v1210
      %v1218 = vadd.f32 %v1184, %v1210
      %v1219 = vadd.f32 %v1187, %v1210
      %v1220 = vadd.f32 %v1192, %v1210
      %v1221 = vadd.f32 %v1195, %v1210
      %v1222 = vadd.f32 %v1200, %v1210
      %v1223 = vmax.f32 %v1212, 0.0
      %v1224 = vmax.f32 %v1213, 0.0
      %v1225 = vmax.f32 %v1214, 0.0
      %v1226 = vmax.f32 %v1215, 0.0
      %v1227 = vmax.f32 %v1216, 0.0
      %v1228 = vmax.f32 %v1217, 0.0
      %v1229 = vmax.f32 %v1218, 0.0
      %v1230 = vmax.f32 %v1219, 0.0
      %v1231 = vmax.f32 %v1220, 0.0
      %v1232 = vmax.f32 %v1221, 0.0
      %v1233 = vmax.f32 %v1222, 0.0
      %v1234 = vadd.f32 %v745, %v1223
      %v1235 = vadd.f32 %v746, %v1224
      %v1236 = vadd.f32 %v747, %v1225
      %v1237 = vadd.f32 %v748, %v1226
      %v1238 = vadd.f32 %v749, %v1227
      %v1239 = vadd.f32 %v750, %v1228
      %v1240 = vadd.f32 %v751, %v1229
      %v1241 = vadd.f32 %v752, %v1230
      %v1242 = vadd.f32 %v753, %v1231
      %v1243 = vadd.f32 %v754, %v1232
      %v1244 = vadd.f32 %v755, %v1233
      %1245 = vst.msk [vmem:[%s547] sm:$0xff] %vm1106, %v1234
      %1246 = vst.msk [vmem:[%s547 + $0x8] sm:$0xff] %vm1106, %v1235
      %1247 = vst.msk [vmem:[%s547 + $0x10] sm:$0xff] %vm1106, %v1236
      %1248 = vst.msk [vmem:[%s547 + $0x18] sm:$0xff] %vm1106, %v1237
      %1249 = vst.msk [vmem:[%s547 + $0x20] sm:$0xff] %vm1106, %v1238
      %1250 = vst.msk [vmem:[%s547 + $0x28] sm:$0xff] %vm1106, %v1239
      %1251 = vst.msk [vmem:[%s547 + $0x30] sm:$0xff] %vm1106, %v1240
      %1252 = vst.msk [vmem:[%s547 + $0x38] sm:$0xff] %vm1106, %v1241
      %1253 = vst.msk [vmem:[%s547 + $0x40] sm:$0xff] %vm1106, %v1242
      %1254 = vst.msk [vmem:[%s547 + $0x48] sm:$0xff] %vm1106, %v1243
      %vm1255 = vcmask 122880
      %1256 = vst.msk [vmem:[%s547 + $0x50] sm:$0x1] %vm1255, %v1244
      %p1257 = scmp.lt.s32.totalorder %s27, 1
      %s1258 = scalar_select %p1257, %s27, 1
      %s1259 = smul.addr %s1258, 2
      %s1260 = smul.addr %s1259, 8
      %s1261 = scalar_lea.vmem %s14, %s1260
      %p1262 = scmp.lt.s32.totalorder %s27, 1
      %s1263 = scalar_select %p1262, %s27, 1
      %s1264 = smul.addr %s1263, 11
      %s1265 = smul.addr %s1264, 8
      %s1266 = scalar_lea.vmem %s15, %s1265
      // Predicated region
      $region77: #{_forward_impl.4} parent=75 // pred_check
        %p1267 = pneg %p354
      $region78: #{_forward_impl.4} parent=75 // pred_check_branch
        %1269 = sbr.rel (%p1267) target = $region80
      $region79: #{_forward_impl.4} parent=75 // pred_region
        _
      $region80: #{_forward_impl.4} parent=75 // pred_fallthru
        _
      // Predicated region
      $region81: #{_forward_impl.4} parent=75 // pred_check
        %p1270 = pneg %p380
      $region82: #{_forward_impl.4} parent=75 // pred_check_branch
        %1272 = sbr.rel (%p1270) target = $region84
      $region83: #{_forward_impl.4} parent=75 // pred_region
        _
      $region84: #{_forward_impl.4} parent=75 // pred_fallthru
        _
    $region76: #{_forward_impl.4} parent=5 // pred_fallthru
      _
    %p1273 = scmp.le.s32.totalorder 2, %s22
    // Predicated region
    $region85: #{_forward_impl.4} parent=5 // pred_check
      %p1274 = pneg %p1273
    $region86: #{_forward_impl.4} parent=5 // pred_check_branch
      %1276 = sbr.rel (%p1274) target = $region88
    $region87: #{_forward_impl.4} parent=5 // pred_region
      %s1277 = ssub.s32 %s22, 2
      // Predicated region
      $region89: #{_forward_impl.4} parent=87 // pred_check
        %p1278 = pneg %p360
      $region90: #{_forward_impl.4} parent=87 // pred_check_branch
        %1280 = sbr.rel (%p1278) target = $region92
      $region91: #{_forward_impl.4} parent=87 // pred_region
        %p1281 = scmp.lt.s32.totalorder %s28, 1
        %s1282 = scalar_select %p1281, %s28, 1
        %s1283 = smul.addr %s1282, 2
        %s1284 = smul.addr %s1283, 8
        %s1285 = scalar_lea.vmem %s14, %s1284
      $region92: #{_forward_impl.4} parent=87 // pred_fallthru
        _
      // Predicated region
      $region93: #{_forward_impl.4} parent=87 // pred_check
        %p1286 = pneg %p386
      $region94: #{_forward_impl.4} parent=87 // pred_check_branch
        %1288 = sbr.rel (%p1286) target = $region96
      $region95: #{_forward_impl.4} parent=87 // pred_region
        %p1289 = scmp.lt.s32.totalorder %s28, 1
        %s1290 = scalar_select %p1289, %s28, 1
        %s1291 = smul.addr %s1290, 11
        %s1292 = smul.addr %s1291, 8
        %s1293 = scalar_lea.vmem %s15, %s1292
      $region96: #{_forward_impl.4} parent=87 // pred_fallthru
        _
    $region88: #{_forward_impl.4} parent=5 // pred_fallthru
      _
  $region6: #{_forward_impl.4} parent=0 // loop_footer
    %s26 = sadd.s32 1, %s22
  $region7: #{_forward_impl.4} parent=0 // loop_footer_branch
    %21 = sbr.rel target = $region3
  $region8: #{_forward_impl.4} parent=0 // loop_exit
    _

// kernel: _forward_impl.5
$region0: #{_forward_impl.5}
  #allocation0 [shape = 'u32[]', space=smem, size = 0x4, offset = 0x4, fixed_abs, tag = 'smem constant byte address 0x4 - core index']
  #allocation1 [shape = 'u32[144,128]{1,0:T(1,128)}', space=vmem, size = 0x12000, scoped, tag = 'internal scratch']
  %s0 = inlined_call_operand.vmem [shape: f32[2,9,9], index: 0, kind: input, shape index: {}]
  %s1 = inlined_call_operand.vmem [shape: f32[2,9,32], index: 1, kind: input, shape index: {}]
  %s2 = inlined_call_operand.vmem [shape: f32[2,81,16], index: 2, kind: input, shape index: {}]
  %s3 = inlined_call_operand.vmem [shape: f32[81,9], index: 3, kind: input, shape index: {}]
  %s4 = inlined_call_operand.vmem [shape: f32[32,32], index: 4, kind: input, shape index: {}]
  %s5 = inlined_call_operand.vmem [shape: f32[32,32], index: 5, kind: input, shape index: {}]
  %s6 = inlined_call_operand.vmem [shape: f32[1,32], index: 6, kind: input, shape index: {}]
  %s7 = inlined_call_operand.vmem [shape: f32[16,16], index: 7, kind: input, shape index: {}]
  %s8 = inlined_call_operand.vmem [shape: f32[32,16], index: 8, kind: input, shape index: {}]
  %s9 = inlined_call_operand.vmem [shape: f32[1,16], index: 9, kind: input, shape index: {}]
  %s10 = inlined_call_operand.vmem [shape: f32[16,16], index: 10, kind: input, shape index: {}]
  %s11 = inlined_call_operand.vmem [shape: f32[1,16], index: 11, kind: input, shape index: {}]
  %s12 = inlined_call_operand.vmem [shape: f32[16,2], index: 12, kind: input, shape index: {}]
  %s13 = inlined_call_operand.vmem [shape: f32[1,2], index: 13, kind: input, shape index: {}]
  %s14 = inlined_call_operand.vmem [shape: f32[2,9,32], index: 14, kind: output, shape index: {0}]
  %s15 = inlined_call_operand.vmem [shape: f32[2,81,2], index: 15, kind: output, shape index: {1}]
  %16 = xla_tuple %s14, %s15
  %s17 = sld [smem:[#allocation0]]
  $region97: #{_forward_impl.5} parent=0
    _
  %s19 = ssub.s32 1, %s17
  %s20 = scalar_select 0, %s19, %s17
  loop: start=0, step=1, limit=4
  $region2: #{_forward_impl.5} parent=0 // loop_pre_header
    _
  $region3: #{_forward_impl.5} parent=0 // loop_header
    %s22 = sphi 0, %s26
    %p23 = scmp.ge.s32.totalorder %s22, 4
    %s32 = sphi 0, %s34
    %s35 = sphi 0, %s32
    %s36 = sphi 0, %s35
    %s52 = sphi 0, %s36
    %s58 = sphi 0, %s60
    %s61 = sphi 0, %s58
    %s62 = sphi 0, %s61
    %s78 = sphi 0, %s62
    %s84 = sphi 0, %s86
    %s87 = sphi 0, %s84
    %s88 = sphi 0, %s87
    %s104 = sphi 0, %s88
    %s108 = sphi 0, %s108
    %s110 = sphi 0, %s108
    %s111 = sphi 0, %s110
    %s125 = sphi 0, %s111
    %s129 = sphi 0, %s129
    %s131 = sphi 0, %s129
    %s132 = sphi 0, %s131
    %s146 = sphi 0, %s132
    %s150 = sphi 0, %s150
    %s152 = sphi 0, %s150
    %s153 = sphi 0, %s152
    %s167 = sphi 0, %s153
    %s171 = sphi 0, %s171
    %s173 = sphi 0, %s171
    %s174 = sphi 0, %s173
    %s188 = sphi 0, %s174
    %s192 = sphi 0, %s192
    %s194 = sphi 0, %s192
    %s195 = sphi 0, %s194
    %s209 = sphi 0, %s195
    %s213 = sphi 0, %s213
    %s215 = sphi 0, %s213
    %s216 = sphi 0, %s215
    %s230 = sphi 0, %s216
    %s234 = sphi 0, %s234
    %s236 = sphi 0, %s234
    %s237 = sphi 0, %s236
    %s251 = sphi 0, %s237
    %s255 = sphi 0, %s255
    %s257 = sphi 0, %s255
    %s258 = sphi 0, %s257
    %s272 = sphi 0, %s258
    %s276 = sphi 0, %s276
    %s278 = sphi 0, %s276
    %s279 = sphi 0, %s278
    %s293 = sphi 0, %s279
    %s297 = sphi 0, %s297
    %s299 = sphi 0, %s297
    %s300 = sphi 0, %s299
    %s314 = sphi 0, %s300
    %s318 = sphi 0, %s318
    %s320 = sphi 0, %s318
    %s321 = sphi 0, %s320
    %s335 = sphi 0, %s321
    %s341 = sphi 0, %s343
    %s344 = sphi 0, %s341
    %s345 = sphi 0, %s344
    %s361 = sphi 0, %s345
    %s367 = sphi 0, %s369
    %s370 = sphi 0, %s367
    %s371 = sphi 0, %s370
    %s387 = sphi 0, %s371
  $region4: #{_forward_impl.5} parent=0 // loop_header_branch
    %25 = sbr.rel (%p23) target = $region8
  $region5: #{_forward_impl.5} parent=0 // loop_body
    %s27 = ssub.s32 %s22, 1
    %s28 = ssub.s32 %s22, 2
    %s29 = sadd.s32 %s22, 1
    %s30 = ssub.s32 %s22, %s29
    %p31 = scmp.eq.s32.totalorder %s30, 0
    %s33 = sadd.s32 %s32, 1
    %s34 = scalar_select %p31, %s32, %s33
    %p37 = pneg %p31
    %p38 = scmp.eq.s32.totalorder %s22, 1
    %p39 = por %p37, %p38
    %p40 = scmp.ne.s32.totalorder %s32, %s35
    %p41 = scmp.eq.s32.totalorder %s22, 0
    %p42 = por %p40, %p41
    %p43 = scmp.ne.s32.totalorder %s32, %s35
    %p44 = scmp.eq.s32.totalorder %s27, 1
    %p45 = por %p43, %p44
    %p46 = scmp.ne.s32.totalorder %s35, %s36
    %p47 = scmp.eq.s32.totalorder %s27, 0
    %p48 = por %p46, %p47
    %p49 = scmp.ne.s32.totalorder %s35, %s36
    %p50 = scmp.eq.s32.totalorder %s28, 1
    %p51 = por %p49, %p50
    %p53 = scmp.ne.s32.totalorder %s36, %s52
    %p54 = scmp.eq.s32.totalorder %s28, 0
    %p55 = por %p53, %p54
    %s56 = ssub.s32 %s22, %s29
    %p57 = scmp.eq.s32.totalorder %s56, 0
    %s59 = sadd.s32 %s58, 1
    %s60 = scalar_select %p57, %s58, %s59
    %p63 = pneg %p57
    %p64 = scmp.eq.s32.totalorder %s22, 1
    %p65 = por %p63, %p64
    %p66 = scmp.ne.s32.totalorder %s58, %s61
    %p67 = scmp.eq.s32.totalorder %s22, 0
    %p68 = por %p66, %p67
    %p69 = scmp.ne.s32.totalorder %s58, %s61
    %p70 = scmp.eq.s32.totalorder %s27, 1
    %p71 = por %p69, %p70
    %p72 = scmp.ne.s32.totalorder %s61, %s62
    %p73 = scmp.eq.s32.totalorder %s27, 0
    %p74 = por %p72, %p73
    %p75 = scmp.ne.s32.totalorder %s61, %s62
    %p76 = scmp.eq.s32.totalorder %s28, 1
    %p77 = por %p75, %p76
    %p79 = scmp.ne.s32.totalorder %s62, %s78
    %p80 = scmp.eq.s32.totalorder %s28, 0
    %p81 = por %p79, %p80
    %s82 = ssub.s32 %s22, %s29
    %p83 = scmp.eq.s32.totalorder %s82, 0
    %s85 = sadd.s32 %s84, 1
    %s86 = scalar_select %p83, %s84, %s85
    %p89 = pneg %p83
    %p90 = scmp.eq.s32.totalorder %s22, 1
    %p91 = por %p89, %p90
    %p92 = scmp.ne.s32.totalorder %s84, %s87
    %p93 = scmp.eq.s32.totalorder %s22, 0
    %p94 = por %p92, %p93
    %p95 = scmp.ne.s32.totalorder %s84, %s87
    %p96 = scmp.eq.s32.totalorder %s27, 1
    %p97 = por %p95, %p96
    %p98 = scmp.ne.s32.totalorder %s87, %s88
    %p99 = scmp.eq.s32.totalorder %s27, 0
    %p100 = por %p98, %p99
    %p101 = scmp.ne.s32.totalorder %s87, %s88
    %p102 = scmp.eq.s32.totalorder %s28, 1
    %p103 = por %p101, %p102
    %p105 = scmp.ne.s32.totalorder %s88, %s104
    %p106 = scmp.eq.s32.totalorder %s28, 0
    %p107 = por %p105, %p106
    %s109 = sadd.s32 %s108, 1
    %p112 = scmp.eq.s32.totalorder %s22, 1
    %p113 = scmp.ne.s32.totalorder %s108, %s110
    %p114 = scmp.eq.s32.totalorder %s22, 0
    %p115 = por %p113, %p114
    %p116 = scmp.ne.s32.totalorder %s108, %s110
    %p117 = scmp.eq.s32.totalorder %s27, 1
    %p118 = por %p116, %p117
    %p119 = scmp.ne.s32.totalorder %s110, %s111
    %p120 = scmp.eq.s32.totalorder %s27, 0
    %p121 = por %p119, %p120
    %p122 = scmp.ne.s32.totalorder %s110, %s111
    %p123 = scmp.eq.s32.totalorder %s28, 1
    %p124 = por %p122, %p123
    %p126 = scmp.ne.s32.totalorder %s111, %s125
    %p127 = scmp.eq.s32.totalorder %s28, 0
    %p128 = por %p126, %p127
    %s130 = sadd.s32 %s129, 1
    %p133 = scmp.eq.s32.totalorder %s22, 1
    %p134 = scmp.ne.s32.totalorder %s129, %s131
    %p135 = scmp.eq.s32.totalorder %s22, 0
    %p136 = por %p134, %p135
    %p137 = scmp.ne.s32.totalorder %s129, %s131
    %p138 = scmp.eq.s32.totalorder %s27, 1
    %p139 = por %p137, %p138
    %p140 = scmp.ne.s32.totalorder %s131, %s132
    %p141 = scmp.eq.s32.totalorder %s27, 0
    %p142 = por %p140, %p141
    %p143 = scmp.ne.s32.totalorder %s131, %s132
    %p144 = scmp.eq.s32.totalorder %s28, 1
    %p145 = por %p143, %p144
    %p147 = scmp.ne.s32.totalorder %s132, %s146
    %p148 = scmp.eq.s32.totalorder %s28, 0
    %p149 = por %p147, %p148
    %s151 = sadd.s32 %s150, 1
    %p154 = scmp.eq.s32.totalorder %s22, 1
    %p155 = scmp.ne.s32.totalorder %s150, %s152
    %p156 = scmp.eq.s32.totalorder %s22, 0
    %p157 = por %p155, %p156
    %p158 = scmp.ne.s32.totalorder %s150, %s152
    %p159 = scmp.eq.s32.totalorder %s27, 1
    %p160 = por %p158, %p159
    %p161 = scmp.ne.s32.totalorder %s152, %s153
    %p162 = scmp.eq.s32.totalorder %s27, 0
    %p163 = por %p161, %p162
    %p164 = scmp.ne.s32.totalorder %s152, %s153
    %p165 = scmp.eq.s32.totalorder %s28, 1
    %p166 = por %p164, %p165
    %p168 = scmp.ne.s32.totalorder %s153, %s167
    %p169 = scmp.eq.s32.totalorder %s28, 0
    %p170 = por %p168, %p169
    %s172 = sadd.s32 %s171, 1
    %p175 = scmp.eq.s32.totalorder %s22, 1
    %p176 = scmp.ne.s32.totalorder %s171, %s173
    %p177 = scmp.eq.s32.totalorder %s22, 0
    %p178 = por %p176, %p177
    %p179 = scmp.ne.s32.totalorder %s171, %s173
    %p180 = scmp.eq.s32.totalorder %s27, 1
    %p181 = por %p179, %p180
    %p182 = scmp.ne.s32.totalorder %s173, %s174
    %p183 = scmp.eq.s32.totalorder %s27, 0
    %p184 = por %p182, %p183
    %p185 = scmp.ne.s32.totalorder %s173, %s174
    %p186 = scmp.eq.s32.totalorder %s28, 1
    %p187 = por %p185, %p186
    %p189 = scmp.ne.s32.totalorder %s174, %s188
    %p190 = scmp.eq.s32.totalorder %s28, 0
    %p191 = por %p189, %p190
    %s193 = sadd.s32 %s192, 1
    %p196 = scmp.eq.s32.totalorder %s22, 1
    %p197 = scmp.ne.s32.totalorder %s192, %s194
    %p198 = scmp.eq.s32.totalorder %s22, 0
    %p199 = por %p197, %p198
    %p200 = scmp.ne.s32.totalorder %s192, %s194
    %p201 = scmp.eq.s32.totalorder %s27, 1
    %p202 = por %p200, %p201
    %p203 = scmp.ne.s32.totalorder %s194, %s195
    %p204 = scmp.eq.s32.totalorder %s27, 0
    %p205 = por %p203, %p204
    %p206 = scmp.ne.s32.totalorder %s194, %s195
    %p207 = scmp.eq.s32.totalorder %s28, 1
    %p208 = por %p206, %p207
    %p210 = scmp.ne.s32.totalorder %s195, %s209
    %p211 = scmp.eq.s32.totalorder %s28, 0
    %p212 = por %p210, %p211
    %s214 = sadd.s32 %s213, 1
    %p217 = scmp.eq.s32.totalorder %s22, 1
    %p218 = scmp.ne.s32.totalorder %s213, %s215
    %p219 = scmp.eq.s32.totalorder %s22, 0
    %p220 = por %p218, %p219
    %p221 = scmp.ne.s32.totalorder %s213, %s215
    %p222 = scmp.eq.s32.totalorder %s27, 1
    %p223 = por %p221, %p222
    %p224 = scmp.ne.s32.totalorder %s215, %s216
    %p225 = scmp.eq.s32.totalorder %s27, 0
    %p226 = por %p224, %p225
    %p227 = scmp.ne.s32.totalorder %s215, %s216
    %p228 = scmp.eq.s32.totalorder %s28, 1
    %p229 = por %p227, %p228
    %p231 = scmp.ne.s32.totalorder %s216, %s230
    %p232 = scmp.eq.s32.totalorder %s28, 0
    %p233 = por %p231, %p232
    %s235 = sadd.s32 %s234, 1
    %p238 = scmp.eq.s32.totalorder %s22, 1
    %p239 = scmp.ne.s32.totalorder %s234, %s236
    %p240 = scmp.eq.s32.totalorder %s22, 0
    %p241 = por %p239, %p240
    %p242 = scmp.ne.s32.totalorder %s234, %s236
    %p243 = scmp.eq.s32.totalorder %s27, 1
    %p244 = por %p242, %p243
    %p245 = scmp.ne.s32.totalorder %s236, %s237
    %p246 = scmp.eq.s32.totalorder %s27, 0
    %p247 = por %p245, %p246
    %p248 = scmp.ne.s32.totalorder %s236, %s237
    %p249 = scmp.eq.s32.totalorder %s28, 1
    %p250 = por %p248, %p249
    %p252 = scmp.ne.s32.totalorder %s237, %s251
    %p253 = scmp.eq.s32.totalorder %s28, 0
    %p254 = por %p252, %p253
    %s256 = sadd.s32 %s255, 1
    %p259 = scmp.eq.s32.totalorder %s22, 1
    %p260 = scmp.ne.s32.totalorder %s255, %s257
    %p261 = scmp.eq.s32.totalorder %s22, 0
    %p262 = por %p260, %p261
    %p263 = scmp.ne.s32.totalorder %s255, %s257
    %p264 = scmp.eq.s32.totalorder %s27, 1
    %p265 = por %p263, %p264
    %p266 = scmp.ne.s32.totalorder %s257, %s258
    %p267 = scmp.eq.s32.totalorder %s27, 0
    %p268 = por %p266, %p267
    %p269 = scmp.ne.s32.totalorder %s257, %s258
    %p270 = scmp.eq.s32.totalorder %s28, 1
    %p271 = por %p269, %p270
    %p273 = scmp.ne.s32.totalorder %s258, %s272
    %p274 = scmp.eq.s32.totalorder %s28, 0
    %p275 = por %p273, %p274
    %s277 = sadd.s32 %s276, 1
    %p280 = scmp.eq.s32.totalorder %s22, 1
    %p281 = scmp.ne.s32.totalorder %s276, %s278
    %p282 = scmp.eq.s32.totalorder %s22, 0
    %p283 = por %p281, %p282
    %p284 = scmp.ne.s32.totalorder %s276, %s278
    %p285 = scmp.eq.s32.totalorder %s27, 1
    %p286 = por %p284, %p285
    %p287 = scmp.ne.s32.totalorder %s278, %s279
    %p288 = scmp.eq.s32.totalorder %s27, 0
    %p289 = por %p287, %p288
    %p290 = scmp.ne.s32.totalorder %s278, %s279
    %p291 = scmp.eq.s32.totalorder %s28, 1
    %p292 = por %p290, %p291
    %p294 = scmp.ne.s32.totalorder %s279, %s293
    %p295 = scmp.eq.s32.totalorder %s28, 0
    %p296 = por %p294, %p295
    %s298 = sadd.s32 %s297, 1
    %p301 = scmp.eq.s32.totalorder %s22, 1
    %p302 = scmp.ne.s32.totalorder %s297, %s299
    %p303 = scmp.eq.s32.totalorder %s22, 0
    %p304 = por %p302, %p303
    %p305 = scmp.ne.s32.totalorder %s297, %s299
    %p306 = scmp.eq.s32.totalorder %s27, 1
    %p307 = por %p305, %p306
    %p308 = scmp.ne.s32.totalorder %s299, %s300
    %p309 = scmp.eq.s32.totalorder %s27, 0
    %p310 = por %p308, %p309
    %p311 = scmp.ne.s32.totalorder %s299, %s300
    %p312 = scmp.eq.s32.totalorder %s28, 1
    %p313 = por %p311, %p312
    %p315 = scmp.ne.s32.totalorder %s300, %s314
    %p316 = scmp.eq.s32.totalorder %s28, 0
    %p317 = por %p315, %p316
    %s319 = sadd.s32 %s318, 1
    %p322 = scmp.eq.s32.totalorder %s22, 1
    %p323 = scmp.ne.s32.totalorder %s318, %s320
    %p324 = scmp.eq.s32.totalorder %s22, 0
    %p325 = por %p323, %p324
    %p326 = scmp.ne.s32.totalorder %s318, %s320
    %p327 = scmp.eq.s32.totalorder %s27, 1
    %p328 = por %p326, %p327
    %p329 = scmp.ne.s32.totalorder %s320, %s321
    %p330 = scmp.eq.s32.totalorder %s27, 0
    %p331 = por %p329, %p330
    %p332 = scmp.ne.s32.totalorder %s320, %s321
    %p333 = scmp.eq.s32.totalorder %s28, 1
    %p334 = por %p332, %p333
    %p336 = scmp.ne.s32.totalorder %s321, %s335
    %p337 = scmp.eq.s32.totalorder %s28, 0
    %p338 = por %p336, %p337
    %s339 = ssub.s32 %s22, %s29
    %p340 = scmp.eq.s32.totalorder %s339, 0
    %s342 = sadd.s32 %s341, 1
    %s343 = scalar_select %p340, %s341, %s342
    %p346 = pneg %p340
    %p347 = scmp.eq.s32.totalorder %s22, 1
    %p348 = por %p346, %p347
    %p349 = scmp.ne.s32.totalorder %s341, %s344
    %p350 = scmp.eq.s32.totalorder %s22, 0
    %p351 = por %p349, %p350
    %p352 = scmp.ne.s32.totalorder %s341, %s344
    %p353 = scmp.eq.s32.totalorder %s27, 1
    %p354 = por %p352, %p353
    %p355 = scmp.ne.s32.totalorder %s344, %s345
    %p356 = scmp.eq.s32.totalorder %s27, 0
    %p357 = por %p355, %p356
    %p358 = scmp.ne.s32.totalorder %s344, %s345
    %p359 = scmp.eq.s32.totalorder %s28, 1
    %p360 = por %p358, %p359
    %p362 = scmp.ne.s32.totalorder %s345, %s361
    %p363 = scmp.eq.s32.totalorder %s28, 0
    %p364 = por %p362, %p363
    %s365 = ssub.s32 %s22, %s29
    %p366 = scmp.eq.s32.totalorder %s365, 0
    %s368 = sadd.s32 %s367, 1
    %s369 = scalar_select %p366, %s367, %s368
    %p372 = pneg %p366
    %p373 = scmp.eq.s32.totalorder %s22, 1
    %p374 = por %p372, %p373
    %p375 = scmp.ne.s32.totalorder %s367, %s370
    %p376 = scmp.eq.s32.totalorder %s22, 0
    %p377 = por %p375, %p376
    %p378 = scmp.ne.s32.totalorder %s367, %s370
    %p379 = scmp.eq.s32.totalorder %s27, 1
    %p380 = por %p378, %p379
    %p381 = scmp.ne.s32.totalorder %s370, %s371
    %p382 = scmp.eq.s32.totalorder %s27, 0
    %p383 = por %p381, %p382
    %p384 = scmp.ne.s32.totalorder %s370, %s371
    %p385 = scmp.eq.s32.totalorder %s28, 1
    %p386 = por %p384, %p385
    %p388 = scmp.ne.s32.totalorder %s371, %s387
    %p389 = scmp.eq.s32.totalorder %s28, 0
    %p390 = por %p388, %p389
    %p391 = scmp.le.s32.totalorder 1, %s22
    %p392 = scmp.lt.s32.totalorder %s22, 3
    %p393 = pnand %p391, %p392
    %p394 = pneg %p393
    // Predicated region
    $region9: #{_forward_impl.5} parent=5 // pred_check
      _
    $region10: #{_forward_impl.5} parent=5 // pred_check_branch
      %396 = sbr.rel (%p393) target = $region12
    $region11: #{_forward_impl.5} parent=5 // pred_region
      %s397 = ssub.s32 %s22, 1
      // Predicated region
      $region13: #{_forward_impl.5} parent=11 // pred_check
        %p398 = pneg %p121
      $region14: #{_forward_impl.5} parent=11 // pred_check_branch
        %400 = sbr.rel (%p398) target = $region16
      $region15: #{_forward_impl.5} parent=11 // pred_region
        _
      $region16: #{_forward_impl.5} parent=11 // pred_fallthru
        _
      // Predicated region
      $region17: #{_forward_impl.5} parent=11 // pred_check
        %p401 = pneg %p142
      $region18: #{_forward_impl.5} parent=11 // pred_check_branch
        %403 = sbr.rel (%p401) target = $region20
      $region19: #{_forward_impl.5} parent=11 // pred_region
        _
      $region20: #{_forward_impl.5} parent=11 // pred_fallthru
        _
      // Predicated region
      $region21: #{_forward_impl.5} parent=11 // pred_check
        %p404 = pneg %p163
      $region22: #{_forward_impl.5} parent=11 // pred_check_branch
        %406 = sbr.rel (%p404) target = $region24
      $region23: #{_forward_impl.5} parent=11 // pred_region
        _
      $region24: #{_forward_impl.5} parent=11 // pred_fallthru
        _
      // Predicated region
      $region25: #{_forward_impl.5} parent=11 // pred_check
        %p407 = pneg %p184
      $region26: #{_forward_impl.5} parent=11 // pred_check_branch
        %409 = sbr.rel (%p407) target = $region28
      $region27: #{_forward_impl.5} parent=11 // pred_region
        _
      $region28: #{_forward_impl.5} parent=11 // pred_fallthru
        _
      // Predicated region
      $region29: #{_forward_impl.5} parent=11 // pred_check
        %p410 = pneg %p205
      $region30: #{_forward_impl.5} parent=11 // pred_check_branch
        %412 = sbr.rel (%p410) target = $region32
      $region31: #{_forward_impl.5} parent=11 // pred_region
        _
      $region32: #{_forward_impl.5} parent=11 // pred_fallthru
        _
      // Predicated region
      $region33: #{_forward_impl.5} parent=11 // pred_check
        %p413 = pneg %p226
      $region34: #{_forward_impl.5} parent=11 // pred_check_branch
        %415 = sbr.rel (%p413) target = $region36
      $region35: #{_forward_impl.5} parent=11 // pred_region
        _
      $region36: #{_forward_impl.5} parent=11 // pred_fallthru
        _
      // Predicated region
      $region37: #{_forward_impl.5} parent=11 // pred_check
        %p416 = pneg %p247
      $region38: #{_forward_impl.5} parent=11 // pred_check_branch
        %418 = sbr.rel (%p416) target = $region40
      $region39: #{_forward_impl.5} parent=11 // pred_region
        _
      $region40: #{_forward_impl.5} parent=11 // pred_fallthru
        _
      // Predicated region
      $region41: #{_forward_impl.5} parent=11 // pred_check
        %p419 = pneg %p268
      $region42: #{_forward_impl.5} parent=11 // pred_check_branch
        %421 = sbr.rel (%p419) target = $region44
      $region43: #{_forward_impl.5} parent=11 // pred_region
        _
      $region44: #{_forward_impl.5} parent=11 // pred_fallthru
        _
      // Predicated region
      $region45: #{_forward_impl.5} parent=11 // pred_check
        %p422 = pneg %p289
      $region46: #{_forward_impl.5} parent=11 // pred_check_branch
        %424 = sbr.rel (%p422) target = $region48
      $region47: #{_forward_impl.5} parent=11 // pred_region
        _
      $region48: #{_forward_impl.5} parent=11 // pred_fallthru
        _
      // Predicated region
      $region49: #{_forward_impl.5} parent=11 // pred_check
        %p425 = pneg %p310
      $region50: #{_forward_impl.5} parent=11 // pred_check_branch
        %427 = sbr.rel (%p425) target = $region52
      $region51: #{_forward_impl.5} parent=11 // pred_region
        _
      $region52: #{_forward_impl.5} parent=11 // pred_fallthru
        _
      // Predicated region
      $region53: #{_forward_impl.5} parent=11 // pred_check
        %p428 = pneg %p331
      $region54: #{_forward_impl.5} parent=11 // pred_check_branch
        %430 = sbr.rel (%p428) target = $region56
      $region55: #{_forward_impl.5} parent=11 // pred_region
        _
      $region56: #{_forward_impl.5} parent=11 // pred_fallthru
        _
    $region12: #{_forward_impl.5} parent=5 // pred_fallthru
      _
    %p431 = scmp.lt.s32.totalorder %s22, 2
    // Predicated region
    $region57: #{_forward_impl.5} parent=5 // pred_check
      %p432 = pneg %p431
    $region58: #{_forward_impl.5} parent=5 // pred_check_branch
      %434 = sbr.rel (%p432) target = $region60
    $region59: #{_forward_impl.5} parent=5 // pred_region
      // Predicated region
      $region61: #{_forward_impl.5} parent=59 // pred_check
        %p435 = pneg %p42
      $region62: #{_forward_impl.5} parent=59 // pred_check_branch
        %437 = sbr.rel (%p435) target = $region64
      $region63: #{_forward_impl.5} parent=59 // pred_region
        %p438 = scmp.lt.s32.totalorder %s22, 1
        %s439 = scalar_select %p438, %s22, 1
        %s440 = smul.addr %s439, 2
        %s441 = smul.addr %s440, 8
        %s442 = scalar_lea.vmem %s0, %s441
      $region64: #{_forward_impl.5} parent=59 // pred_fallthru
        _
      // Predicated region
      $region65: #{_forward_impl.5} parent=59 // pred_check
        %p443 = pneg %p68
      $region66: #{_forward_impl.5} parent=59 // pred_check_branch
        %445 = sbr.rel (%p443) target = $region68
      $region67: #{_forward_impl.5} parent=59 // pred_region
        %p446 = scmp.lt.s32.totalorder %s22, 1
        %s447 = scalar_select %p446, %s22, 1
        %s448 = smul.addr %s447, 2
        %s449 = smul.addr %s448, 8
        %s450 = scalar_lea.vmem %s1, %s449
      $region68: #{_forward_impl.5} parent=59 // pred_fallthru
        _
      // Predicated region
      $region69: #{_forward_impl.5} parent=59 // pred_check
        %p451 = pneg %p94
      $region70: #{_forward_impl.5} parent=59 // pred_check_branch
        %453 = sbr.rel (%p451) target = $region72
      $region71: #{_forward_impl.5} parent=59 // pred_region
        %p454 = scmp.lt.s32.totalorder %s22, 1
        %s455 = scalar_select %p454, %s22, 1
        %s456 = smul.addr %s455, 11
        %s457 = smul.addr %s456, 8
        %s458 = scalar_lea.vmem %s2, %s457
      $region72: #{_forward_impl.5} parent=59 // pred_fallthru
        _
    $region60: #{_forward_impl.5} parent=5 // pred_fallthru
      _
    %p459 = scmp.le.s32.totalorder 1, %s22
    %p460 = scmp.lt.s32.totalorder %s22, 3
    %p461 = pnand %p459, %p460
    %p462 = pneg %p461
    // Predicated region
    $region73: #{_forward_impl.5} parent=5 // pred_check
      _
    $region74: #{_forward_impl.5} parent=5 // pred_check_branch
      %464 = sbr.rel (%p461) target = $region76
    $region75: #{_forward_impl.5} parent=5 // pred_region
      %s465 = ssub.s32 %s22, 1
      %p466 = scmp.lt.s32.totalorder %s27, 1
      %s467 = scalar_select %p466, %s27, 1
      %s468 = smul.addr %s467, 2
      %s469 = smul.addr %s468, 8
      %s470 = scalar_lea.vmem %s0, %s469
      %p471 = pneg %p48
      %p472 = pneg %p45
      %p473 = scmp.lt.s32.totalorder %s27, 1
      %s474 = scalar_select %p473, %s27, 1
      %s475 = smul.addr %s474, 2
      %s476 = smul.addr %s475, 8
      %s477 = scalar_lea.vmem %s1, %s476
      %p478 = pneg %p74
      %p479 = pneg %p71
      %p480 = scmp.lt.s32.totalorder %s27, 1
      %s481 = scalar_select %p480, %s27, 1
      %s482 = smul.addr %s481, 11
      %s483 = smul.addr %s482, 8
      %s484 = scalar_lea.vmem %s2, %s483
      %p485 = pneg %p100
      %p486 = pneg %p97
      %p487 = pneg %p121
      %p488 = pneg %p118
      %p489 = pneg %p142
      %p490 = pneg %p139
      %p491 = pneg %p163
      %p492 = pneg %p160
      %p493 = pneg %p184
      %p494 = pneg %p181
      %p495 = pneg %p205
      %p496 = pneg %p202
      %p497 = pneg %p226
      %p498 = pneg %p223
      %p499 = pneg %p247
      %p500 = pneg %p244
      %p501 = pneg %p268
      %p502 = pneg %p265
      %p503 = pneg %p289
      %p504 = pneg %p286
      %p505 = pneg %p310
      %p506 = pneg %p307
      %p507 = pneg %p331
      %p508 = pneg %p328
      %p509 = pneg %p357
      %p510 = pneg %p354
      %p511 = scmp.lt.s32.totalorder %s27, 1
      %s512 = scalar_select %p511, %s27, 1
      %s513 = smul.addr %s512, 2
      %s514 = smul.addr %s513, 8
      %s515 = scalar_lea.vmem %s14, %s514
      %p516 = pneg %p383
      %p517 = pneg %p380
      %p518 = scmp.lt.s32.totalorder %s27, 1
      %s519 = scalar_select %p518, %s27, 1
      %s520 = smul.addr %s519, 11
      %s521 = smul.addr %s520, 8
      %s522 = scalar_lea.vmem %s15, %s521
      %p523 = scmp.lt.s32.totalorder %s27, 1
      %s524 = scalar_select %p523, %s27, 1
      %s525 = smul.addr %s524, 2
      %s526 = smul.addr %s525, 8
      %s527 = scalar_lea.vmem %s0, %s526
      %p528 = scmp.lt.s32.totalorder %s27, 1
      %s529 = scalar_select %p528, %s27, 1
      %s530 = smul.addr %s529, 2
      %s531 = smul.addr %s530, 8
      %s532 = scalar_lea.vmem %s1, %s531
      %p533 = scmp.lt.s32.totalorder %s27, 1
      %s534 = scalar_select %p533, %s27, 1
      %s535 = smul.addr %s534, 11
      %s536 = smul.addr %s535, 8
      %s537 = scalar_lea.vmem %s2, %s536
      %p538 = scmp.lt.s32.totalorder %s27, 1
      %s539 = scalar_select %p538, %s27, 1
      %s540 = smul.addr %s539, 2
      %s541 = smul.addr %s540, 8
      %s542 = scalar_lea.vmem %s14, %s541
      %p543 = scmp.lt.s32.totalorder %s27, 1
      %s544 = scalar_select %p543, %s27, 1
      %s545 = smul.addr %s544, 11
      %s546 = smul.addr %s545, 8
      %s547 = scalar_lea.vmem %s15, %s546
      %v549 = vld [vmem:[%s527] sm:$0xff]
      %v550 = vld [vmem:[%s527 + $0x8] sm:$0x1]
      %v551 = vld [vmem:[%s532] sm:$0xff]
      %v552 = vld [vmem:[%s532 + $0x8] sm:$0x1]
      %v553 = vld [vmem:[%s537] sm:$0xff]
      %v554 = vld [vmem:[%s537 + $0x8] sm:$0xff]
      %v555 = vld [vmem:[%s537 + $0x10] sm:$0xff]
      %v556 = vld [vmem:[%s537 + $0x18] sm:$0xff]
      %v557 = vld [vmem:[%s537 + $0x20] sm:$0xff]
      %v558 = vld [vmem:[%s537 + $0x28] sm:$0xff]
      %v559 = vld [vmem:[%s537 + $0x30] sm:$0xff]
      %v560 = vld [vmem:[%s537 + $0x38] sm:$0xff]
      %v561 = vld [vmem:[%s537 + $0x40] sm:$0xff]
      %v562 = vld [vmem:[%s537 + $0x48] sm:$0xff]
      %v563 = vld [vmem:[%s537 + $0x50] sm:$0x1]
      %v564 = vpack.c.bf16 %v550, %v549
      %v565 = vpack.c.bf16 %v552, %v551
      %vm566 = vcmask 72704
      %v568 = vsel %vm566, %v564, 0
      %vm570 = vcmask 1043456
      %vm571 = vcmask 1044480
      %v572 = vsel %vm570, 4294967295, 65535
      %v573 = vsel %vm571, %v572, 0
      %v575 = vand.u32 %v565, %v573
      %577 = vmatprep.subr.bf16.mxu0 0
      %578 = vmatpush1.bf16.msra.mxu0 0
      %579 = vmatprep.subr.bf16.mxu0 0
      %580 = vmatpush1.bf16.msra.mxu0 0
      %581 = vmatprep.subr.bf16.mxu0 0
      %582 = vmatpush1.bf16.msra.mxu0 0
      %583 = vmatprep.subr.bf16.mxu0 0
      %584 = vmatpush1.bf16.msra.mxu0 0
      %585 = vmatprep.subr.bf16.mxu0 0
      %586 = vmatpush1.bf16.msra.mxu0 0
      %587 = vmatprep.subr.bf16.mxu0 0
      %588 = vmatpush1.bf16.msra.mxu0 0
      %589 = vmatprep.subr.bf16.mxu0 0
      %590 = vmatpush1.bf16.msra.mxu0 0
      %591 = vmatprep.subr.bf16.mxu0 0
      %592 = vmatpush1.bf16.msra.mxu0 %v575
      %593 = vmatprep.subr.bf16.mxu0 0
      %594 = vmatpush2.bf16.msra.mxu0 0
      %595 = vmatprep.subr.bf16.mxu0 0
      %596 = vmatpush2.bf16.msra.mxu0 0
      %597 = vmatprep.subr.bf16.mxu0 0
      %598 = vmatpush2.bf16.msra.mxu0 0
      %599 = vmatprep.subr.bf16.mxu0 0
      %600 = vmatpush2.bf16.msra.mxu0 0
      %601 = vmatprep.subr.bf16.mxu0 0
      %602 = vmatpush2.bf16.msra.mxu0 0
      %603 = vmatprep.subr.bf16.mxu0 0
      %604 = vmatpush2.bf16.msra.mxu0 0
      %605 = vmatprep.subr.bf16.mxu0 0
      %606 = vmatpush2.bf16.msra.mxu0 0
      %607 = vmatprep.subr.bf16.mxu0 0
      %608 = vmatpush2.bf16.msra.mxu0 0
      %609 = vmatprep.mubr.bf16.mxu0 0
      %610 = vmatmul.mubr.bf16.gmra.mxu0 %v568
      %v611 = vpop.f32.mrf.mxu0
      %v612 = vadd.f32 0.0, %v611
      %v613 = vpop.f32.mrf.mxu0
      %v614 = vpop.f32.mrf.mxu0
      %v615 = vadd.f32 0.0, %v614
      %v616 = vpop.f32.mrf.mxu0
      %617 = vdwg.mxu0
      %v618 = vld [vmem:[%s4] sm:$0xff]
      %v619 = vld [vmem:[%s4 + $0x8] sm:$0xff]
      %v620 = vld [vmem:[%s4 + $0x10] sm:$0xff]
      %v621 = vld [vmem:[%s4 + $0x18] sm:$0xff]
      %v622 = vpack.c.bf16 %v619, %v618
      %v623 = vpack.c.bf16 %v621, %v620
      %v624 = vld [vmem:[%s5] sm:$0xff]
      %v625 = vld [vmem:[%s5 + $0x8] sm:$0xff]
      %v626 = vld [vmem:[%s5 + $0x10] sm:$0xff]
      %v627 = vld [vmem:[%s5 + $0x18] sm:$0xff]
      %v628 = vpack.c.bf16 %v615, %v612
      %v629 = vpack.c.bf16 %v625, %v624
      %v630 = vpack.c.bf16 %v627, %v626
      %vm631 = vcmask 261120
      %v633 = vsel %vm631, %v628, 0
      %635 = vmatprep.subr.bf16.mxu0 0
      %636 = vmatpush1.bf16.msra.mxu0 0
      %637 = vmatprep.subr.bf16.mxu0 0
      %638 = vmatpush1.bf16.msra.mxu0 0
      %639 = vmatprep.subr.bf16.mxu0 0
      %640 = vmatpush1.bf16.msra.mxu0 0
      %641 = vmatprep.subr.bf16.mxu0 0
      %642 = vmatpush1.bf16.msra.mxu0 0
      %643 = vmatprep.subr.bf16.mxu0 0
      %644 = vmatpush1.bf16.msra.mxu0 0
      %645 = vmatprep.subr.bf16.mxu0 0
      %646 = vmatpush1.bf16.msra.mxu0 0
      %647 = vmatprep.subr.bf16.mxu0 0
      %648 = vmatpush1.bf16.msra.mxu0 %v630
      %649 = vmatprep.subr.bf16.mxu0 0
      %650 = vmatpush1.bf16.msra.mxu0 %v629
      %651 = vmatprep.subr.bf16.mxu0 0
      %652 = vmatpush2.bf16.msra.mxu0 0
      %653 = vmatprep.subr.bf16.mxu0 0
      %654 = vmatpush2.bf16.msra.mxu0 0
      %655 = vmatprep.subr.bf16.mxu0 0
      %656 = vmatpush2.bf16.msra.mxu0 0
      %657 = vmatprep.subr.bf16.mxu0 0
      %658 = vmatpush2.bf16.msra.mxu0 0
      %659 = vmatprep.subr.bf16.mxu0 0
      %660 = vmatpush2.bf16.msra.mxu0 0
      %661 = vmatprep.subr.bf16.mxu0 0
      %662 = vmatpush2.bf16.msra.mxu0 0
      %663 = vmatprep.subr.bf16.mxu0 0
      %664 = vmatpush2.bf16.msra.mxu0 0
      %665 = vmatprep.subr.bf16.mxu0 0
      %666 = vmatpush2.bf16.msra.mxu0 0
      %667 = vmatprep.mubr.bf16.mxu0 0
      %668 = vmatmul.mubr.bf16.gmra.mxu0 %v633
      %v669 = vpop.f32.mrf.mxu0
      %v670 = vadd.f32 0.0, %v669
      %v671 = vpop.f32.mrf.mxu0
      %v672 = vpop.f32.mrf.mxu0
      %v673 = vadd.f32 0.0, %v672
      %v674 = vpop.f32.mrf.mxu0
      %675 = vdwg.mxu0
      %v676 = vsel %vm631, %v565, 0
      %678 = vmatprep.subr.bf16.mxu0 0
      %679 = vmatpush1.bf16.msra.mxu0 0
      %680 = vmatprep.subr.bf16.mxu0 0
      %681 = vmatpush1.bf16.msra.mxu0 0
      %682 = vmatprep.subr.bf16.mxu0 0
      %683 = vmatpush1.bf16.msra.mxu0 0
      %684 = vmatprep.subr.bf16.mxu0 0
      %685 = vmatpush1.bf16.msra.mxu0 0
      %686 = vmatprep.subr.bf16.mxu0 0
      %687 = vmatpush1.bf16.msra.mxu0 0
      %688 = vmatprep.subr.bf16.mxu0 0
      %689 = vmatpush1.bf16.msra.mxu0 0
      %690 = vmatprep.subr.bf16.mxu0 0
      %691 = vmatpush1.bf16.msra.mxu0 %v623
      %692 = vmatprep.subr.bf16.mxu0 0
      %693 = vmatpush1.bf16.msra.mxu0 %v622
      %694 = vmatprep.subr.bf16.mxu0 0
      %695 = vmatpush2.bf16.msra.mxu0 0
      %696 = vmatprep.subr.bf16.mxu0 0
      %697 = vmatpush2.bf16.msra.mxu0 0
      %698 = vmatprep.subr.bf16.mxu0 0
      %699 = vmatpush2.bf16.msra.mxu0 0
      %700 = vmatprep.subr.bf16.mxu0 0
      %701 = vmatpush2.bf16.msra.mxu0 0
      %702 = vmatprep.subr.bf16.mxu0 0
      %703 = vmatpush2.bf16.msra.mxu0 0
      %704 = vmatprep.subr.bf16.mxu0 0
      %705 = vmatpush2.bf16.msra.mxu0 0
      %706 = vmatprep.subr.bf16.mxu0 0
      %707 = vmatpush2.bf16.msra.mxu0 0
      %708 = vmatprep.subr.bf16.mxu0 0
      %709 = vmatpush2.bf16.msra.mxu0 0
      %710 = vmatprep.mubr.bf16.mxu0 0
      %711 = vmatmul.mubr.bf16.gmra.mxu0 %v676
      %v712 = vpop.f32.mrf.mxu0
      %v713 = vadd.f32 %v670, %v712
      %v714 = vpop.f32.mrf.mxu0
      %v715 = vpop.f32.mrf.mxu0
      %v716 = vadd.f32 %v673, %v715
      %v717 = vpop.f32.mrf.mxu0
      %718 = vdwg.mxu0
      %v719 = vld [vmem:[%s6] sm:$0x1]
      %v721 = vlaneseq
      %v722 = vshrl.u32 %v721, 7
      %v723 = vsub.s32 0, %v722
      %v724 = vrot.slane %v719, %v723
      %v726 = vadd.f32 %v713, %v724
      %v727 = vadd.f32 %v716, %v724
      %v728 = vmax.f32 %v726, 0.0
      %v729 = vmax.f32 %v727, 0.0
      %v730 = vadd.f32 %v551, %v728
      %v731 = vadd.f32 %v552, %v729
      %732 = vst.msk [vmem:[%s542] sm:$0xff] %vm631, %v730
      %vm733 = vcmask 253952
      %734 = vst.msk [vmem:[%s542 + $0x8] sm:$0x1] %vm733, %v731
      %v735 = vld [vmem:[%s8] sm:$0xff]
      %v736 = vld [vmem:[%s8 + $0x8] sm:$0xff]
      %v737 = vld [vmem:[%s8 + $0x10] sm:$0xff]
      %v738 = vld [vmem:[%s8 + $0x18] sm:$0xff]
      %v739 = vpack.c.bf16 %v731, %v730
      %v740 = vpack.c.bf16 %v736, %v735
      %v741 = vpack.c.bf16 %v738, %v737
      %v743 = vsel %vm631, %v739, 0
      %745 = vmatprep.subr.bf16.mxu0 0
      %746 = vmatpush1.bf16.msra.mxu0 0
      %747 = vmatprep.subr.bf16.mxu0 0
      %748 = vmatpush1.bf16.msra.mxu0 0
      %749 = vmatprep.subr.bf16.mxu0 0
      %750 = vmatpush1.bf16.msra.mxu0 0
      %751 = vmatprep.subr.bf16.mxu0 0
      %752 = vmatpush1.bf16.msra.mxu0 0
      %753 = vmatprep.subr.bf16.mxu0 0
      %754 = vmatpush1.bf16.msra.mxu0 0
      %755 = vmatprep.subr.bf16.mxu0 0
      %756 = vmatpush1.bf16.msra.mxu0 0
      %757 = vmatprep.subr.bf16.mxu0 0
      %758 = vmatpush1.bf16.msra.mxu0 %v741
      %759 = vmatprep.subr.bf16.mxu0 0
      %760 = vmatpush1.bf16.msra.mxu0 %v740
      %761 = vmatprep.subr.bf16.mxu0 0
      %762 = vmatpush2.bf16.msra.mxu0 0
      %763 = vmatprep.subr.bf16.mxu0 0
      %764 = vmatpush2.bf16.msra.mxu0 0
      %765 = vmatprep.subr.bf16.mxu0 0
      %766 = vmatpush2.bf16.msra.mxu0 0
      %767 = vmatprep.subr.bf16.mxu0 0
      %768 = vmatpush2.bf16.msra.mxu0 0
      %769 = vmatprep.subr.bf16.mxu0 0
      %770 = vmatpush2.bf16.msra.mxu0 0
      %771 = vmatprep.subr.bf16.mxu0 0
      %772 = vmatpush2.bf16.msra.mxu0 0
      %773 = vmatprep.subr.bf16.mxu0 0
      %774 = vmatpush2.bf16.msra.mxu0 0
      %775 = vmatprep.subr.bf16.mxu0 0
      %776 = vmatpush2.bf16.msra.mxu0 0
      %777 = vmatprep.mubr.bf16.mxu0 0
      %778 = vmatmul.mubr.bf16.gmra.mxu0 %v743
      %v779 = vpop.f32.mrf.mxu0
      %v780 = vadd.f32 0.0, %v779
      %v781 = vpop.f32.mrf.mxu0
      %v782 = vpop.f32.mrf.mxu0
      %v783 = vadd.f32 0.0, %v782
      %v784 = vpop.f32.mrf.mxu0
      %785 = vdwg.mxu0
      %v786 = vld [vmem:[%s3] sm:$0xff]
      %v787 = vld [vmem:[%s3 + $0x8] sm:$0xff]
      %v788 = vld [vmem:[%s3 + $0x10] sm:$0xff]
      %v789 = vld [vmem:[%s3 + $0x18] sm:$0xff]
      %v790 = vld [vmem:[%s3 + $0x20] sm:$0xff]
      %v791 = vld [vmem:[%s3 + $0x28] sm:$0xff]
      %v792 = vld [vmem:[%s3 + $0x30] sm:$0xff]
      %v793 = vld [vmem:[%s3 + $0x38] sm:$0xff]
      %v794 = vld [vmem:[%s3 + $0x40] sm:$0xff]
      %v795 = vld [vmem:[%s3 + $0x48] sm:$0xff]
      %v796 = vld [vmem:[%s3 + $0x50] sm:$0x1]
      %v797 = vpack.c.bf16 %v787, %v786
      %v798 = vpack.c.bf16 %v789, %v788
      %v799 = vpack.c.bf16 %v791, %v790
      %v800 = vpack.c.bf16 %v793, %v792
      %v801 = vpack.c.bf16 %v795, %v794
      %v802 = vpack.c.bf16 %v796, %v796
      %v803 = vpack.c.bf16 %v783, %v780
      %v805 = vsel %vm566, %v797, 0
      %v808 = vsel %vm566, %v798, 0
      %v811 = vsel %vm566, %v799, 0
      %v814 = vsel %vm566, %v800, 0
      %v817 = vsel %vm566, %v801, 0
      %v820 = vsel %vm566, %v802, 0
      %v823 = vand.u32 %v803, %v573
      %825 = vmatprep.subr.bf16.mxu0 0
      %826 = vmatpush1.bf16.msra.mxu0 0
      %827 = vmatprep.subr.bf16.mxu0 0
      %828 = vmatpush1.bf16.msra.mxu0 0
      %829 = vmatprep.subr.bf16.mxu0 0
      %830 = vmatpush1.bf16.msra.mxu0 0
      %831 = vmatprep.subr.bf16.mxu0 0
      %832 = vmatpush1.bf16.msra.mxu0 0
      %833 = vmatprep.subr.bf16.mxu0 0
      %834 = vmatpush1.bf16.msra.mxu0 0
      %835 = vmatprep.subr.bf16.mxu0 0
      %836 = vmatpush1.bf16.msra.mxu0 0
      %837 = vmatprep.subr.bf16.mxu0 0
      %838 = vmatpush1.bf16.msra.mxu0 0
      %839 = vmatprep.subr.bf16.mxu0 0
      %840 = vmatpush1.bf16.msra.mxu0 %v823
      %841 = vmatprep.subr.bf16.mxu0 0
      %842 = vmatpush2.bf16.msra.mxu0 0
      %843 = vmatprep.subr.bf16.mxu0 0
      %844 = vmatpush2.bf16.msra.mxu0 0
      %845 = vmatprep.subr.bf16.mxu0 0
      %846 = vmatpush2.bf16.msra.mxu0 0
      %847 = vmatprep.subr.bf16.mxu0 0
      %848 = vmatpush2.bf16.msra.mxu0 0
      %849 = vmatprep.subr.bf16.mxu0 0
      %850 = vmatpush2.bf16.msra.mxu0 0
      %851 = vmatprep.subr.bf16.mxu0 0
      %852 = vmatpush2.bf16.msra.mxu0 0
      %853 = vmatprep.subr.bf16.mxu0 0
      %854 = vmatpush2.bf16.msra.mxu0 0
      %855 = vmatprep.subr.bf16.mxu0 0
      %856 = vmatpush2.bf16.msra.mxu0 0
      %857 = vmatprep.mubr.bf16.mxu0 0
      %858 = vmatmul.mubr.bf16.gmra.mxu0 %v805
      %v859 = vpop.f32.mrf.mxu0
      %v860 = vadd.f32 0.0, %v859
      %v861 = vpop.f32.mrf.mxu0
      %v862 = vpop.f32.mrf.mxu0
      %v863 = vadd.f32 0.0, %v862
      %v864 = vpop.f32.mrf.mxu0
      %865 = vmatprep.mubr.bf16.mxu0 0
      %866 = vmatmul.mubr.bf16.gmra.mxu0 %v808
      %v867 = vpop.f32.mrf.mxu0
      %v868 = vadd.f32 0.0, %v867
      %v869 = vpop.f32.mrf.mxu0
      %v870 = vpop.f32.mrf.mxu0
      %v871 = vadd.f32 0.0, %v870
      %v872 = vpop.f32.mrf.mxu0
      %873 = vmatprep.mubr.bf16.mxu0 0
      %874 = vmatmul.mubr.bf16.gmra.mxu0 %v811
      %v875 = vpop.f32.mrf.mxu0
      %v876 = vadd.f32 0.0, %v875
      %v877 = vpop.f32.mrf.mxu0
      %v878 = vpop.f32.mrf.mxu0
      %v879 = vadd.f32 0.0, %v878
      %v880 = vpop.f32.mrf.mxu0
      %881 = vmatprep.mubr.bf16.mxu0 0
      %882 = vmatmul.mubr.bf16.gmra.mxu0 %v814
      %v883 = vpop.f32.mrf.mxu0
      %v884 = vadd.f32 0.0, %v883
      %v885 = vpop.f32.mrf.mxu0
      %v886 = vpop.f32.mrf.mxu0
      %v887 = vadd.f32 0.0, %v886
      %v888 = vpop.f32.mrf.mxu0
      %889 = vmatprep.mubr.bf16.mxu0 0
      %890 = vmatmul.mubr.bf16.gmra.mxu0 %v817
      %v891 = vpop.f32.mrf.mxu0
      %v892 = vadd.f32 0.0, %v891
      %v893 = vpop.f32.mrf.mxu0
      %v894 = vpop.f32.mrf.mxu0
      %v895 = vadd.f32 0.0, %v894
      %v896 = vpop.f32.mrf.mxu0
      %897 = vmatprep.mubr.bf16.mxu0 0
      %898 = vmatmul.mubr.bf16.gmra.mxu0 %v820
      %v899 = vpop.f32.mrf.mxu0
      %v900 = vadd.f32 0.0, %v899
      %v901 = vpop.f32.mrf.mxu0
      %v902 = vpop.f32.mrf.mxu0
      %v903 = vpop.f32.mrf.mxu0
      %904 = vdwg.mxu0
      %v905 = vld [vmem:[%s7] sm:$0xff]
      %v906 = vld [vmem:[%s7 + $0x8] sm:$0xff]
      %v907 = vpack.c.bf16 %v554, %v553
      %v908 = vpack.c.bf16 %v556, %v555
      %v909 = vpack.c.bf16 %v558, %v557
      %v910 = vpack.c.bf16 %v560, %v559
      %v911 = vpack.c.bf16 %v562, %v561
      %v912 = vpack.c.bf16 %v563, %v563
      %v913 = vpack.c.bf16 %v906, %v905
      %vm914 = vcmask 130048
      %v916 = vsel %vm914, %v907, 0
      %v919 = vsel %vm914, %v908, 0
      %v922 = vsel %vm914, %v909, 0
      %v925 = vsel %vm914, %v910, 0
      %v928 = vsel %vm914, %v911, 0
      %v931 = vsel %vm914, %v912, 0
      %933 = vmatprep.subr.bf16.mxu0 0
      %934 = vmatpush1.bf16.msra.mxu0 0
      %935 = vmatprep.subr.bf16.mxu0 0
      %936 = vmatpush1.bf16.msra.mxu0 0
      %937 = vmatprep.subr.bf16.mxu0 0
      %938 = vmatpush1.bf16.msra.mxu0 0
      %939 = vmatprep.subr.bf16.mxu0 0
      %940 = vmatpush1.bf16.msra.mxu0 0
      %941 = vmatprep.subr.bf16.mxu0 0
      %942 = vmatpush1.bf16.msra.mxu0 0
      %943 = vmatprep.subr.bf16.mxu0 0
      %944 = vmatpush1.bf16.msra.mxu0 0
      %945 = vmatprep.subr.bf16.mxu0 0
      %946 = vmatpush1.bf16.msra.mxu0 0
      %947 = vmatprep.subr.bf16.mxu0 0
      %948 = vmatpush1.bf16.msra.mxu0 %v913
      %949 = vmatprep.subr.bf16.mxu0 0
      %950 = vmatpush2.bf16.msra.mxu0 0
      %951 = vmatprep.subr.bf16.mxu0 0
      %952 = vmatpush2.bf16.msra.mxu0 0
      %953 = vmatprep.subr.bf16.mxu0 0
      %954 = vmatpush2.bf16.msra.mxu0 0
      %955 = vmatprep.subr.bf16.mxu0 0
      %956 = vmatpush2.bf16.msra.mxu0 0
      %957 = vmatprep.subr.bf16.mxu0 0
      %958 = vmatpush2.bf16.msra.mxu0 0
      %959 = vmatprep.subr.bf16.mxu0 0
      %960 = vmatpush2.bf16.msra.mxu0 0
      %961 = vmatprep.subr.bf16.mxu0 0
      %962 = vmatpush2.bf16.msra.mxu0 0
      %963 = vmatprep.subr.bf16.mxu0 0
      %964 = vmatpush2.bf16.msra.mxu0 0
      %965 = vmatprep.mubr.bf16.mxu0 0
      %966 = vmatmul.mubr.bf16.gmra.mxu0 %v916
      %v967 = vpop.f32.mrf.mxu0
      %v968 = vadd.f32 %v860, %v967
      %v969 = vpop.f32.mrf.mxu0
      %v970 = vpop.f32.mrf.mxu0
      %v971 = vadd.f32 %v863, %v970
      %v972 = vpop.f32.mrf.mxu0
      %973 = vmatprep.mubr.bf16.mxu0 0
      %974 = vmatmul.mubr.bf16.gmra.mxu0 %v919
      %v975 = vpop.f32.mrf.mxu0
      %v976 = vadd.f32 %v868, %v975
      %v977 = vpop.f32.mrf.mxu0
      %v978 = vpop.f32.mrf.mxu0
      %v979 = vadd.f32 %v871, %v978
      %v980 = vpop.f32.mrf.mxu0
      %981 = vmatprep.mubr.bf16.mxu0 0
      %982 = vmatmul.mubr.bf16.gmra.mxu0 %v922
      %v983 = vpop.f32.mrf.mxu0
      %v984 = vadd.f32 %v876, %v983
      %v985 = vpop.f32.mrf.mxu0
      %v986 = vpop.f32.mrf.mxu0
      %v987 = vadd.f32 %v879, %v986
      %v988 = vpop.f32.mrf.mxu0
      %989 = vmatprep.mubr.bf16.mxu0 0
      %990 = vmatmul.mubr.bf16.gmra.mxu0 %v925
      %v991 = vpop.f32.mrf.mxu0
      %v992 = vadd.f32 %v884, %v991
      %v993 = vpop.f32.mrf.mxu0
      %v994 = vpop.f32.mrf.mxu0
      %v995 = vadd.f32 %v887, %v994
      %v996 = vpop.f32.mrf.mxu0
      %997 = vmatprep.mubr.bf16.mxu0 0
      %998 = vmatmul.mubr.bf16.gmra.mxu0 %v928
      %v999 = vpop.f32.mrf.mxu0
      %v1000 = vadd.f32 %v892, %v999
      %v1001 = vpop.f32.mrf.mxu0
      %v1002 = vpop.f32.mrf.mxu0
      %v1003 = vadd.f32 %v895, %v1002
      %v1004 = vpop.f32.mrf.mxu0
      %1005 = vmatprep.mubr.bf16.mxu0 0
      %1006 = vmatmul.mubr.bf16.gmra.mxu0 %v931
      %v1007 = vpop.f32.mrf.mxu0
      %v1008 = vadd.f32 %v900, %v1007
      %v1009 = vpop.f32.mrf.mxu0
      %v1010 = vpop.f32.mrf.mxu0
      %v1011 = vpop.f32.mrf.mxu0
      %1012 = vdwg.mxu0
      %v1013 = vld [vmem:[%s9] sm:$0x1]
      %v1015 = vlaneseq
      %v1016 = vshrl.u32 %v1015, 7
      %v1017 = vsub.s32 0, %v1016
      %v1018 = vrot.slane %v1013, %v1017
      %v1020 = vadd.f32 %v968, %v1018
      %v1021 = vadd.f32 %v971, %v1018
      %v1022 = vadd.f32 %v976, %v1018
      %v1023 = vadd.f32 %v979, %v1018
      %v1024 = vadd.f32 %v984, %v1018
      %v1025 = vadd.f32 %v987, %v1018
      %v1026 = vadd.f32 %v992, %v1018
      %v1027 = vadd.f32 %v995, %v1018
      %v1028 = vadd.f32 %v1000, %v1018
      %v1029 = vadd.f32 %v1003, %v1018
      %v1030 = vadd.f32 %v1008, %v1018
      %v1031 = vmax.f32 %v1020, 0.0
      %v1032 = vmax.f32 %v1021, 0.0
      %v1033 = vmax.f32 %v1022, 0.0
      %v1034 = vmax.f32 %v1023, 0.0
      %v1035 = vmax.f32 %v1024, 0.0
      %v1036 = vmax.f32 %v1025, 0.0
      %v1037 = vmax.f32 %v1026, 0.0
      %v1038 = vmax.f32 %v1027, 0.0
      %v1039 = vmax.f32 %v1028, 0.0
      %v1040 = vmax.f32 %v1029, 0.0
      %v1041 = vmax.f32 %v1030, 0.0
      %v1042 = vadd.f32 %v553, %v1031
      %v1043 = vadd.f32 %v554, %v1032
      %v1044 = vadd.f32 %v555, %v1033
      %v1045 = vadd.f32 %v556, %v1034
      %v1046 = vadd.f32 %v557, %v1035
      %v1047 = vadd.f32 %v558, %v1036
      %v1048 = vadd.f32 %v559, %v1037
      %v1049 = vadd.f32 %v560, %v1038
      %v1050 = vadd.f32 %v561, %v1039
      %v1051 = vadd.f32 %v562, %v1040
      %v1052 = vadd.f32 %v563, %v1041
      %v1053 = vld [vmem:[%s10] sm:$0xff]
      %v1054 = vld [vmem:[%s10 + $0x8] sm:$0xff]
      %v1055 = vpack.c.bf16 %v1043, %v1042
      %v1056 = vpack.c.bf16 %v1045, %v1044
      %v1057 = vpack.c.bf16 %v1047, %v1046
      %v1058 = vpack.c.bf16 %v1049, %v1048
      %v1059 = vpack.c.bf16 %v1051, %v1050
      %v1060 = vpack.c.bf16 %v1052, %v1052
      %v1061 = vpack.c.bf16 %v1054, %v1053
      %v1062 = vld [vmem:[%s11] sm:$0x1]
      %v1064 = vlaneseq
      %v1065 = vshrl.u32 %v1064, 7
      %v1066 = vsub.s32 0, %v1065
      %v1067 = vrot.slane %v1062, %v1066
      %v1070 = vsel %vm914, %v1055, 0
      %v1073 = vsel %vm914, %v1056, 0
      %v1076 = vsel %vm914, %v1057, 0
      %v1079 = vsel %vm914, %v1058, 0
      %v1082 = vsel %vm914, %v1059, 0
      %v1085 = vsel %vm914, %v1060, 0
      %1087 = vmatprep.subr.bf16.mxu0 0
      %1088 = vmatpush1.bf16.msra.mxu0 0
      %1089 = vmatprep.subr.bf16.mxu0 0
      %1090 = vmatpush1.bf16.msra.mxu0 0
      %1091 = vmatprep.subr.bf16.mxu0 0
      %1092 = vmatpush1.bf16.msra.mxu0 0
      %1093 = vmatprep.subr.bf16.mxu0 0
      %1094 = vmatpush1.bf16.msra.mxu0 0
      %1095 = vmatprep.subr.bf16.mxu0 0
      %1096 = vmatpush1.bf16.msra.mxu0 0
      %1097 = vmatprep.subr.bf16.mxu0 0
      %1098 = vmatpush1.bf16.msra.mxu0 0
      %1099 = vmatprep.subr.bf16.mxu0 0
      %1100 = vmatpush1.bf16.msra.mxu0 0
      %1101 = vmatprep.subr.bf16.mxu0 0
      %1102 = vmatpush1.bf16.msra.mxu0 %v1061
      %1103 = vmatprep.subr.bf16.mxu0 0
      %1104 = vmatpush2.bf16.msra.mxu0 0
      %1105 = vmatprep.subr.bf16.mxu0 0
      %1106 = vmatpush2.bf16.msra.mxu0 0
      %1107 = vmatprep.subr.bf16.mxu0 0
      %1108 = vmatpush2.bf16.msra.mxu0 0
      %1109 = vmatprep.subr.bf16.mxu0 0
      %1110 = vmatpush2.bf16.msra.mxu0 0
      %1111 = vmatprep.subr.bf16.mxu0 0
      %1112 = vmatpush2.bf16.msra.mxu0 0
      %1113 = vmatprep.subr.bf16.mxu0 0
      %1114 = vmatpush2.bf16.msra.mxu0 0
      %1115 = vmatprep.subr.bf16.mxu0 0
      %1116 = vmatpush2.bf16.msra.mxu0 0
      %1117 = vmatprep.subr.bf16.mxu0 0
      %1118 = vmatpush2.bf16.msra.mxu0 0
      %1119 = vmatprep.mubr.bf16.mxu0 0
      %1120 = vmatmul.mubr.bf16.gmra.mxu0 %v1070
      %v1121 = vpop.f32.mrf.mxu0
      %v1122 = vadd.f32 %v1067, %v1121
      %v1123 = vpop.f32.mrf.mxu0
      %v1124 = vpop.f32.mrf.mxu0
      %v1125 = vadd.f32 %v1067, %v1124
      %v1126 = vpop.f32.mrf.mxu0
      %1127 = vmatprep.mubr.bf16.mxu0 0
      %1128 = vmatmul.mubr.bf16.gmra.mxu0 %v1073
      %v1129 = vpop.f32.mrf.mxu0
      %v1130 = vadd.f32 %v1067, %v1129
      %v1131 = vpop.f32.mrf.mxu0
      %v1132 = vpop.f32.mrf.mxu0
      %v1133 = vadd.f32 %v1067, %v1132
      %v1134 = vpop.f32.mrf.mxu0
      %1135 = vmatprep.mubr.bf16.mxu0 0
      %1136 = vmatmul.mubr.bf16.gmra.mxu0 %v1076
      %v1137 = vpop.f32.mrf.mxu0
      %v1138 = vadd.f32 %v1067, %v1137
      %v1139 = vpop.f32.mrf.mxu0
      %v1140 = vpop.f32.mrf.mxu0
      %v1141 = vadd.f32 %v1067, %v1140
      %v1142 = vpop.f32.mrf.mxu0
      %1143 = vmatprep.mubr.bf16.mxu0 0
      %1144 = vmatmul.mubr.bf16.gmra.mxu0 %v1079
      %v1145 = vpop.f32.mrf.mxu0
      %v1146 = vadd.f32 %v1067, %v1145
      %v1147 = vpop.f32.mrf.mxu0
      %v1148 = vpop.f32.mrf.mxu0
      %v1149 = vadd.f32 %v1067, %v1148
      %v1150 = vpop.f32.mrf.mxu0
      %1151 = vmatprep.mubr.bf16.mxu0 0
      %1152 = vmatmul.mubr.bf16.gmra.mxu0 %v1082
      %v1153 = vpop.f32.mrf.mxu0
      %v1154 = vadd.f32 %v1067, %v1153
      %v1155 = vpop.f32.mrf.mxu0
      %v1156 = vpop.f32.mrf.mxu0
      %v1157 = vadd.f32 %v1067, %v1156
      %v1158 = vpop.f32.mrf.mxu0
      %1159 = vmatprep.mubr.bf16.mxu0 0
      %1160 = vmatmul.mubr.bf16.gmra.mxu0 %v1085
      %v1161 = vpop.f32.mrf.mxu0
      %v1162 = vadd.f32 %v1067, %v1161
      %v1163 = vpop.f32.mrf.mxu0
      %v1164 = vpop.f32.mrf.mxu0
      %v1165 = vpop.f32.mrf.mxu0
      %1166 = vdwg.mxu0
      %v1167 = vmax.f32 %v1122, 0.0
      %v1168 = vmax.f32 %v1125, 0.0
      %v1169 = vmax.f32 %v1130, 0.0
      %v1170 = vmax.f32 %v1133, 0.0
      %v1171 = vmax.f32 %v1138, 0.0
      %v1172 = vmax.f32 %v1141, 0.0
      %v1173 = vmax.f32 %v1146, 0.0
      %v1174 = vmax.f32 %v1149, 0.0
      %v1175 = vmax.f32 %v1154, 0.0
      %v1176 = vmax.f32 %v1157, 0.0
      %v1177 = vmax.f32 %v1162, 0.0
      %v1178 = vld [vmem:[%s12] sm:$0xff]
      %v1179 = vld [vmem:[%s12 + $0x8] sm:$0xff]
      %v1180 = vpack.c.bf16 %v1168, %v1167
      %v1181 = vpack.c.bf16 %v1170, %v1169
      %v1182 = vpack.c.bf16 %v1172, %v1171
      %v1183 = vpack.c.bf16 %v1174, %v1173
      %v1184 = vpack.c.bf16 %v1176, %v1175
      %v1185 = vpack.c.bf16 %v1177, %v1177
      %v1186 = vpack.c.bf16 %v1179, %v1178
      %v1187 = vld [vmem:[%s13] sm:$0x1]
      %v1189 = vlaneseq
      %v1190 = vshrl.u32 %v1189, 7
      %v1191 = vsub.s32 0, %v1190
      %v1192 = vrot.slane %v1187, %v1191
      %v1195 = vsel %vm914, %v1180, 0
      %v1198 = vsel %vm914, %v1181, 0
      %v1201 = vsel %vm914, %v1182, 0
      %v1204 = vsel %vm914, %v1183, 0
      %v1207 = vsel %vm914, %v1184, 0
      %v1210 = vsel %vm914, %v1185, 0
      %1212 = vmatprep.subr.bf16.mxu0 0
      %1213 = vmatpush1.bf16.msra.mxu0 0
      %1214 = vmatprep.subr.bf16.mxu0 0
      %1215 = vmatpush1.bf16.msra.mxu0 0
      %1216 = vmatprep.subr.bf16.mxu0 0
      %1217 = vmatpush1.bf16.msra.mxu0 0
      %1218 = vmatprep.subr.bf16.mxu0 0
      %1219 = vmatpush1.bf16.msra.mxu0 0
      %1220 = vmatprep.subr.bf16.mxu0 0
      %1221 = vmatpush1.bf16.msra.mxu0 0
      %1222 = vmatprep.subr.bf16.mxu0 0
      %1223 = vmatpush1.bf16.msra.mxu0 0
      %1224 = vmatprep.subr.bf16.mxu0 0
      %1225 = vmatpush1.bf16.msra.mxu0 0
      %1226 = vmatprep.subr.bf16.mxu0 0
      %1227 = vmatpush1.bf16.msra.mxu0 %v1186
      %1228 = vmatprep.subr.bf16.mxu0 0
      %1229 = vmatpush2.bf16.msra.mxu0 0
      %1230 = vmatprep.subr.bf16.mxu0 0
      %1231 = vmatpush2.bf16.msra.mxu0 0
      %1232 = vmatprep.subr.bf16.mxu0 0
      %1233 = vmatpush2.bf16.msra.mxu0 0
      %1234 = vmatprep.subr.bf16.mxu0 0
      %1235 = vmatpush2.bf16.msra.mxu0 0
      %1236 = vmatprep.subr.bf16.mxu0 0
      %1237 = vmatpush2.bf16.msra.mxu0 0
      %1238 = vmatprep.subr.bf16.mxu0 0
      %1239 = vmatpush2.bf16.msra.mxu0 0
      %1240 = vmatprep.subr.bf16.mxu0 0
      %1241 = vmatpush2.bf16.msra.mxu0 0
      %1242 = vmatprep.subr.bf16.mxu0 0
      %1243 = vmatpush2.bf16.msra.mxu0 0
      %1244 = vmatprep.mubr.bf16.mxu0 0
      %1245 = vmatmul.mubr.bf16.gmra.mxu0 %v1195
      %v1246 = vpop.f32.mrf.mxu0
      %v1247 = vadd.f32 %v1192, %v1246
      %v1248 = vpop.f32.mrf.mxu0
      %v1249 = vpop.f32.mrf.mxu0
      %v1250 = vadd.f32 %v1192, %v1249
      %v1251 = vpop.f32.mrf.mxu0
      %1252 = vmatprep.mubr.bf16.mxu0 0
      %1253 = vmatmul.mubr.bf16.gmra.mxu0 %v1198
      %v1254 = vpop.f32.mrf.mxu0
      %v1255 = vadd.f32 %v1192, %v1254
      %v1256 = vpop.f32.mrf.mxu0
      %v1257 = vpop.f32.mrf.mxu0
      %v1258 = vadd.f32 %v1192, %v1257
      %v1259 = vpop.f32.mrf.mxu0
      %1260 = vmatprep.mubr.bf16.mxu0 0
      %1261 = vmatmul.mubr.bf16.gmra.mxu0 %v1201
      %v1262 = vpop.f32.mrf.mxu0
      %v1263 = vadd.f32 %v1192, %v1262
      %v1264 = vpop.f32.mrf.mxu0
      %v1265 = vpop.f32.mrf.mxu0
      %v1266 = vadd.f32 %v1192, %v1265
      %v1267 = vpop.f32.mrf.mxu0
      %1268 = vmatprep.mubr.bf16.mxu0 0
      %1269 = vmatmul.mubr.bf16.gmra.mxu0 %v1204
      %v1270 = vpop.f32.mrf.mxu0
      %v1271 = vadd.f32 %v1192, %v1270
      %v1272 = vpop.f32.mrf.mxu0
      %v1273 = vpop.f32.mrf.mxu0
      %v1274 = vadd.f32 %v1192, %v1273
      %v1275 = vpop.f32.mrf.mxu0
      %1276 = vmatprep.mubr.bf16.mxu0 0
      %1277 = vmatmul.mubr.bf16.gmra.mxu0 %v1207
      %v1278 = vpop.f32.mrf.mxu0
      %v1279 = vadd.f32 %v1192, %v1278
      %v1280 = vpop.f32.mrf.mxu0
      %v1281 = vpop.f32.mrf.mxu0
      %v1282 = vadd.f32 %v1192, %v1281
      %v1283 = vpop.f32.mrf.mxu0
      %1284 = vmatprep.mubr.bf16.mxu0 0
      %1285 = vmatmul.mubr.bf16.gmra.mxu0 %v1210
      %v1286 = vpop.f32.mrf.mxu0
      %v1287 = vadd.f32 %v1192, %v1286
      %v1288 = vpop.f32.mrf.mxu0
      %v1289 = vpop.f32.mrf.mxu0
      %v1290 = vpop.f32.mrf.mxu0
      %1291 = vdwg.mxu0
      %vm1292 = vcmask 15360
      %v1293 = vsel %vm1292, %v1247, -inf
      %1294 = vmax.xlane.f32.xlu0 %v1293
      %v1295 = vpop.xlane.xlu0 %1294
      %v1296 = vsel %vm1292, %v1250, -inf
      %1297 = vmax.xlane.f32.xlu0 %v1296
      %v1298 = vpop.xlane.xlu0 %1297
      %v1299 = vsel %vm1292, %v1255, -inf
      %1300 = vmax.xlane.f32.xlu0 %v1299
      %v1301 = vpop.xlane.xlu0 %1300
      %v1302 = vsel %vm1292, %v1258, -inf
      %1303 = vmax.xlane.f32.xlu0 %v1302
      %v1304 = vpop.xlane.xlu0 %1303
      %v1305 = vsel %vm1292, %v1263, -inf
      %1306 = vmax.xlane.f32.xlu0 %v1305
      %v1307 = vpop.xlane.xlu0 %1306
      %v1308 = vsel %vm1292, %v1266, -inf
      %1309 = vmax.xlane.f32.xlu0 %v1308
      %v1310 = vpop.xlane.xlu0 %1309
      %v1311 = vsel %vm1292, %v1271, -inf
      %1312 = vmax.xlane.f32.xlu0 %v1311
      %v1313 = vpop.xlane.xlu0 %1312
      %v1314 = vsel %vm1292, %v1274, -inf
      %1315 = vmax.xlane.f32.xlu0 %v1314
      %v1316 = vpop.xlane.xlu0 %1315
      %v1317 = vsel %vm1292, %v1279, -inf
      %1318 = vmax.xlane.f32.xlu0 %v1317
      %v1319 = vpop.xlane.xlu0 %1318
      %v1320 = vsel %vm1292, %v1282, -inf
      %1321 = vmax.xlane.f32.xlu0 %v1320
      %v1322 = vpop.xlane.xlu0 %1321
      %vm1323 = vcmask 8192
      %v1324 = vsel %vm1323, %v1287, -inf
      %1325 = vmax.xlane.f32.xlu0 %v1324
      %v1326 = vpop.xlane.xlu0 %1325
      %v1327 = vsub.f32 %v1247, %v1295
      %v1328 = vsub.f32 %v1250, %v1298
      %v1329 = vsub.f32 %v1255, %v1301
      %v1330 = vsub.f32 %v1258, %v1304
      %v1331 = vsub.f32 %v1263, %v1307
      %v1332 = vsub.f32 %v1266, %v1310
      %v1333 = vsub.f32 %v1271, %v1313
      %v1334 = vsub.f32 %v1274, %v1316
      %v1335 = vsub.f32 %v1279, %v1319
      %v1336 = vsub.f32 %v1282, %v1322
      %v1337 = vsub.f32 %v1287, %v1326
      %v1338 = vmul.f32 %v1327, 1.442695
      %v1339 = vpow.pop %v1338
      %v1340 = vmul.f32 %v1328, 1.442695
      %v1341 = vpow.pop %v1340
      %v1342 = vmul.f32 %v1329, 1.442695
      %v1343 = vpow.pop %v1342
      %v1344 = vmul.f32 %v1330, 1.442695
      %v1345 = vpow.pop %v1344
      %v1346 = vmul.f32 %v1331, 1.442695
      %v1347 = vpow.pop %v1346
      %v1348 = vmul.f32 %v1332, 1.442695
      %v1349 = vpow.pop %v1348
      %v1350 = vmul.f32 %v1333, 1.442695
      %v1351 = vpow.pop %v1350
      %v1352 = vmul.f32 %v1334, 1.442695
      %v1353 = vpow.pop %v1352
      %v1354 = vmul.f32 %v1335, 1.442695
      %v1355 = vpow.pop %v1354
      %v1356 = vmul.f32 %v1336, 1.442695
      %v1357 = vpow.pop %v1356
      %v1358 = vmul.f32 %v1337, 1.442695
      %v1359 = vpow.pop %v1358
      %v1360 = vsel %vm1292, %v1339, 0.0
      %1361 = vadd.xlane.f32.xlu0 %v1360
      %v1362 = vpop.xlane.xlu0 %1361
      %v1363 = vsel %vm1292, %v1341, 0.0
      %1364 = vadd.xlane.f32.xlu0 %v1363
      %v1365 = vpop.xlane.xlu0 %1364
      %v1366 = vsel %vm1292, %v1343, 0.0
      %1367 = vadd.xlane.f32.xlu0 %v1366
      %v1368 = vpop.xlane.xlu0 %1367
      %v1369 = vsel %vm1292, %v1345, 0.0
      %1370 = vadd.xlane.f32.xlu0 %v1369
      %v1371 = vpop.xlane.xlu0 %1370
      %v1372 = vsel %vm1292, %v1347, 0.0
      %1373 = vadd.xlane.f32.xlu0 %v1372
      %v1374 = vpop.xlane.xlu0 %1373
      %v1375 = vsel %vm1292, %v1349, 0.0
      %1376 = vadd.xlane.f32.xlu0 %v1375
      %v1377 = vpop.xlane.xlu0 %1376
      %v1378 = vsel %vm1292, %v1351, 0.0
      %1379 = vadd.xlane.f32.xlu0 %v1378
      %v1380 = vpop.xlane.xlu0 %1379
      %v1381 = vsel %vm1292, %v1353, 0.0
      %1382 = vadd.xlane.f32.xlu0 %v1381
      %v1383 = vpop.xlane.xlu0 %1382
      %v1384 = vsel %vm1292, %v1355, 0.0
      %1385 = vadd.xlane.f32.xlu0 %v1384
      %v1386 = vpop.xlane.xlu0 %1385
      %v1387 = vsel %vm1292, %v1357, 0.0
      %1388 = vadd.xlane.f32.xlu0 %v1387
      %v1389 = vpop.xlane.xlu0 %1388
      %v1390 = vsel %vm1323, %v1359, 0.0
      %1391 = vadd.xlane.f32.xlu0 %v1390
      %v1392 = vpop.xlane.xlu0 %1391
      %v1393 = vrcp.pop %v1362
      %v1394 = vmul.f32 %v1339, %v1393
      %v1395 = vrcp.pop %v1365
      %v1396 = vmul.f32 %v1341, %v1395
      %v1397 = vrcp.pop %v1368
      %v1398 = vmul.f32 %v1343, %v1397
      %v1399 = vrcp.pop %v1371
      %v1400 = vmul.f32 %v1345, %v1399
      %v1401 = vrcp.pop %v1374
      %v1402 = vmul.f32 %v1347, %v1401
      %v1403 = vrcp.pop %v1377
      %v1404 = vmul.f32 %v1349, %v1403
      %v1405 = vrcp.pop %v1380
      %v1406 = vmul.f32 %v1351, %v1405
      %v1407 = vrcp.pop %v1383
      %v1408 = vmul.f32 %v1353, %v1407
      %v1409 = vrcp.pop %v1386
      %v1410 = vmul.f32 %v1355, %v1409
      %v1411 = vrcp.pop %v1389
      %v1412 = vmul.f32 %v1357, %v1411
      %v1413 = vrcp.pop %v1392
      %v1414 = vmul.f32 %v1359, %v1413
      %1415 = vst.msk [vmem:[%s547] sm:$0xff] %vm1292, %v1394
      %1416 = vst.msk [vmem:[%s547 + $0x8] sm:$0xff] %vm1292, %v1396
      %1417 = vst.msk [vmem:[%s547 + $0x10] sm:$0xff] %vm1292, %v1398
      %1418 = vst.msk [vmem:[%s547 + $0x18] sm:$0xff] %vm1292, %v1400
      %1419 = vst.msk [vmem:[%s547 + $0x20] sm:$0xff] %vm1292, %v1402
      %1420 = vst.msk [vmem:[%s547 + $0x28] sm:$0xff] %vm1292, %v1404
      %1421 = vst.msk [vmem:[%s547 + $0x30] sm:$0xff] %vm1292, %v1406
      %1422 = vst.msk [vmem:[%s547 + $0x38] sm:$0xff] %vm1292, %v1408
      %1423 = vst.msk [vmem:[%s547 + $0x40] sm:$0xff] %vm1292, %v1410
      %1424 = vst.msk [vmem:[%s547 + $0x48] sm:$0xff] %vm1292, %v1412
      %1425 = vst.msk [vmem:[%s547 + $0x50] sm:$0x1] %vm1323, %v1414
      %p1426 = scmp.lt.s32.totalorder %s27, 1
      %s1427 = scalar_select %p1426, %s27, 1
      %s1428 = smul.addr %s1427, 2
      %s1429 = smul.addr %s1428, 8
      %s1430 = scalar_lea.vmem %s14, %s1429
      %p1431 = scmp.lt.s32.totalorder %s27, 1
      %s1432 = scalar_select %p1431, %s27, 1
      %s1433 = smul.addr %s1432, 11
      %s1434 = smul.addr %s1433, 8
      %s1435 = scalar_lea.vmem %s15, %s1434
      // Predicated region
      $region77: #{_forward_impl.5} parent=75 // pred_check
        %p1436 = pneg %p354
      $region78: #{_forward_impl.5} parent=75 // pred_check_branch
        %1438 = sbr.rel (%p1436) target = $region80
      $region79: #{_forward_impl.5} parent=75 // pred_region
        _
      $region80: #{_forward_impl.5} parent=75 // pred_fallthru
        _
      // Predicated region
      $region81: #{_forward_impl.5} parent=75 // pred_check
        %p1439 = pneg %p380
      $region82: #{_forward_impl.5} parent=75 // pred_check_branch
        %1441 = sbr.rel (%p1439) target = $region84
      $region83: #{_forward_impl.5} parent=75 // pred_region
        _
      $region84: #{_forward_impl.5} parent=75 // pred_fallthru
        _
    $region76: #{_forward_impl.5} parent=5 // pred_fallthru
      _
    %p1442 = scmp.le.s32.totalorder 2, %s22
    // Predicated region
    $region85: #{_forward_impl.5} parent=5 // pred_check
      %p1443 = pneg %p1442
    $region86: #{_forward_impl.5} parent=5 // pred_check_branch
      %1445 = sbr.rel (%p1443) target = $region88
    $region87: #{_forward_impl.5} parent=5 // pred_region
      %s1446 = ssub.s32 %s22, 2
      // Predicated region
      $region89: #{_forward_impl.5} parent=87 // pred_check
        %p1447 = pneg %p360
      $region90: #{_forward_impl.5} parent=87 // pred_check_branch
        %1449 = sbr.rel (%p1447) target = $region92
      $region91: #{_forward_impl.5} parent=87 // pred_region
        %p1450 = scmp.lt.s32.totalorder %s28, 1
        %s1451 = scalar_select %p1450, %s28, 1
        %s1452 = smul.addr %s1451, 2
        %s1453 = smul.addr %s1452, 8
        %s1454 = scalar_lea.vmem %s14, %s1453
      $region92: #{_forward_impl.5} parent=87 // pred_fallthru
        _
      // Predicated region
      $region93: #{_forward_impl.5} parent=87 // pred_check
        %p1455 = pneg %p386
      $region94: #{_forward_impl.5} parent=87 // pred_check_branch
        %1457 = sbr.rel (%p1455) target = $region96
      $region95: #{_forward_impl.5} parent=87 // pred_region
        %p1458 = scmp.lt.s32.totalorder %s28, 1
        %s1459 = scalar_select %p1458, %s28, 1
        %s1460 = smul.addr %s1459, 11
        %s1461 = smul.addr %s1460, 8
        %s1462 = scalar_lea.vmem %s15, %s1461
      $region96: #{_forward_impl.5} parent=87 // pred_fallthru
        _
    $region88: #{_forward_impl.5} parent=5 // pred_fallthru
      _
  $region6: #{_forward_impl.5} parent=0 // loop_footer
    %s26 = sadd.s32 1, %s22
  $region7: #{_forward_impl.5} parent=0 // loop_footer_branch
    %21 = sbr.rel target = $region3
  $region8: #{_forward_impl.5} parent=0 // loop_exit
    _

// kernel: _forward_impl.7
$region0: #{_forward_impl.7}
  #allocation0 [shape = 'u32[]', space=smem, size = 0x4, offset = 0x4, fixed_abs, tag = 'smem constant byte address 0x4 - core index']
  #allocation1 [shape = 'u32[144,128]{1,0:T(1,128)}', space=vmem, size = 0x12000, scoped, tag = 'internal scratch']
  #allocation2 [shape = 'f32[2,2,32]{2,1,0:T(2,128)}', space=vmem, size = 0x800, scoped, tag = 'scratch operand']
  #allocation3 [shape = 'f32[2,9]{1,0:T(2,128)}', space=vmem, size = 0x400, scoped, tag = 'scratch operand']
  #allocation4 [shape = 'f32[2,9]{1,0:T(2,128)}', space=vmem, size = 0x400, scoped, tag = 'scratch operand']
  %s0 = inlined_call_operand.vmem [shape: f32[2,9,32], index: 0, kind: input, shape index: {}]
  %s1 = inlined_call_operand.vmem [shape: f32[2,9,32], index: 1, kind: input, shape index: {}]
  %s2 = inlined_call_operand.vmem [shape: f32[2,8,2,9], index: 2, kind: input, shape index: {}]
  %s3 = inlined_call_operand.vmem [shape: f32[32,32], index: 3, kind: input, shape index: {}]
  %s4 = inlined_call_operand.vmem [shape: f32[1,32], index: 4, kind: input, shape index: {}]
  %s5 = inlined_call_operand.vmem [shape: f32[64,192], index: 5, kind: input, shape index: {}]
  %s6 = inlined_call_operand.vmem [shape: f32[1,192], index: 6, kind: input, shape index: {}]
  %s7 = inlined_call_operand.vmem [shape: f32[64,192], index: 7, kind: input, shape index: {}]
  %s8 = inlined_call_operand.vmem [shape: f32[1,192], index: 8, kind: input, shape index: {}]
  %s9 = inlined_call_operand.vmem [shape: s32[2,8,2,1], index: 9, kind: output, shape index: {0}]
  %s10 = inlined_call_operand.vmem [shape: f32[2,2,1], index: 10, kind: output, shape index: {1}]
  %11 = xla_tuple %s9, %s10
  %s12 = sld [smem:[#allocation0]]
  $region81: #{_forward_impl.7} parent=0
    _
  %s14 = ssub.s32 1, %s12
  %s15 = scalar_select 0, %s14, %s12
  loop: start=0, step=1, limit=18
  $region2: #{_forward_impl.7} parent=0 // loop_pre_header
    _
  $region3: #{_forward_impl.7} parent=0 // loop_header
    %s17 = sphi 0, %s21
    %p18 = scmp.ge.s32.totalorder %s17, 18
    %s24 = sphi 0, %s36
    %s25 = sphi 0, %s32
    %s26 = sphi 0, %s24
    %s27 = sphi 0, %s25
    %s28 = sphi 0, %s26
    %s29 = sphi 0, %s27
    %s37 = sphi 0, %s37
    %s39 = sphi 0, %s37
    %s40 = sphi 0, %s39
    %s54 = sphi 0, %s40
    %s58 = sphi 0, %s58
    %s60 = sphi 0, %s58
    %s61 = sphi 0, %s60
    %s75 = sphi 0, %s61
    %s83 = sphi 0, %s85
    %s86 = sphi 0, %s83
    %s87 = sphi 0, %s86
    %s103 = sphi 0, %s87
    %s107 = sphi 0, %s107
    %s109 = sphi 0, %s107
    %s110 = sphi 0, %s109
    %s124 = sphi 0, %s110
    %s128 = sphi 0, %s128
    %s130 = sphi 0, %s128
    %s131 = sphi 0, %s130
    %s145 = sphi 0, %s131
    %s149 = sphi 0, %s149
    %s151 = sphi 0, %s149
    %s152 = sphi 0, %s151
    %s166 = sphi 0, %s152
    %s170 = sphi 0, %s170
    %s172 = sphi 0, %s170
    %s173 = sphi 0, %s172
    %s187 = sphi 0, %s173
    %s191 = sphi 0, %s191
    %s193 = sphi 0, %s191
    %s194 = sphi 0, %s193
    %s208 = sphi 0, %s194
    %s212 = sphi 0, %s212
    %s214 = sphi 0, %s212
    %s215 = sphi 0, %s214
    %s229 = sphi 0, %s215
    %s237 = sphi 0, %s239
    %s240 = sphi 0, %s237
    %s241 = sphi 0, %s240
    %s257 = sphi 0, %s241
    %s263 = sphi 0, %s265
    %s266 = sphi 0, %s263
    %s267 = sphi 0, %s266
    %s283 = sphi 0, %s267
  $region4: #{_forward_impl.7} parent=0 // loop_header_branch
    %20 = sbr.rel (%p18) target = $region8
  $region5: #{_forward_impl.7} parent=0 // loop_body
    %s22 = ssub.s32 %s17, 1
    %s23 = ssub.s32 %s17, 2
    %s30 = sadd.s32 1, %s25
    %p31 = scmp.ge.s32.totalorder %s30, 8
    %s32 = scalar_select %p31, 0, %s30
    %s33 = sadd.s32 1, %s24
    %s34 = scalar_select %p31, %s33, %s24
    %p35 = scmp.ge.s32.totalorder %s34, 2
    %s36 = scalar_select %p35, 0, %s34
    %s38 = sadd.s32 %s37, 1
    %p41 = scmp.eq.s32.totalorder %s17, 15
    %p42 = scmp.ne.s32.totalorder %s37, %s39
    %p43 = scmp.eq.s32.totalorder %s17, 0
    %p44 = por %p42, %p43
    %p45 = scmp.ne.s32.totalorder %s37, %s39
    %p46 = scmp.eq.s32.totalorder %s22, 15
    %p47 = por %p45, %p46
    %p48 = scmp.ne.s32.totalorder %s39, %s40
    %p49 = scmp.eq.s32.totalorder %s22, 0
    %p50 = por %p48, %p49
    %p51 = scmp.ne.s32.totalorder %s39, %s40
    %p52 = scmp.eq.s32.totalorder %s23, 15
    %p53 = por %p51, %p52
    %p55 = scmp.ne.s32.totalorder %s40, %s54
    %p56 = scmp.eq.s32.totalorder %s23, 0
    %p57 = por %p55, %p56
    %s59 = sadd.s32 %s58, 1
    %p62 = scmp.eq.s32.totalorder %s17, 15
    %p63 = scmp.ne.s32.totalorder %s58, %s60
    %p64 = scmp.eq.s32.totalorder %s17, 0
    %p65 = por %p63, %p64
    %p66 = scmp.ne.s32.totalorder %s58, %s60
    %p67 = scmp.eq.s32.totalorder %s22, 15
    %p68 = por %p66, %p67
    %p69 = scmp.ne.s32.totalorder %s60, %s61
    %p70 = scmp.eq.s32.totalorder %s22, 0
    %p71 = por %p69, %p70
    %p72 = scmp.ne.s32.totalorder %s60, %s61
    %p73 = scmp.eq.s32.totalorder %s23, 15
    %p74 = por %p72, %p73
    %p76 = scmp.ne.s32.totalorder %s61, %s75
    %p77 = scmp.eq.s32.totalorder %s23, 0
    %p78 = por %p76, %p77
    %s79 = ssub.s32 %s24, %s36
    %s80 = ssub.s32 %s25, %s32
    %s81 = sor.u32 %s79, %s80
    %p82 = scmp.eq.s32.totalorder %s81, 0
    %s84 = sadd.s32 %s83, 1
    %s85 = scalar_select %p82, %s83, %s84
    %p88 = pneg %p82
    %p89 = scmp.eq.s32.totalorder %s17, 15
    %p90 = por %p88, %p89
    %p91 = scmp.ne.s32.totalorder %s83, %s86
    %p92 = scmp.eq.s32.totalorder %s17, 0
    %p93 = por %p91, %p92
    %p94 = scmp.ne.s32.totalorder %s83, %s86
    %p95 = scmp.eq.s32.totalorder %s22, 15
    %p96 = por %p94, %p95
    %p97 = scmp.ne.s32.totalorder %s86, %s87
    %p98 = scmp.eq.s32.totalorder %s22, 0
    %p99 = por %p97, %p98
    %p100 = scmp.ne.s32.totalorder %s86, %s87
    %p101 = scmp.eq.s32.totalorder %s23, 15
    %p102 = por %p100, %p101
    %p104 = scmp.ne.s32.totalorder %s87, %s103
    %p105 = scmp.eq.s32.totalorder %s23, 0
    %p106 = por %p104, %p105
    %s108 = sadd.s32 %s107, 1
    %p111 = scmp.eq.s32.totalorder %s17, 15
    %p112 = scmp.ne.s32.totalorder %s107, %s109
    %p113 = scmp.eq.s32.totalorder %s17, 0
    %p114 = por %p112, %p113
    %p115 = scmp.ne.s32.totalorder %s107, %s109
    %p116 = scmp.eq.s32.totalorder %s22, 15
    %p117 = por %p115, %p116
    %p118 = scmp.ne.s32.totalorder %s109, %s110
    %p119 = scmp.eq.s32.totalorder %s22, 0
    %p120 = por %p118, %p119
    %p121 = scmp.ne.s32.totalorder %s109, %s110
    %p122 = scmp.eq.s32.totalorder %s23, 15
    %p123 = por %p121, %p122
    %p125 = scmp.ne.s32.totalorder %s110, %s124
    %p126 = scmp.eq.s32.totalorder %s23, 0
    %p127 = por %p125, %p126
    %s129 = sadd.s32 %s128, 1
    %p132 = scmp.eq.s32.totalorder %s17, 15
    %p133 = scmp.ne.s32.totalorder %s128, %s130
    %p134 = scmp.eq.s32.totalorder %s17, 0
    %p135 = por %p133, %p134
    %p136 = scmp.ne.s32.totalorder %s128, %s130
    %p137 = scmp.eq.s32.totalorder %s22, 15
    %p138 = por %p136, %p137
    %p139 = scmp.ne.s32.totalorder %s130, %s131
    %p140 = scmp.eq.s32.totalorder %s22, 0
    %p141 = por %p139, %p140
    %p142 = scmp.ne.s32.totalorder %s130, %s131
    %p143 = scmp.eq.s32.totalorder %s23, 15
    %p144 = por %p142, %p143
    %p146 = scmp.ne.s32.totalorder %s131, %s145
    %p147 = scmp.eq.s32.totalorder %s23, 0
    %p148 = por %p146, %p147
    %s150 = sadd.s32 %s149, 1
    %p153 = scmp.eq.s32.totalorder %s17, 15
    %p154 = scmp.ne.s32.totalorder %s149, %s151
    %p155 = scmp.eq.s32.totalorder %s17, 0
    %p156 = por %p154, %p155
    %p157 = scmp.ne.s32.totalorder %s149, %s151
    %p158 = scmp.eq.s32.totalorder %s22, 15
    %p159 = por %p157, %p158
    %p160 = scmp.ne.s32.totalorder %s151, %s152
    %p161 = scmp.eq.s32.totalorder %s22, 0
    %p162 = por %p160, %p161
    %p163 = scmp.ne.s32.totalorder %s151, %s152
    %p164 = scmp.eq.s32.totalorder %s23, 15
    %p165 = por %p163, %p164
    %p167 = scmp.ne.s32.totalorder %s152, %s166
    %p168 = scmp.eq.s32.totalorder %s23, 0
    %p169 = por %p167, %p168
    %s171 = sadd.s32 %s170, 1
    %p174 = scmp.eq.s32.totalorder %s17, 15
    %p175 = scmp.ne.s32.totalorder %s170, %s172
    %p176 = scmp.eq.s32.totalorder %s17, 0
    %p177 = por %p175, %p176
    %p178 = scmp.ne.s32.totalorder %s170, %s172
    %p179 = scmp.eq.s32.totalorder %s22, 15
    %p180 = por %p178, %p179
    %p181 = scmp.ne.s32.totalorder %s172, %s173
    %p182 = scmp.eq.s32.totalorder %s22, 0
    %p183 = por %p181, %p182
    %p184 = scmp.ne.s32.totalorder %s172, %s173
    %p185 = scmp.eq.s32.totalorder %s23, 15
    %p186 = por %p184, %p185
    %p188 = scmp.ne.s32.totalorder %s173, %s187
    %p189 = scmp.eq.s32.totalorder %s23, 0
    %p190 = por %p188, %p189
    %s192 = sadd.s32 %s191, 1
    %p195 = scmp.eq.s32.totalorder %s17, 15
    %p196 = scmp.ne.s32.totalorder %s191, %s193
    %p197 = scmp.eq.s32.totalorder %s17, 0
    %p198 = por %p196, %p197
    %p199 = scmp.ne.s32.totalorder %s191, %s193
    %p200 = scmp.eq.s32.totalorder %s22, 15
    %p201 = por %p199, %p200
    %p202 = scmp.ne.s32.totalorder %s193, %s194
    %p203 = scmp.eq.s32.totalorder %s22, 0
    %p204 = por %p202, %p203
    %p205 = scmp.ne.s32.totalorder %s193, %s194
    %p206 = scmp.eq.s32.totalorder %s23, 15
    %p207 = por %p205, %p206
    %p209 = scmp.ne.s32.totalorder %s194, %s208
    %p210 = scmp.eq.s32.totalorder %s23, 0
    %p211 = por %p209, %p210
    %s213 = sadd.s32 %s212, 1
    %p216 = scmp.eq.s32.totalorder %s17, 15
    %p217 = scmp.ne.s32.totalorder %s212, %s214
    %p218 = scmp.eq.s32.totalorder %s17, 0
    %p219 = por %p217, %p218
    %p220 = scmp.ne.s32.totalorder %s212, %s214
    %p221 = scmp.eq.s32.totalorder %s22, 15
    %p222 = por %p220, %p221
    %p223 = scmp.ne.s32.totalorder %s214, %s215
    %p224 = scmp.eq.s32.totalorder %s22, 0
    %p225 = por %p223, %p224
    %p226 = scmp.ne.s32.totalorder %s214, %s215
    %p227 = scmp.eq.s32.totalorder %s23, 15
    %p228 = por %p226, %p227
    %p230 = scmp.ne.s32.totalorder %s215, %s229
    %p231 = scmp.eq.s32.totalorder %s23, 0
    %p232 = por %p230, %p231
    %s233 = ssub.s32 %s24, %s36
    %s234 = ssub.s32 %s25, %s32
    %s235 = sor.u32 %s233, %s234
    %p236 = scmp.eq.s32.totalorder %s235, 0
    %s238 = sadd.s32 %s237, 1
    %s239 = scalar_select %p236, %s237, %s238
    %p242 = pneg %p236
    %p243 = scmp.eq.s32.totalorder %s17, 15
    %p244 = por %p242, %p243
    %p245 = scmp.ne.s32.totalorder %s237, %s240
    %p246 = scmp.eq.s32.totalorder %s17, 0
    %p247 = por %p245, %p246
    %p248 = scmp.ne.s32.totalorder %s237, %s240
    %p249 = scmp.eq.s32.totalorder %s22, 15
    %p250 = por %p248, %p249
    %p251 = scmp.ne.s32.totalorder %s240, %s241
    %p252 = scmp.eq.s32.totalorder %s22, 0
    %p253 = por %p251, %p252
    %p254 = scmp.ne.s32.totalorder %s240, %s241
    %p255 = scmp.eq.s32.totalorder %s23, 15
    %p256 = por %p254, %p255
    %p258 = scmp.ne.s32.totalorder %s241, %s257
    %p259 = scmp.eq.s32.totalorder %s23, 0
    %p260 = por %p258, %p259
    %s261 = ssub.s32 %s24, %s36
    %p262 = scmp.eq.s32.totalorder %s261, 0
    %s264 = sadd.s32 %s263, 1
    %s265 = scalar_select %p262, %s263, %s264
    %p268 = pneg %p262
    %p269 = scmp.eq.s32.totalorder %s17, 15
    %p270 = por %p268, %p269
    %p271 = scmp.ne.s32.totalorder %s263, %s266
    %p272 = scmp.eq.s32.totalorder %s17, 0
    %p273 = por %p271, %p272
    %p274 = scmp.ne.s32.totalorder %s263, %s266
    %p275 = scmp.eq.s32.totalorder %s22, 15
    %p276 = por %p274, %p275
    %p277 = scmp.ne.s32.totalorder %s266, %s267
    %p278 = scmp.eq.s32.totalorder %s22, 0
    %p279 = por %p277, %p278
    %p280 = scmp.ne.s32.totalorder %s266, %s267
    %p281 = scmp.eq.s32.totalorder %s23, 15
    %p282 = por %p280, %p281
    %p284 = scmp.ne.s32.totalorder %s267, %s283
    %p285 = scmp.eq.s32.totalorder %s23, 0
    %p286 = por %p284, %p285
    %p287 = scmp.le.s32.totalorder 1, %s17
    %p288 = scmp.lt.s32.totalorder %s17, 17
    %p289 = pnand %p287, %p288
    %p290 = pneg %p289
    // Predicated region
    $region9: #{_forward_impl.7} parent=5 // pred_check
      _
    $region10: #{_forward_impl.7} parent=5 // pred_check_branch
      %292 = sbr.rel (%p289) target = $region12
    $region11: #{_forward_impl.7} parent=5 // pred_region
      %s293 = ssub.s32 %s17, 1
      // Predicated region
      $region13: #{_forward_impl.7} parent=11 // pred_check
        %p294 = pneg %p50
      $region14: #{_forward_impl.7} parent=11 // pred_check_branch
        %296 = sbr.rel (%p294) target = $region16
      $region15: #{_forward_impl.7} parent=11 // pred_region
        _
      $region16: #{_forward_impl.7} parent=11 // pred_fallthru
        _
      // Predicated region
      $region17: #{_forward_impl.7} parent=11 // pred_check
        %p297 = pneg %p71
      $region18: #{_forward_impl.7} parent=11 // pred_check_branch
        %299 = sbr.rel (%p297) target = $region20
      $region19: #{_forward_impl.7} parent=11 // pred_region
        _
      $region20: #{_forward_impl.7} parent=11 // pred_fallthru
        _
      // Predicated region
      $region21: #{_forward_impl.7} parent=11 // pred_check
        %p300 = pneg %p120
      $region22: #{_forward_impl.7} parent=11 // pred_check_branch
        %302 = sbr.rel (%p300) target = $region24
      $region23: #{_forward_impl.7} parent=11 // pred_region
        _
      $region24: #{_forward_impl.7} parent=11 // pred_fallthru
        _
      // Predicated region
      $region25: #{_forward_impl.7} parent=11 // pred_check
        %p303 = pneg %p141
      $region26: #{_forward_impl.7} parent=11 // pred_check_branch
        %305 = sbr.rel (%p303) target = $region28
      $region27: #{_forward_impl.7} parent=11 // pred_region
        _
      $region28: #{_forward_impl.7} parent=11 // pred_fallthru
        _
      // Predicated region
      $region29: #{_forward_impl.7} parent=11 // pred_check
        %p306 = pneg %p162
      $region30: #{_forward_impl.7} parent=11 // pred_check_branch
        %308 = sbr.rel (%p306) target = $region32
      $region31: #{_forward_impl.7} parent=11 // pred_region
        _
      $region32: #{_forward_impl.7} parent=11 // pred_fallthru
        _
      // Predicated region
      $region33: #{_forward_impl.7} parent=11 // pred_check
        %p309 = pneg %p183
      $region34: #{_forward_impl.7} parent=11 // pred_check_branch
        %311 = sbr.rel (%p309) target = $region36
      $region35: #{_forward_impl.7} parent=11 // pred_region
        _
      $region36: #{_forward_impl.7} parent=11 // pred_fallthru
        _
      // Predicated region
      $region37: #{_forward_impl.7} parent=11 // pred_check
        %p312 = pneg %p204
      $region38: #{_forward_impl.7} parent=11 // pred_check_branch
        %314 = sbr.rel (%p312) target = $region40
      $region39: #{_forward_impl.7} parent=11 // pred_region
        _
      $region40: #{_forward_impl.7} parent=11 // pred_fallthru
        _
      // Predicated region
      $region41: #{_forward_impl.7} parent=11 // pred_check
        %p315 = pneg %p225
      $region42: #{_forward_impl.7} parent=11 // pred_check_branch
        %317 = sbr.rel (%p315) target = $region44
      $region43: #{_forward_impl.7} parent=11 // pred_region
        _
      $region44: #{_forward_impl.7} parent=11 // pred_fallthru
        _
    $region12: #{_forward_impl.7} parent=5 // pred_fallthru
      _
    %p318 = scmp.lt.s32.totalorder %s17, 16
    // Predicated region
    $region45: #{_forward_impl.7} parent=5 // pred_check
      %p319 = pneg %p318
    $region46: #{_forward_impl.7} parent=5 // pred_check_branch
      %321 = sbr.rel (%p319) target = $region48
    $region47: #{_forward_impl.7} parent=5 // pred_region
      // Predicated region
      $region49: #{_forward_impl.7} parent=47 // pred_check
        %p322 = pneg %p93
      $region50: #{_forward_impl.7} parent=47 // pred_check_branch
        %324 = sbr.rel (%p322) target = $region52
      $region51: #{_forward_impl.7} parent=47 // pred_region
        %p325 = scmp.lt.s32.totalorder %s24, 1
        %s326 = scalar_select %p325, %s24, 1
        %p327 = scmp.lt.s32.totalorder %s25, 7
        %s328 = scalar_select %p327, %s25, 7
        %s329 = smul.addr %s326, 8
        %s330 = sadd.s32 %s328, %s329
        %s331 = smul.addr %s330, 2
        %s332 = scalar_lea.vmem %s2, %s331
      $region52: #{_forward_impl.7} parent=47 // pred_fallthru
        _
    $region48: #{_forward_impl.7} parent=5 // pred_fallthru
      _
    %p333 = scmp.le.s32.totalorder 1, %s17
    %p334 = scmp.lt.s32.totalorder %s17, 17
    %p335 = pnand %p333, %p334
    %p336 = pneg %p335
    // Predicated region
    $region53: #{_forward_impl.7} parent=5 // pred_check
      _
    $region54: #{_forward_impl.7} parent=5 // pred_check_branch
      %338 = sbr.rel (%p335) target = $region56
    $region55: #{_forward_impl.7} parent=5 // pred_region
      %s339 = ssub.s32 %s17, 1
      %p340 = pneg %p50
      %p341 = pneg %p47
      %p342 = pneg %p71
      %p343 = pneg %p68
      %p344 = scmp.lt.s32.totalorder %s26, 1
      %s345 = scalar_select %p344, %s26, 1
      %p346 = scmp.lt.s32.totalorder %s27, 7
      %s347 = scalar_select %p346, %s27, 7
      %s348 = smul.addr %s345, 8
      %s349 = sadd.s32 %s347, %s348
      %s350 = smul.addr %s349, 2
      %s351 = scalar_lea.vmem %s2, %s350
      %p352 = pneg %p99
      %p353 = pneg %p96
      %p354 = pneg %p120
      %p355 = pneg %p117
      %p356 = pneg %p141
      %p357 = pneg %p138
      %p358 = pneg %p162
      %p359 = pneg %p159
      %p360 = pneg %p183
      %p361 = pneg %p180
      %p362 = pneg %p204
      %p363 = pneg %p201
      %p364 = pneg %p225
      %p365 = pneg %p222
      %p366 = pneg %p253
      %p367 = pneg %p250
      %p368 = scmp.lt.s32.totalorder %s26, 1
      %s369 = scalar_select %p368, %s26, 1
      %p370 = scmp.lt.s32.totalorder %s27, 7
      %s371 = scalar_select %p370, %s27, 7
      %s372 = smul.addr %s369, 8
      %s373 = sadd.s32 %s371, %s372
      %s374 = smul.addr %s373, 2
      %s375 = scalar_lea.vmem %s9, %s374
      %p376 = pneg %p279
      %p377 = pneg %p276
      %p378 = scmp.lt.s32.totalorder %s26, 1
      %s379 = scalar_select %p378, %s26, 1
      %s380 = smul.addr %s379, 2
      %s381 = scalar_lea.vmem %s10, %s380
      %p382 = scmp.lt.s32.totalorder %s26, 1
      %s383 = scalar_select %p382, %s26, 1
      %p384 = scmp.lt.s32.totalorder %s27, 7
      %s385 = scalar_select %p384, %s27, 7
      %s386 = smul.addr %s383, 8
      %s387 = sadd.s32 %s385, %s386
      %s388 = smul.addr %s387, 2
      %s389 = scalar_lea.vmem %s2, %s388
      %p390 = scmp.lt.s32.totalorder %s26, 1
      %s391 = scalar_select %p390, %s26, 1
      %p392 = scmp.lt.s32.totalorder %s27, 7
      %s393 = scalar_select %p392, %s27, 7
      %s394 = smul.addr %s391, 8
      %s395 = sadd.s32 %s393, %s394
      %s396 = smul.addr %s395, 2
      %s397 = scalar_lea.vmem %s9, %s396
      %p398 = scmp.lt.s32.totalorder %s26, 1
      %s399 = scalar_select %p398, %s26, 1
      %s400 = smul.addr %s399, 2
      %s401 = scalar_lea.vmem %s10, %s400
      %v403 = vlaneseq
      %v404 = vand.u32 %v403, 127
      %p405 = scmp.eq.s32.totalorder %s27, 0
      // Predicated region
      $region57: #{_forward_impl.7} parent=55 // pred_check
        %p406 = pneg %p405
      $region58: #{_forward_impl.7} parent=55 // pred_check_branch
        %408 = sbr.rel (%p406) target = $region60
      $region59: #{_forward_impl.7} parent=55 // pred_region
        %vm409 = vcmp.eq.s32.totalorder %v404, 0
        %v410 = vsel %vm409, 1, 0
        %v411 = vcvt.s32.f32 %v410
        %vm412 = vcmask 66560
        %413 = vst.msk [vmem:[#allocation3] sm:$0x3] %vm412, %v411
        %414 = vst.msk [vmem:[#allocation4] sm:$0x3] %vm412, %v411
        %vm415 = vcmask 254976
        %416 = vst.msk [vmem:[#allocation2] sm:$0x3] %vm415, 0.0
        %417 = vst.msk [vmem:[#allocation2 + $0x2] sm:$0x3] %vm415, 0.0
        %vm418 = vcmask 1024
        %419 = vst.msk [vmem:[%s401] sm:$0x3] %vm418, 0.0
      $region60: #{_forward_impl.7} parent=55 // pred_fallthru
        _
      %v420 = vld [vmem:[%s0] sm:$0xff]
      %v421 = vld [vmem:[%s0 + $0x8] sm:$0x1]
      %v422 = vld [vmem:[%s0 + $0x10] sm:$0xff]
      %v423 = vld [vmem:[%s0 + $0x18] sm:$0x1]
      %v424 = vld [vmem:[#allocation4] sm:$0x3]
      %v425 = vlaneseq
      %v426 = vshrl.u32 %v425, 7
      %v427 = vsub.s32 0, %v426
      %v428 = vrot.slane %v424, %v427
      %430 = vbcast.lane.b32.xlu0 %v428, 256
      %v431 = vpop.permute.xlu0 %430
      %s433 = sor.u32 256, 8
      %434 = vbcast.lane.b32.xlu0 %v428, %s433
      %v435 = vpop.permute.xlu0 %434
      %v436 = vlaneseq
      %v437 = vshrl.u32 %v436, 7
      %v438 = vsub.s32 1, %v437
      %v439 = vrot.slane %v424, %v438
      %441 = vbcast.lane.b32.xlu0 %v439, 256
      %v442 = vpop.permute.xlu0 %441
      %s444 = sor.u32 256, 8
      %445 = vbcast.lane.b32.xlu0 %v439, %s444
      %v446 = vpop.permute.xlu0 %445
      %v447 = vmul.f32 %v431, %v420
      %v448 = vmul.f32 %v435, %v421
      %v449 = vmul.f32 %v442, %v422
      %v450 = vmul.f32 %v446, %v423
      %vm451 = vcmask 261120
      %v452 = vsel %vm451, %v447, 0.0
      %vm453 = vcmask 253952
      %v454 = vsel %vm453, %v448, 0.0
      %v455 = vadd.f32 %v452, %v454
      %v456 = vrot.slane %v455, 4
      %v457 = vadd.f32 %v455, %v456
      %v458 = vrot.slane %v457, 2
      %v459 = vadd.f32 %v457, %v458
      %v460 = vrot.slane %v459, 1
      %v461 = vadd.f32 %v459, %v460
      %v462 = vsel %vm451, %v449, 0.0
      %v463 = vsel %vm453, %v450, 0.0
      %v464 = vadd.f32 %v462, %v463
      %v465 = vrot.slane %v464, 4
      %v466 = vadd.f32 %v464, %v465
      %v467 = vrot.slane %v466, 2
      %v468 = vadd.f32 %v466, %v467
      %v469 = vrot.slane %v468, 1
      %v470 = vadd.f32 %v468, %v469
      %v471 = vld [vmem:[#allocation2] sm:$0x3]
      %vm474 = vcmask 1041409
      %v475 = vsel %vm474, %v470, %v461
      %478 = vrot.lane.b32.xlu0 %v471, 32
      %v479 = vpop.permute.xlu0 %478
      %v481 = vsel %vm451, %v475, %v479
      %v482 = vld [vmem:[%s5] sm:$0xff]
      %v483 = vld [vmem:[%s5 + $0x8] sm:$0xff]
      %v484 = vld [vmem:[%s5 + $0x10] sm:$0xff]
      %v485 = vld [vmem:[%s5 + $0x18] sm:$0xff]
      %v486 = vld [vmem:[%s5 + $0x20] sm:$0xff]
      %v487 = vld [vmem:[%s5 + $0x28] sm:$0xff]
      %v488 = vld [vmem:[%s5 + $0x30] sm:$0xff]
      %v489 = vld [vmem:[%s5 + $0x38] sm:$0xff]
      %v490 = vld [vmem:[%s5 + $0x40] sm:$0xff]
      %v491 = vld [vmem:[%s5 + $0x48] sm:$0xff]
      %v492 = vld [vmem:[%s5 + $0x50] sm:$0xff]
      %v493 = vld [vmem:[%s5 + $0x58] sm:$0xff]
      %v494 = vld [vmem:[%s5 + $0x60] sm:$0xff]
      %v495 = vld [vmem:[%s5 + $0x68] sm:$0xff]
      %v496 = vld [vmem:[%s5 + $0x70] sm:$0xff]
      %v497 = vld [vmem:[%s5 + $0x78] sm:$0xff]
      %v498 = vpack.c.bf16 %v481, %v481
      %v499 = vpack.c.bf16 %v484, %v482
      %v500 = vpack.c.bf16 %v485, %v483
      %v501 = vpack.c.bf16 %v488, %v486
      %v502 = vpack.c.bf16 %v489, %v487
      %v503 = vpack.c.bf16 %v492, %v490
      %v504 = vpack.c.bf16 %v493, %v491
      %v505 = vpack.c.bf16 %v496, %v494
      %v506 = vpack.c.bf16 %v497, %v495
      %v507 = vld [vmem:[%s6] sm:$0x3]
      %v509 = vlaneseq
      %v510 = vshrl.u32 %v509, 7
      %v511 = vsub.s32 0, %v510
      %v512 = vrot.slane %v507, %v511
      %v513 = vlaneseq
      %v514 = vshrl.u32 %v513, 7
      %v515 = vsub.s32 1, %v514
      %v516 = vrot.slane %v507, %v515
      %vm519 = vcmask 523264
      %v521 = vsel %vm519, %v498, 0
      %523 = vmatprep.subr.bf16.mxu0 0
      %524 = vmatpush1.bf16.msra.mxu0 0
      %525 = vmatprep.subr.bf16.mxu0 0
      %526 = vmatpush1.bf16.msra.mxu0 0
      %527 = vmatprep.subr.bf16.mxu0 0
      %528 = vmatpush1.bf16.msra.mxu0 0
      %529 = vmatprep.subr.bf16.mxu0 0
      %530 = vmatpush1.bf16.msra.mxu0 0
      %531 = vmatprep.subr.bf16.mxu0 %v506
      %532 = vmatpush1.bf16.msra.mxu0 %v505
      %533 = vmatprep.subr.bf16.mxu0 %v504
      %534 = vmatpush1.bf16.msra.mxu0 %v503
      %535 = vmatprep.subr.bf16.mxu0 %v502
      %536 = vmatpush1.bf16.msra.mxu0 %v501
      %537 = vmatprep.subr.bf16.mxu0 %v500
      %538 = vmatpush1.bf16.msra.mxu0 %v499
      %539 = vmatprep.subr.bf16.mxu0 0
      %540 = vmatpush2.bf16.msra.mxu0 0
      %541 = vmatprep.subr.bf16.mxu0 0
      %542 = vmatpush2.bf16.msra.mxu0 0
      %543 = vmatprep.subr.bf16.mxu0 0
      %544 = vmatpush2.bf16.msra.mxu0 0
      %545 = vmatprep.subr.bf16.mxu0 0
      %546 = vmatpush2.bf16.msra.mxu0 0
      %547 = vmatprep.subr.bf16.mxu0 0
      %548 = vmatpush2.bf16.msra.mxu0 0
      %549 = vmatprep.subr.bf16.mxu0 0
      %550 = vmatpush2.bf16.msra.mxu0 0
      %551 = vmatprep.subr.bf16.mxu0 0
      %552 = vmatpush2.bf16.msra.mxu0 0
      %553 = vmatprep.subr.bf16.mxu0 0
      %554 = vmatpush2.bf16.msra.mxu0 0
      %555 = vmatprep.mubr.bf16.mxu0 0
      %556 = vmatmul.mubr.bf16.gmra.mxu0 %v521
      %v557 = vpop.f32.mrf.mxu0
      %v558 = vadd.f32 %v512, %v557
      %v559 = vpop.f32.mrf.mxu0
      %v560 = vadd.f32 %v516, %v559
      %v561 = vpop.f32.mrf.mxu0
      %v562 = vpop.f32.mrf.mxu0
      %563 = vdwg.mxu0
      %565 = vrot.lane.b32.xlu0 %v558, 32
      %v566 = vpop.permute.xlu0 %565
      %v568 = vadd.f32 %v558, %v566
      %v569 = vxor.u32 %v568, 2147483648
      %v570 = vmul.f32 %v569, 1.442695
      %v571 = vpow.pop %v570
      %v572 = vadd.f32 %v571, 1.0
      %v573 = vrcp.pop %v572
      %v574 = vmul.f32 1.0, %v573
      %576 = vrot.lane.b32.xlu0 %v560, 32
      %v577 = vpop.permute.xlu0 %576
      %v579 = vadd.f32 %v558, %v577
      %v580 = vxor.u32 %v579, 2147483648
      %v581 = vmul.f32 %v580, 1.442695
      %v582 = vpow.pop %v581
      %v583 = vadd.f32 %v582, 1.0
      %v584 = vrcp.pop %v583
      %v585 = vmul.f32 1.0, %v584
      %586 = vrot.lane.b32.xlu0 %v560, 96
      %v587 = vpop.permute.xlu0 %586
      %v589 = vmul.f32 %v574, %v587
      %591 = vrot.lane.b32.xlu0 %v589, 64
      %v592 = vpop.permute.xlu0 %591
      %v594 = vadd.f32 %v558, %v592
      %v595 = vtanh.pop %v594
      %v596 = vsub.f32 1.0, %v585
      %598 = vrot.lane.b32.xlu0 %v595, 96
      %v599 = vpop.permute.xlu0 %598
      %v601 = vmul.f32 %v596, %v599
      %v602 = vmul.f32 %v585, %v479
      %v603 = vadd.f32 %v601, %v602
      %s604 = scalar_lea.vmem [#allocation2], 2
      %v605 = vld [vmem:[%s604] sm:$0x3]
      %607 = vrot.lane.b32.xlu0 %v603, 96
      %v608 = vpop.permute.xlu0 %607
      %611 = vrot.lane.b32.xlu0 %v605, 32
      %v612 = vpop.permute.xlu0 %611
      %v614 = vsel %vm451, %v608, %v612
      %v615 = vld [vmem:[%s7] sm:$0xff]
      %v616 = vld [vmem:[%s7 + $0x8] sm:$0xff]
      %v617 = vld [vmem:[%s7 + $0x10] sm:$0xff]
      %v618 = vld [vmem:[%s7 + $0x18] sm:$0xff]
      %v619 = vld [vmem:[%s7 + $0x20] sm:$0xff]
      %v620 = vld [vmem:[%s7 + $0x28] sm:$0xff]
      %v621 = vld [vmem:[%s7 + $0x30] sm:$0xff]
      %v622 = vld [vmem:[%s7 + $0x38] sm:$0xff]
      %v623 = vld [vmem:[%s7 + $0x40] sm:$0xff]
      %v624 = vld [vmem:[%s7 + $0x48] sm:$0xff]
      %v625 = vld [vmem:[%s7 + $0x50] sm:$0xff]
      %v626 = vld [vmem:[%s7 + $0x58] sm:$0xff]
      %v627 = vld [vmem:[%s7 + $0x60] sm:$0xff]
      %v628 = vld [vmem:[%s7 + $0x68] sm:$0xff]
      %v629 = vld [vmem:[%s7 + $0x70] sm:$0xff]
      %v630 = vld [vmem:[%s7 + $0x78] sm:$0xff]
      %v631 = vpack.c.bf16 %v614, %v614
      %v632 = vpack.c.bf16 %v617, %v615
      %v633 = vpack.c.bf16 %v618, %v616
      %v634 = vpack.c.bf16 %v621, %v619
      %v635 = vpack.c.bf16 %v622, %v620
      %v636 = vpack.c.bf16 %v625, %v623
      %v637 = vpack.c.bf16 %v626, %v624
      %v638 = vpack.c.bf16 %v629, %v627
      %v639 = vpack.c.bf16 %v630, %v628
      %v640 = vld [vmem:[%s8] sm:$0x3]
      %v642 = vlaneseq
      %v643 = vshrl.u32 %v642, 7
      %v644 = vsub.s32 0, %v643
      %v645 = vrot.slane %v640, %v644
      %v646 = vlaneseq
      %v647 = vshrl.u32 %v646, 7
      %v648 = vsub.s32 1, %v647
      %v649 = vrot.slane %v640, %v648
      %v653 = vsel %vm519, %v631, 0
      %655 = vmatprep.subr.bf16.mxu0 0
      %656 = vmatpush1.bf16.msra.mxu0 0
      %657 = vmatprep.subr.bf16.mxu0 0
      %658 = vmatpush1.bf16.msra.mxu0 0
      %659 = vmatprep.subr.bf16.mxu0 0
      %660 = vmatpush1.bf16.msra.mxu0 0
      %661 = vmatprep.subr.bf16.mxu0 0
      %662 = vmatpush1.bf16.msra.mxu0 0
      %663 = vmatprep.subr.bf16.mxu0 %v639
      %664 = vmatpush1.bf16.msra.mxu0 %v638
      %665 = vmatprep.subr.bf16.mxu0 %v637
      %666 = vmatpush1.bf16.msra.mxu0 %v636
      %667 = vmatprep.subr.bf16.mxu0 %v635
      %668 = vmatpush1.bf16.msra.mxu0 %v634
      %669 = vmatprep.subr.bf16.mxu0 %v633
      %670 = vmatpush1.bf16.msra.mxu0 %v632
      %671 = vmatprep.subr.bf16.mxu0 0
      %672 = vmatpush2.bf16.msra.mxu0 0
      %673 = vmatprep.subr.bf16.mxu0 0
      %674 = vmatpush2.bf16.msra.mxu0 0
      %675 = vmatprep.subr.bf16.mxu0 0
      %676 = vmatpush2.bf16.msra.mxu0 0
      %677 = vmatprep.subr.bf16.mxu0 0
      %678 = vmatpush2.bf16.msra.mxu0 0
      %679 = vmatprep.subr.bf16.mxu0 0
      %680 = vmatpush2.bf16.msra.mxu0 0
      %681 = vmatprep.subr.bf16.mxu0 0
      %682 = vmatpush2.bf16.msra.mxu0 0
      %683 = vmatprep.subr.bf16.mxu0 0
      %684 = vmatpush2.bf16.msra.mxu0 0
      %685 = vmatprep.subr.bf16.mxu0 0
      %686 = vmatpush2.bf16.msra.mxu0 0
      %687 = vmatprep.mubr.bf16.mxu0 0
      %688 = vmatmul.mubr.bf16.gmra.mxu0 %v653
      %v689 = vpop.f32.mrf.mxu0
      %v690 = vadd.f32 %v645, %v689
      %v691 = vpop.f32.mrf.mxu0
      %v692 = vadd.f32 %v649, %v691
      %v693 = vpop.f32.mrf.mxu0
      %v694 = vpop.f32.mrf.mxu0
      %695 = vdwg.mxu0
      %697 = vrot.lane.b32.xlu0 %v690, 32
      %v698 = vpop.permute.xlu0 %697
      %v700 = vadd.f32 %v690, %v698
      %v701 = vxor.u32 %v700, 2147483648
      %v702 = vmul.f32 %v701, 1.442695
      %v703 = vpow.pop %v702
      %v704 = vadd.f32 %v703, 1.0
      %v705 = vrcp.pop %v704
      %v706 = vmul.f32 1.0, %v705
      %708 = vrot.lane.b32.xlu0 %v692, 32
      %v709 = vpop.permute.xlu0 %708
      %v711 = vadd.f32 %v690, %v709
      %v712 = vxor.u32 %v711, 2147483648
      %v713 = vmul.f32 %v712, 1.442695
      %v714 = vpow.pop %v713
      %v715 = vadd.f32 %v714, 1.0
      %v716 = vrcp.pop %v715
      %v717 = vmul.f32 1.0, %v716
      %718 = vrot.lane.b32.xlu0 %v692, 96
      %v719 = vpop.permute.xlu0 %718
      %v721 = vmul.f32 %v706, %v719
      %723 = vrot.lane.b32.xlu0 %v721, 64
      %v724 = vpop.permute.xlu0 %723
      %v726 = vadd.f32 %v690, %v724
      %v727 = vtanh.pop %v726
      %v728 = vsub.f32 1.0, %v717
      %730 = vrot.lane.b32.xlu0 %v727, 96
      %v731 = vpop.permute.xlu0 %730
      %v733 = vmul.f32 %v728, %v731
      %v734 = vmul.f32 %v717, %v612
      %v735 = vadd.f32 %v733, %v734
      %vm736 = vcmask 254976
      %737 = vst.msk [vmem:[#allocation2] sm:$0x3] %vm736, %v608
      %739 = vrot.lane.b32.xlu0 %v735, 96
      %v740 = vpop.permute.xlu0 %739
      %742 = vst.msk [vmem:[%s604] sm:$0x3] %vm736, %v740
      %v743 = vld [vmem:[%s3] sm:$0xff]
      %v744 = vld [vmem:[%s3 + $0x8] sm:$0xff]
      %v745 = vld [vmem:[%s3 + $0x10] sm:$0xff]
      %v746 = vld [vmem:[%s3 + $0x18] sm:$0xff]
      %v747 = vpack.c.bf16 %v735, %v735
      %v748 = vpack.c.bf16 %v744, %v743
      %v749 = vpack.c.bf16 %v746, %v745
      %v750 = vld [vmem:[%s4] sm:$0x1]
      %v752 = vlaneseq
      %v753 = vshrl.u32 %v752, 7
      %v754 = vsub.s32 0, %v753
      %v755 = vrot.slane %v750, %v754
      %758 = vrot.lane.b32.xlu0 %v747, 96
      %v759 = vpop.permute.xlu0 %758
      %v761 = vsel %vm451, %v759, 0
      %763 = vmatprep.subr.bf16.mxu0 0
      %764 = vmatpush1.bf16.msra.mxu0 0
      %765 = vmatprep.subr.bf16.mxu0 0
      %766 = vmatpush1.bf16.msra.mxu0 0
      %767 = vmatprep.subr.bf16.mxu0 0
      %768 = vmatpush1.bf16.msra.mxu0 0
      %769 = vmatprep.subr.bf16.mxu0 0
      %770 = vmatpush1.bf16.msra.mxu0 0
      %771 = vmatprep.subr.bf16.mxu0 0
      %772 = vmatpush1.bf16.msra.mxu0 0
      %773 = vmatprep.subr.bf16.mxu0 0
      %774 = vmatpush1.bf16.msra.mxu0 0
      %775 = vmatprep.subr.bf16.mxu0 0
      %776 = vmatpush1.bf16.msra.mxu0 %v749
      %777 = vmatprep.subr.bf16.mxu0 0
      %778 = vmatpush1.bf16.msra.mxu0 %v748
      %779 = vmatprep.subr.bf16.mxu0 0
      %780 = vmatpush2.bf16.msra.mxu0 0
      %781 = vmatprep.subr.bf16.mxu0 0
      %782 = vmatpush2.bf16.msra.mxu0 0
      %783 = vmatprep.subr.bf16.mxu0 0
      %784 = vmatpush2.bf16.msra.mxu0 0
      %785 = vmatprep.subr.bf16.mxu0 0
      %786 = vmatpush2.bf16.msra.mxu0 0
      %787 = vmatprep.subr.bf16.mxu0 0
      %788 = vmatpush2.bf16.msra.mxu0 0
      %789 = vmatprep.subr.bf16.mxu0 0
      %790 = vmatpush2.bf16.msra.mxu0 0
      %791 = vmatprep.subr.bf16.mxu0 0
      %792 = vmatpush2.bf16.msra.mxu0 0
      %793 = vmatprep.subr.bf16.mxu0 0
      %794 = vmatpush2.bf16.msra.mxu0 0
      %795 = vmatprep.mubr.bf16.mxu0 0
      %796 = vmatmul.mubr.bf16.gmra.mxu0 %v761
      %v797 = vpop.f32.mrf.mxu0
      %v798 = vadd.f32 %v755, %v797
      %v799 = vpop.f32.mrf.mxu0
      %v800 = vpop.f32.mrf.mxu0
      %v801 = vpop.f32.mrf.mxu0
      %802 = vdwg.mxu0
      %v803 = vld [vmem:[%s1] sm:$0xff]
      %v804 = vld [vmem:[%s1 + $0x8] sm:$0x1]
      %v805 = vld [vmem:[%s1 + $0x10] sm:$0xff]
      %v806 = vld [vmem:[%s1 + $0x18] sm:$0x1]
      %v809 = vunpack.c.l.s4 1966171168
      %v810 = vunpack.c.0.s8 %v809
      %v811 = vlaneseq
      %v812 = vshrl.u32 %v811, 7
      %v813 = vsub.s32 %v810, %v812
      %v814 = vrot.slane %v798, %v813
      %v815 = vcombine.high %v814, %v814
      %v817 = vunpack.c.l.s4 1966171168
      %v818 = vunpack.c.0.s8 %v817
      %v819 = vlaneseq
      %v820 = vshrl.u32 %v819, 7
      %v821 = vsub.s32 %v818, %v820
      %v822 = vrot.slane %v814, %v821
      %v824 = vunpack.c.l.s4 1966171168
      %v825 = vunpack.c.0.s8 %v824
      %v826 = vlaneseq
      %v827 = vshrl.u32 %v826, 7
      %v828 = vsub.s32 %v825, %v827
      %v829 = vrot.slane %v815, %v828
      %v830 = vlaneseq
      %v831 = vshrl.u32 %v830, 7
      %v832 = vsub.s32 0, %v831
      %v833 = vrot.slane %v822, %v832
      %v834 = vlaneseq
      %v835 = vshrl.u32 %v834, 7
      %v836 = vsub.s32 0, %v835
      %v837 = vrot.slane %v829, %v836
      %v840 = vmul.f32 %v803, %v833
      %v841 = vmul.f32 %v804, %v833
      %v842 = vmul.f32 %v805, %v837
      %v843 = vmul.f32 %v806, %v837
      %v844 = vsel %vm451, %v840, 0.0
      %845 = vadd.xlane.f32.xlu0 %v844
      %v846 = vpop.xlane.xlu0 %845
      %v847 = vsel %vm453, %v841, 0.0
      %848 = vadd.xlane.f32.xlu0 %v847
      %v849 = vpop.xlane.xlu0 %848
      %v850 = vsel %vm451, %v842, 0.0
      %851 = vadd.xlane.f32.xlu0 %v850
      %v852 = vpop.xlane.xlu0 %851
      %v853 = vsel %vm453, %v843, 0.0
      %854 = vadd.xlane.f32.xlu0 %v853
      %v855 = vpop.xlane.xlu0 %854
      %v856 = vmul.f32 %v846, 0.17677669
      %v857 = vmul.f32 %v849, 0.17677669
      %v858 = vmul.f32 %v852, 0.17677669
      %v859 = vmul.f32 %v855, 0.17677669
      %v860 = vtanh.pop %v856
      %v861 = vtanh.pop %v857
      %v862 = vtanh.pop %v858
      %v863 = vtanh.pop %v859
      %v864 = vmul.f32 %v860, 10.0
      %v865 = vmul.f32 %v861, 10.0
      %v866 = vmul.f32 %v862, 10.0
      %v867 = vmul.f32 %v863, 10.0
      %v868 = vld [vmem:[#allocation3] sm:$0x3]
      %v869 = vmul.f32 %v868, -1e+09
      %v871 = vlaneseq
      %v872 = vshrl.u32 %v871, 7
      %v873 = vsub.s32 0, %v872
      %v874 = vrot.slane %v869, %v873
      %876 = vbcast.lane.b32.xlu0 %v874, 256
      %v877 = vpop.permute.xlu0 %876
      %s879 = sor.u32 256, 8
      %880 = vbcast.lane.b32.xlu0 %v874, %s879
      %v881 = vpop.permute.xlu0 %880
      %v882 = vlaneseq
      %v883 = vshrl.u32 %v882, 7
      %v884 = vsub.s32 1, %v883
      %v885 = vrot.slane %v869, %v884
      %887 = vbcast.lane.b32.xlu0 %v885, 256
      %v888 = vpop.permute.xlu0 %887
      %s890 = sor.u32 256, 8
      %891 = vbcast.lane.b32.xlu0 %v885, %s890
      %v892 = vpop.permute.xlu0 %891
      %v897 = vadd.f32 %v864, %v877
      %v898 = vadd.f32 %v865, %v881
      %v899 = vadd.f32 %v866, %v888
      %v900 = vadd.f32 %v867, %v892
      %905 = vset.pattern.permute.xlu0 0
      %906 = vperm.xlu0 %905, %v897
      %v907 = vpop.permute.xlu0 %906
      %908 = vset.pattern.permute.xlu0 0
      %909 = vperm.xlu0 %908, %v898
      %v910 = vpop.permute.xlu0 %909
      %911 = vset.pattern.permute.xlu0 0
      %912 = vperm.xlu0 %911, %v899
      %v913 = vpop.permute.xlu0 %912
      %914 = vset.pattern.permute.xlu0 0
      %915 = vperm.xlu0 %914, %v900
      %v916 = vpop.permute.xlu0 %915
      %v917 = vlaneseq
      %v918 = vshrl.u32 %v917, 7
      %v919 = vsub.s32 %v404, %v918
      %v920 = vrot.slane %v907, %v919
      %v921 = vadd.s32 %v404, 4294967288
      %v922 = vlaneseq
      %v923 = vshrl.u32 %v922, 7
      %v924 = vsub.s32 %v921, %v923
      %v925 = vrot.slane %v910, %v924
      %vm926 = vcmask 130112
      %v927 = vsel %vm926, %v925, %v920
      %v928 = vlaneseq
      %v929 = vshrl.u32 %v928, 7
      %v930 = vsub.s32 %v404, %v929
      %v931 = vrot.slane %v913, %v930
      %v932 = vlaneseq
      %v933 = vshrl.u32 %v932, 7
      %v934 = vsub.s32 %v921, %v933
      %v935 = vrot.slane %v916, %v934
      %v936 = vsel %vm926, %v935, %v931
      %v937 = vsel %vm474, %v936, %v927
      %vm939 = vcmask 66560
      %v940 = vsel %vm939, %v937, -inf
      %941 = vmax.xlane.f32.xlu0 %v940
      %v942 = vpop.xlane.xlu0 %941
      %v944 = vlaneseq
      %v945 = vshrl.u32 %v944, 7
      %v946 = vsub.s32 0, %v945
      %v947 = vrot.slane %v942, %v946
      %v948 = vlaneseq
      %v949 = vshrl.u32 %v948, 7
      %v950 = vsub.s32 1, %v949
      %v951 = vrot.slane %v942, %v950
      %v954 = vsub.f32 %v897, %v947
      %v955 = vsub.f32 %v898, %v947
      %v956 = vsub.f32 %v899, %v951
      %v957 = vsub.f32 %v900, %v951
      %v958 = vmul.f32 %v954, 1.442695
      %v959 = vpow.pop %v958
      %v960 = vmul.f32 %v955, 1.442695
      %v961 = vpow.pop %v960
      %v962 = vmul.f32 %v956, 1.442695
      %v963 = vpow.pop %v962
      %v964 = vmul.f32 %v957, 1.442695
      %v965 = vpow.pop %v964
      %970 = vset.pattern.permute.xlu0 0
      %971 = vperm.xlu0 %970, %v959
      %v972 = vpop.permute.xlu0 %971
      %973 = vset.pattern.permute.xlu0 0
      %974 = vperm.xlu0 %973, %v961
      %v975 = vpop.permute.xlu0 %974
      %976 = vset.pattern.permute.xlu0 0
      %977 = vperm.xlu0 %976, %v963
      %v978 = vpop.permute.xlu0 %977
      %979 = vset.pattern.permute.xlu0 0
      %980 = vperm.xlu0 %979, %v965
      %v981 = vpop.permute.xlu0 %980
      %v982 = vlaneseq
      %v983 = vshrl.u32 %v982, 7
      %v984 = vsub.s32 %v404, %v983
      %v985 = vrot.slane %v972, %v984
      %v986 = vlaneseq
      %v987 = vshrl.u32 %v986, 7
      %v988 = vsub.s32 %v921, %v987
      %v989 = vrot.slane %v975, %v988
      %v990 = vsel %vm926, %v989, %v985
      %v991 = vlaneseq
      %v992 = vshrl.u32 %v991, 7
      %v993 = vsub.s32 %v404, %v992
      %v994 = vrot.slane %v978, %v993
      %v995 = vlaneseq
      %v996 = vshrl.u32 %v995, 7
      %v997 = vsub.s32 %v921, %v996
      %v998 = vrot.slane %v981, %v997
      %v999 = vsel %vm926, %v998, %v994
      %v1000 = vsel %vm474, %v999, %v990
      %v1002 = vsel %vm939, %v1000, 0.0
      %1003 = vadd.xlane.f32.xlu0 %v1002
      %v1004 = vpop.xlane.xlu0 %1003
      %v1005 = vlog2.pop %v1004
      %v1006 = vmul.f32 %v1005, 0.6931472
      %v1007 = vadd.f32 %v942, %v1006
      %v1008 = vld [vmem:[%s389] sm:$0x3]
      %v1010 = vlaneseq
      %v1011 = vshrl.u32 %v1010, 7
      %v1012 = vsub.s32 0, %v1011
      %v1013 = vrot.slane %v1008, %v1012
      %1015 = vbcast.lane.b32.xlu0 %v1013, 256
      %v1016 = vpop.permute.xlu0 %1015
      %s1018 = sor.u32 256, 8
      %1019 = vbcast.lane.b32.xlu0 %v1013, %s1018
      %v1020 = vpop.permute.xlu0 %1019
      %v1021 = vlaneseq
      %v1022 = vshrl.u32 %v1021, 7
      %v1023 = vsub.s32 1, %v1022
      %v1024 = vrot.slane %v1008, %v1023
      %1026 = vbcast.lane.b32.xlu0 %v1024, 256
      %v1027 = vpop.permute.xlu0 %1026
      %s1029 = sor.u32 256, 8
      %1030 = vbcast.lane.b32.xlu0 %v1024, %s1029
      %v1031 = vpop.permute.xlu0 %1030
      %v1036 = vadd.f32 %v897, %v1016
      %v1037 = vadd.f32 %v898, %v1020
      %v1038 = vadd.f32 %v899, %v1027
      %v1039 = vadd.f32 %v900, %v1031
      %1044 = vset.pattern.permute.xlu0 0
      %1045 = vperm.xlu0 %1044, %v1036
      %v1046 = vpop.permute.xlu0 %1045
      %1047 = vset.pattern.permute.xlu0 0
      %1048 = vperm.xlu0 %1047, %v1037
      %v1049 = vpop.permute.xlu0 %1048
      %1050 = vset.pattern.permute.xlu0 0
      %1051 = vperm.xlu0 %1050, %v1038
      %v1052 = vpop.permute.xlu0 %1051
      %1053 = vset.pattern.permute.xlu0 0
      %1054 = vperm.xlu0 %1053, %v1039
      %v1055 = vpop.permute.xlu0 %1054
      %v1056 = vlaneseq
      %v1057 = vshrl.u32 %v1056, 7
      %v1058 = vsub.s32 %v404, %v1057
      %v1059 = vrot.slane %v1046, %v1058
      %v1060 = vlaneseq
      %v1061 = vshrl.u32 %v1060, 7
      %v1062 = vsub.s32 %v921, %v1061
      %v1063 = vrot.slane %v1049, %v1062
      %v1064 = vsel %vm926, %v1063, %v1059
      %v1065 = vlaneseq
      %v1066 = vshrl.u32 %v1065, 7
      %v1067 = vsub.s32 %v404, %v1066
      %v1068 = vrot.slane %v1052, %v1067
      %v1069 = vlaneseq
      %v1070 = vshrl.u32 %v1069, 7
      %v1071 = vsub.s32 %v921, %v1070
      %v1072 = vrot.slane %v1055, %v1071
      %v1073 = vsel %vm926, %v1072, %v1068
      %v1074 = vsel %vm474, %v1073, %v1064
      %v1076 = vsel %vm939, %v1074, -inf
      %1077 = vmax.xlane.f32.xlu0 %v1076
      %v1078 = vpop.xlane.xlu0 %1077
      %v1080 = vlaneseq
      %v1081 = vshrl.u32 %v1080, 7
      %v1082 = vsub.s32 0, %v1081
      %v1083 = vrot.slane %v1078, %v1082
      %v1084 = vlaneseq
      %v1085 = vshrl.u32 %v1084, 7
      %v1086 = vsub.s32 1, %v1085
      %v1087 = vrot.slane %v1078, %v1086
      %vm1090 = vcmp.ge.f32.partialorder %v1036, %v1083
      %vm1091 = vcmp.ge.f32.partialorder %v1037, %v1083
      %vm1092 = vcmp.ge.f32.partialorder %v1038, %v1087
      %vm1093 = vcmp.ge.f32.partialorder %v1039, %v1087
      %1095 = vbcast.lane.b32.xlu0 %v404, 256
      %v1096 = vpop.permute.xlu0 %1095
      %s1098 = sor.u32 256, 8
      %1099 = vbcast.lane.b32.xlu0 %v404, %s1098
      %v1100 = vpop.permute.xlu0 %1099
      %v1101 = vsel %vm1090, %v1096, 9
      %v1102 = vsel %vm1091, %v1100, 9
      %v1103 = vsel %vm1092, %v1096, 9
      %v1104 = vsel %vm1093, %v1100, 9
      %1105 = vset.pattern.permute.xlu0 0
      %1106 = vperm.xlu0 %1105, %v1101
      %v1107 = vpop.permute.xlu0 %1106
      %1108 = vset.pattern.permute.xlu0 0
      %1109 = vperm.xlu0 %1108, %v1102
      %v1110 = vpop.permute.xlu0 %1109
      %1111 = vset.pattern.permute.xlu0 0
      %1112 = vperm.xlu0 %1111, %v1103
      %v1113 = vpop.permute.xlu0 %1112
      %1114 = vset.pattern.permute.xlu0 0
      %1115 = vperm.xlu0 %1114, %v1104
      %v1116 = vpop.permute.xlu0 %1115
      %v1117 = vlaneseq
      %v1118 = vshrl.u32 %v1117, 7
      %v1119 = vsub.s32 %v404, %v1118
      %v1120 = vrot.slane %v1107, %v1119
      %v1121 = vlaneseq
      %v1122 = vshrl.u32 %v1121, 7
      %v1123 = vsub.s32 %v921, %v1122
      %v1124 = vrot.slane %v1110, %v1123
      %v1125 = vsel %vm926, %v1124, %v1120
      %v1126 = vlaneseq
      %v1127 = vshrl.u32 %v1126, 7
      %v1128 = vsub.s32 %v404, %v1127
      %v1129 = vrot.slane %v1113, %v1128
      %v1130 = vlaneseq
      %v1131 = vshrl.u32 %v1130, 7
      %v1132 = vsub.s32 %v921, %v1131
      %v1133 = vrot.slane %v1116, %v1132
      %v1134 = vsel %vm926, %v1133, %v1129
      %v1135 = vsel %vm474, %v1134, %v1125
      %v1136 = vsel %vm939, %v1135, 2147483647
      %v1137 = vand.u32 %v1136, 65535
      %v1138 = vshra.s32 %v1136, 16
      %v1139 = vcvt.s32.f32 %v1137
      %v1140 = vcvt.s32.f32 %v1138
      %1141 = vmin.xlane.f32.xlu0 %v1140
      %v1142 = vpop.xlane.xlu0 %1141
      %vm1143 = vcmp.eq.f32.partialorder %v1140, %v1142
      %v1144 = vsel %vm1143, %v1139, inf
      %1145 = vmin.xlane.f32.xlu0 %v1144
      %v1146 = vpop.xlane.xlu0 %1145
      %v1147 = vcvt.f32.s32 %v1146
      %v1148 = vcvt.f32.s32 %v1142
      %v1149 = vshll.u32 %v1148, 16
      %v1150 = vadd.s32 %v1149, %v1147
      %vm1151 = vcmp.eq.s32.totalorder %v404, %v1150
      %v1152 = vsel %vm1151, 1, 0
      %v1153 = vcvt.s32.f32 %v1152
      %v1154 = vmul.f32 %v1153, %v937
      %v1155 = vsel %vm939, %v1154, 0.0
      %1156 = vadd.xlane.f32.xlu0 %v1155
      %v1157 = vpop.xlane.xlu0 %1156
      %v1158 = vld [vmem:[%s401] sm:$0x3]
      %v1159 = vsub.f32 %v1157, %v1007
      %v1160 = vadd.f32 %v1158, %v1159
      %vm1161 = vcmask 1024
      %1162 = vst.msk [vmem:[%s401] sm:$0x3] %vm1161, %v1160
      %v1163 = vld [vmem:[#allocation3] sm:$0x3]
      %v1164 = vmax.f32 %v1163, %v1153
      %1165 = vst.msk [vmem:[#allocation3] sm:$0x3] %vm939, %v1164
      %1166 = vst.msk [vmem:[#allocation4] sm:$0x3] %vm939, %v1153
      %1167 = vst.msk [vmem:[%s397] sm:$0x3] %vm1161, %v1150
      %p1168 = scmp.lt.s32.totalorder %s26, 1
      %s1169 = scalar_select %p1168, %s26, 1
      %p1170 = scmp.lt.s32.totalorder %s27, 7
      %s1171 = scalar_select %p1170, %s27, 7
      %s1172 = smul.addr %s1169, 8
      %s1173 = sadd.s32 %s1171, %s1172
      %s1174 = smul.addr %s1173, 2
      %s1175 = scalar_lea.vmem %s9, %s1174
      %p1176 = scmp.lt.s32.totalorder %s26, 1
      %s1177 = scalar_select %p1176, %s26, 1
      %s1178 = smul.addr %s1177, 2
      %s1179 = scalar_lea.vmem %s10, %s1178
      // Predicated region
      $region61: #{_forward_impl.7} parent=55 // pred_check
        %p1180 = pneg %p250
      $region62: #{_forward_impl.7} parent=55 // pred_check_branch
        %1182 = sbr.rel (%p1180) target = $region64
      $region63: #{_forward_impl.7} parent=55 // pred_region
        _
      $region64: #{_forward_impl.7} parent=55 // pred_fallthru
        _
      // Predicated region
      $region65: #{_forward_impl.7} parent=55 // pred_check
        %p1183 = pneg %p276
      $region66: #{_forward_impl.7} parent=55 // pred_check_branch
        %1185 = sbr.rel (%p1183) target = $region68
      $region67: #{_forward_impl.7} parent=55 // pred_region
        _
      $region68: #{_forward_impl.7} parent=55 // pred_fallthru
        _
    $region56: #{_forward_impl.7} parent=5 // pred_fallthru
      _
    %p1186 = scmp.le.s32.totalorder 2, %s17
    // Predicated region
    $region69: #{_forward_impl.7} parent=5 // pred_check
      %p1187 = pneg %p1186
    $region70: #{_forward_impl.7} parent=5 // pred_check_branch
      %1189 = sbr.rel (%p1187) target = $region72
    $region71: #{_forward_impl.7} parent=5 // pred_region
      %s1190 = ssub.s32 %s17, 2
      // Predicated region
      $region73: #{_forward_impl.7} parent=71 // pred_check
        %p1191 = pneg %p256
      $region74: #{_forward_impl.7} parent=71 // pred_check_branch
        %1193 = sbr.rel (%p1191) target = $region76
      $region75: #{_forward_impl.7} parent=71 // pred_region
        %p1194 = scmp.lt.s32.totalorder %s28, 1
        %s1195 = scalar_select %p1194, %s28, 1
        %p1196 = scmp.lt.s32.totalorder %s29, 7
        %s1197 = scalar_select %p1196, %s29, 7
        %s1198 = smul.addr %s1195, 8
        %s1199 = sadd.s32 %s1197, %s1198
        %s1200 = smul.addr %s1199, 2
        %s1201 = scalar_lea.vmem %s9, %s1200
      $region76: #{_forward_impl.7} parent=71 // pred_fallthru
        _
      // Predicated region
      $region77: #{_forward_impl.7} parent=71 // pred_check
        %p1202 = pneg %p282
      $region78: #{_forward_impl.7} parent=71 // pred_check_branch
        %1204 = sbr.rel (%p1202) target = $region80
      $region79: #{_forward_impl.7} parent=71 // pred_region
        %p1205 = scmp.lt.s32.totalorder %s28, 1
        %s1206 = scalar_select %p1205, %s28, 1
        %s1207 = smul.addr %s1206, 2
        %s1208 = scalar_lea.vmem %s10, %s1207
      $region80: #{_forward_impl.7} parent=71 // pred_fallthru
        _
    $region72: #{_forward_impl.7} parent=5 // pred_fallthru
      _
  $region6: #{_forward_impl.7} parent=0 // loop_footer
    %s21 = sadd.s32 1, %s17
  $region7: #{_forward_impl.7} parent=0 // loop_footer_branch
    %16 = sbr.rel target = $region3
  $region8: #{_forward_impl.7} parent=0 // loop_exit
    _

</llo_original>
